<compile_context>
chip_gen: v5e
topology: v5e:2x2
jax: 0.10.0
libtpu: 0.0.40
codegen_flags: <defaults>
</compile_context>

<pallas_src>
import math

import jax
import jax.numpy as jnp
from jax.experimental import pallas as pl
from jax.experimental.pallas import tpu as pltpu


# --------------------- shared-range-reduction cos/sin --------------------------
# Taylor coefficients of cos(2*pi*r) / sin(2*pi*r) in r (2*pi folded in), computed
# in float64 at trace time. 10 terms each -> truncation error < 5e-9 on [-0.5, 0.5].
_N_TERMS = 10
_COS_C = tuple((-1.0) ** k * (2.0 * math.pi) ** (2 * k) / math.factorial(2 * k)
               for k in range(_N_TERMS))
_SIN_C = tuple((-1.0) ** k * (2.0 * math.pi) ** (2 * k + 1) / math.factorial(2 * k + 1)
               for k in range(_N_TERMS))


def _cos_sin_2pi(r):
    """cos(2*pi*r), sin(2*pi*r) for r in ~[-0.5, 0.5] via paired even/odd polys."""
    u = r * r
    c = _COS_C[-1] * u + _COS_C[-2]
    s = _SIN_C[-1] * u + _SIN_C[-2]
    for k in range(_N_TERMS - 3, -1, -1):
        c = c * u + _COS_C[k]
        s = s * u + _SIN_C[k]
    return c, s * r


# ------------------------------ Pallas kernel ----------------------------------

def _make_mlp_kernel(row_off, dim_in, encoded_size, dim_hidden, dim_out):
    E, H = encoded_size, dim_hidden

    def kernel(x_ref, p_ref, o_ref, enc_ref):
        # x_ref:   [dim_in, TN]  feature-major batch tile (batch on the 128 lanes)
        # p_ref:   [R, 128]      packed constants (B, W0, b0, W1, b1, Wl, bl)
        # o_ref:   [dim_out, TN] lane-dense output tile
        # enc_ref: [2E, TN]      VMEM scratch holding [cos; sin] for one MXU push
        x = x_ref[...]                                               # [dim_in, TN]
        bmat = p_ref[row_off["b"]:row_off["b"] + E, 0:dim_in]        # [E, dim_in]

        # Encoding "matmul" has K = dim_in (tiny): broadcast FMAs on the VPU.
        z = bmat[:, 0:1] * x[0:1, :]
        for d in range(1, dim_in):                                   # static unroll
            z = z + bmat[:, d:d + 1] * x[d:d + 1, :]                 # [E, TN]

        # Single shared range reduction for cos AND sin: r = z mod 1 in [-0.5, 0.5]
        # (exact in f32 for the |z| ~ O(1e2) this encoding produces), then polys.
        r = z - jnp.floor(z + 0.5)
        cos_v, sin_v = _cos_sin_2pi(r)

        # Layer 0: one [H, 2E] x [2E, TN] matmul on the merged cos/sin block.
        enc_ref[0:E, :] = cos_v
        enc_ref[E:2 * E, :] = sin_v
        w0 = p_ref[row_off["w0"]:row_off["w0"] + H, 0:2 * E]
        b0 = p_ref[row_off["b0"]:row_off["b0"] + H, 0:1]
        h = jnp.dot(w0, enc_ref[...], preferred_element_type=jnp.float32) + b0
        h = jnp.maximum(h, 0.0)

        # Layer 1: Linear(H -> H) + ReLU.
        w1 = p_ref[row_off["w1"]:row_off["w1"] + H, 0:H]
        b1 = p_ref[row_off["b1"]:row_off["b1"] + H, 0:1]
        h = jnp.dot(w1, h, preferred_element_type=jnp.float32) + b1
        h = jnp.maximum(h, 0.0)

        # Last layer: Linear(H -> dim_out), no activation; output stays lane-dense.
        wl = p_ref[row_off["wl"]:row_off["wl"] + dim_out, 0:H]
        bl = p_ref[row_off["bl"]:row_off["bl"] + dim_out, 0:1]
        out = jnp.dot(wl, h, preferred_element_type=jnp.float32) + bl
        o_ref[...] = out.astype(o_ref.dtype)

    return kernel


# ----------------------------- Parameter packing --------------------------------

_LANES = 128


def pack_params(b_mat, w0, b0, w1, b1, wl, bl):
    """Pack all constant operands into one [R, 128] f32 slab (single prologue DMA).

    Row bands are 8-sublane aligned so in-kernel static slices are cheap.
    Returns (slab, row_offsets).
    """
    parts = [
        ("b", b_mat),
        ("w0", w0),
        ("b0", b0.reshape(-1, 1)),
        ("w1", w1),
        ("b1", b1.reshape(-1, 1)),
        ("wl", wl),
        ("bl", bl.reshape(-1, 1)),
    ]
    row_off = {}
    rows = 0
    for name, p in parts:
        assert p.shape[1] <= _LANES, f"{name} too wide for the 128-lane slab"
        rows = -(-rows // 8) * 8          # align band start to 8 sublanes
        row_off[name] = rows
        rows += p.shape[0]
    total_rows = -(-rows // 8) * 8
    slab = jnp.zeros((total_rows, _LANES), jnp.float32)
    for name, p in parts:
        o = row_off[name]
        slab = slab.at[o:o + p.shape[0], 0:p.shape[1]].set(p.astype(jnp.float32))
    return slab, row_off


# --------------------------------- Wrapper ---------------------------------------

def make_mlp_forward(row_off, dim_in, encoded_size, dim_hidden, dim_out, tile_n=None):
    kernel = _make_mlp_kernel(row_off, dim_in, encoded_size, dim_hidden, dim_out)

    @jax.jit
    def forward(x, params_slab):
        """x: [N, dim_in] (PyTorch layout). Returns [N, dim_out] float32."""
        N = x.shape[0]

        # Tile sizing: cover the batch in a small number of lane-dense steps.
        # Keep >= 2 "parallel" steps when possible (v7x has 2 TensorCores/chip);
        # cap at 8192 for scheduler/vreg reasons (VMEM is not the limiter here).
        if tile_n is None:
            half = -(-N // 2)                                   # ceil(N / 2)
            tn = max(256, min(8192, -(-half // 128) * 128))
        else:
            tn = tile_n
        n_steps = pl.cdiv(N, tn)
        n_pad = n_steps * tn

        # Fused pad + transpose into a preallocated feature-major buffer.
        # TODO(synk): for very large N, accept/return feature-major arrays to avoid
        # these wrapper-side HBM passes entirely (matters most on v5e bandwidth).
        xt = jnp.zeros((dim_in, n_pad), jnp.float32).at[:, :N].set(
            x.T.astype(jnp.float32))

        enc2 = 2 * encoded_size
        flops = (2 * n_pad * (encoded_size * dim_in
                              + enc2 * dim_hidden
                              + dim_hidden * dim_hidden
                              + dim_hidden * dim_out)
                 + n_pad * encoded_size * (4 * _N_TERMS + 6))   # trig polys (VPU)
        bytes_accessed = 4 * (dim_in * n_pad + dim_out * n_pad
                              + params_slab.shape[0] * params_slab.shape[1])

        out_fm = pl.pallas_call(
            kernel,
            out_shape=jax.ShapeDtypeStruct((dim_out, n_pad), jnp.float32),
            grid_spec=pltpu.PrefetchScalarGridSpec(
                num_scalar_prefetch=0,
                grid=(n_steps,),
                in_specs=[
                    # batch tile, lane-dense (batch on the 128-lane axis)
                    pl.BlockSpec((dim_in, tn), lambda i: (0, i)),
                    # single packed-constants slab, grid-invariant (one DMA)
                    pl.BlockSpec(params_slab.shape, lambda i: (0, 0)),
                ],
                out_specs=pl.BlockSpec((dim_out, tn), lambda i: (0, i)),
                scratch_shapes=[pltpu.VMEM((enc2, tn), jnp.float32)],
            ),
            compiler_params=pltpu.CompilerParams(
                dimension_semantics=("parallel",)),
            cost_estimate=pl.CostEstimate(flops=flops, transcendentals=0,
                                          bytes_accessed=bytes_accessed),
        )(xt, params_slab)

        # Back to the module's [N, dim_out] layout (drop batch padding).
        return out_fm[:, :N].T

    return forward


# --------------------------- Pure-JAX reference -----------------------------------

def mlp_reference(x, b_mat, w0, b0, w1, b1, wl, bl):
    # Mirrors the PyTorch module: GaussianEncoding -> (Linear+ReLU) x2 -> Linear.
    vp = 2.0 * math.pi * (x @ b_mat.T)
    enc = jnp.concatenate([jnp.cos(vp), jnp.sin(vp)], axis=-1)
    h = jnp.maximum(enc @ w0.T + b0, 0.0)
    h = jnp.maximum(h @ w1.T + b1, 0.0)
    return h @ wl.T + bl


# ------------------------------------ Main -----------------------------------------

if __name__ == "__main__":
    # Synthetic config (mlp_configs):
    #   encoding.type = 'gaussian', sigma = 10.0, encoded_size = 16
    #   num_layers = 3, dim_hidden = 32, use_bias = True
    dim_in = 2
    dim_out = 3
    encoded_size = 16
    sigma = 10.0
    dim_hidden = 32

    N = 4096        # batch of input points -> 2 parallel grid steps at tile_n=2048

    key = jax.random.PRNGKey(0)
    k_x, k_b, k_w0, k_b0, k_w1, k_b1, k_wl, k_bl = jax.random.split(key, 8)

    # Input points in [0, 1)^dim_in
    x = jax.random.uniform(k_x, (N, dim_in), dtype=jnp.float32)

    # Gaussian encoding matrix B ~ N(0, sigma^2), shape [encoded_size, dim_in].
    b_mat = sigma * jax.random.normal(k_b, (encoded_size, dim_in), dtype=jnp.float32)

    def linear_init(kw, kb, fan_in, fan_out):
        # PyTorch nn.Linear default init: U(-1/sqrt(fan_in), 1/sqrt(fan_in)).
        # Stored as [out, in] (PyTorch layout) so the kernel computes W @ X.
        bound = 1.0 / math.sqrt(fan_in)
        w = jax.random.uniform(kw, (fan_out, fan_in), jnp.float32, -bound, bound)
        b = jax.random.uniform(kb, (fan_out,), jnp.float32, -bound, bound)
        return w, b

    enc_size = 2 * encoded_size
    w0, b0 = linear_init(k_w0, k_b0, enc_size, dim_hidden)    # [H, 2E], [H]
    w1, b1 = linear_init(k_w1, k_b1, dim_hidden, dim_hidden)  # [H, H],  [H]
    wl, bl = linear_init(k_wl, k_bl, dim_hidden, dim_out)     # [O, H],  [O]

    # Pack all constants once at init time (one prologue DMA inside the kernel).
    params_slab, row_off = pack_params(b_mat, w0, b0, w1, b1, wl, bl)
    mlp_forward = make_mlp_forward(row_off, dim_in, encoded_size, dim_hidden, dim_out)

    out = jax.block_until_ready(mlp_forward(x, params_slab))

    ref = mlp_reference(x, b_mat, w0, b0, w1, b1, wl, bl)
    assert out.shape == (N, dim_out)
    assert jnp.allclose(out, ref, atol=1e-4, rtol=1e-4), "mismatch vs reference"

    print("KERNEL_OK")
</pallas_src>

<mosaic_0001>
module attributes {stable_mosaic.version = 11 : i64} {
  func.func @kernel(%arg0: i32, %arg1: memref<2x2048xf32, #tpu.memory_space<vmem>>, %arg2: memref<160x128xf32, #tpu.memory_space<vmem>>, %arg3: memref<3x2048xf32, #tpu.memory_space<vmem>>, %arg4: memref<32x2048xf32, #tpu.memory_space<vmem>>) attributes {dimension_semantics = [#tpu.dimension_semantics<parallel>], iteration_bounds = array<i64: 2>, scalar_prefetch = 0 : i64, scratch_operands = 1 : i64, tpu.core_type = #tpu.core_type<tc>, window_params = [{transform_indices = @transform_0, window_bounds = array<i64: 2, 2048>}, {pipeline_mode = #tpu.pipeline_mode<synchronous>, transform_indices = @transform_1, window_bounds = array<i64: 160, 128>}, {transform_indices = @transform_2, window_bounds = array<i64: 3, 2048>}]} {
    %c0 = arith.constant 0 : index
    %c0_0 = arith.constant 0 : index
    %0 = vector.load %arg1[%c0, %c0_0] : memref<2x2048xf32, #tpu.memory_space<vmem>>, vector<2x2048xf32>
    %c0_1 = arith.constant 0 : index
    %c0_2 = arith.constant 0 : index
    %1 = vector.load %arg2[%c0_1, %c0_2] : memref<160x128xf32, #tpu.memory_space<vmem>>, vector<16x2xf32>
    %2 = vector.extract_strided_slice %1 {offsets = [0, 0], sizes = [16, 1], strides = [1, 1]} : vector<16x2xf32> to vector<16x1xf32>
    %3 = vector.extract_strided_slice %0 {offsets = [0, 0], sizes = [1, 2048], strides = [1, 1]} : vector<2x2048xf32> to vector<1x2048xf32>
    %4 = vector.broadcast %2 : vector<16x1xf32> to vector<16x2048xf32>
    %5 = vector.broadcast %3 : vector<1x2048xf32> to vector<16x2048xf32>
    %6 = arith.mulf %4, %5 : vector<16x2048xf32>
    %7 = vector.extract_strided_slice %1 {offsets = [0, 1], sizes = [16, 1], strides = [1, 1]} : vector<16x2xf32> to vector<16x1xf32>
    %8 = vector.extract_strided_slice %0 {offsets = [1, 0], sizes = [1, 2048], strides = [1, 1]} : vector<2x2048xf32> to vector<1x2048xf32>
    %9 = vector.broadcast %7 : vector<16x1xf32> to vector<16x2048xf32>
    %10 = vector.broadcast %8 : vector<1x2048xf32> to vector<16x2048xf32>
    %11 = arith.mulf %9, %10 : vector<16x2048xf32>
    %12 = arith.addf %6, %11 : vector<16x2048xf32>
    %cst = arith.constant 5.000000e-01 : f32
    %13 = vector.broadcast %cst : f32 to vector<16x2048xf32>
    %14 = arith.addf %12, %13 : vector<16x2048xf32>
    %15 = math.floor %14 : vector<16x2048xf32>
    %16 = arith.subf %12, %15 : vector<16x2048xf32>
    %17 = arith.mulf %16, %16 : vector<16x2048xf32>
    %cst_3 = arith.constant -0.0363828428 : f32
    %18 = vector.broadcast %cst_3 : f32 to vector<16x2048xf32>
    %19 = arith.mulf %18, %17 : vector<16x2048xf32>
    %cst_4 = arith.constant 0.282005966 : f32
    %20 = vector.broadcast %cst_4 : f32 to vector<16x2048xf32>
    %21 = arith.addf %19, %20 : vector<16x2048xf32>
    %cst_5 = arith.constant -0.0120315859 : f32
    %22 = vector.broadcast %cst_5 : f32 to vector<16x2048xf32>
    %23 = arith.mulf %22, %17 : vector<16x2048xf32>
    %cst_6 = arith.constant 0.10422916 : f32
    %24 = vector.broadcast %cst_6 : f32 to vector<16x2048xf32>
    %25 = arith.addf %23, %24 : vector<16x2048xf32>
    %26 = arith.mulf %21, %17 : vector<16x2048xf32>
    %cst_7 = arith.constant -1.71439075 : f32
    %27 = vector.broadcast %cst_7 : f32 to vector<16x2048xf32>
    %28 = arith.addf %26, %27 : vector<16x2048xf32>
    %29 = arith.mulf %25, %17 : vector<16x2048xf32>
    %cst_8 = arith.constant -0.718122303 : f32
    %30 = vector.broadcast %cst_8 : f32 to vector<16x2048xf32>
    %31 = arith.addf %29, %30 : vector<16x2048xf32>
    %32 = arith.mulf %28, %17 : vector<16x2048xf32>
    %cst_9 = arith.constant 7.90353632 : f32
    %33 = vector.broadcast %cst_9 : f32 to vector<16x2048xf32>
    %34 = arith.addf %32, %33 : vector<16x2048xf32>
    %35 = arith.mulf %31, %17 : vector<16x2048xf32>
    %cst_10 = arith.constant 3.81995249 : f32
    %36 = vector.broadcast %cst_10 : f32 to vector<16x2048xf32>
    %37 = arith.addf %35, %36 : vector<16x2048xf32>
    %38 = arith.mulf %34, %17 : vector<16x2048xf32>
    %cst_11 = arith.constant -26.4262562 : f32
    %39 = vector.broadcast %cst_11 : f32 to vector<16x2048xf32>
    %40 = arith.addf %38, %39 : vector<16x2048xf32>
    %41 = arith.mulf %37, %17 : vector<16x2048xf32>
    %cst_12 = arith.constant -15.0946426 : f32
    %42 = vector.broadcast %cst_12 : f32 to vector<16x2048xf32>
    %43 = arith.addf %41, %42 : vector<16x2048xf32>
    %44 = arith.mulf %40, %17 : vector<16x2048xf32>
    %cst_13 = arith.constant 60.2446404 : f32
    %45 = vector.broadcast %cst_13 : f32 to vector<16x2048xf32>
    %46 = arith.addf %44, %45 : vector<16x2048xf32>
    %47 = arith.mulf %43, %17 : vector<16x2048xf32>
    %cst_14 = arith.constant 42.0586929 : f32
    %48 = vector.broadcast %cst_14 : f32 to vector<16x2048xf32>
    %49 = arith.addf %47, %48 : vector<16x2048xf32>
    %50 = arith.mulf %46, %17 : vector<16x2048xf32>
    %cst_15 = arith.constant -85.4568176 : f32
    %51 = vector.broadcast %cst_15 : f32 to vector<16x2048xf32>
    %52 = arith.addf %50, %51 : vector<16x2048xf32>
    %53 = arith.mulf %49, %17 : vector<16x2048xf32>
    %cst_16 = arith.constant -76.7058563 : f32
    %54 = vector.broadcast %cst_16 : f32 to vector<16x2048xf32>
    %55 = arith.addf %53, %54 : vector<16x2048xf32>
    %56 = arith.mulf %52, %17 : vector<16x2048xf32>
    %cst_17 = arith.constant 64.9393921 : f32
    %57 = vector.broadcast %cst_17 : f32 to vector<16x2048xf32>
    %58 = arith.addf %56, %57 : vector<16x2048xf32>
    %59 = arith.mulf %55, %17 : vector<16x2048xf32>
    %cst_18 = arith.constant 81.6052475 : f32
    %60 = vector.broadcast %cst_18 : f32 to vector<16x2048xf32>
    %61 = arith.addf %59, %60 : vector<16x2048xf32>
    %62 = arith.mulf %58, %17 : vector<16x2048xf32>
    %cst_19 = arith.constant -19.7392082 : f32
    %63 = vector.broadcast %cst_19 : f32 to vector<16x2048xf32>
    %64 = arith.addf %62, %63 : vector<16x2048xf32>
    %65 = arith.mulf %61, %17 : vector<16x2048xf32>
    %cst_20 = arith.constant -4.134170e+01 : f32
    %66 = vector.broadcast %cst_20 : f32 to vector<16x2048xf32>
    %67 = arith.addf %65, %66 : vector<16x2048xf32>
    %68 = arith.mulf %64, %17 : vector<16x2048xf32>
    %cst_21 = arith.constant 1.000000e+00 : f32
    %69 = vector.broadcast %cst_21 : f32 to vector<16x2048xf32>
    %70 = arith.addf %68, %69 : vector<16x2048xf32>
    %71 = arith.mulf %67, %17 : vector<16x2048xf32>
    %cst_22 = arith.constant 6.28318548 : f32
    %72 = vector.broadcast %cst_22 : f32 to vector<16x2048xf32>
    %73 = arith.addf %71, %72 : vector<16x2048xf32>
    %74 = arith.mulf %73, %16 : vector<16x2048xf32>
    %c0_23 = arith.constant 0 : index
    %c0_24 = arith.constant 0 : index
    %75 = vector.load %arg4[%c0_23, %c0_24] : memref<32x2048xf32, #tpu.memory_space<vmem>>, vector<16x2048xf32>
    tpu.vector_store %arg4[%c0_23, %c0_24], %70 {strides = array<i32>} : memref<32x2048xf32, #tpu.memory_space<vmem>>, vector<16x2048xf32>,
    %c16 = arith.constant 16 : index
    %c0_25 = arith.constant 0 : index
    %76 = vector.load %arg4[%c16, %c0_25] : memref<32x2048xf32, #tpu.memory_space<vmem>>, vector<16x2048xf32>
    tpu.vector_store %arg4[%c16, %c0_25], %74 {strides = array<i32>} : memref<32x2048xf32, #tpu.memory_space<vmem>>, vector<16x2048xf32>,
    %c16_26 = arith.constant 16 : index
    %c0_27 = arith.constant 0 : index
    %77 = vector.load %arg2[%c16_26, %c0_27] : memref<160x128xf32, #tpu.memory_space<vmem>>, vector<32x32xf32>
    %c48 = arith.constant 48 : index
    %c0_28 = arith.constant 0 : index
    %78 = vector.load %arg2[%c48, %c0_28] : memref<160x128xf32, #tpu.memory_space<vmem>>, vector<32x1xf32>
    %c0_29 = arith.constant 0 : index
    %c0_30 = arith.constant 0 : index
    %79 = vector.load %arg4[%c0_29, %c0_30] : memref<32x2048xf32, #tpu.memory_space<vmem>>, vector<32x2048xf32>
    %cst_31 = arith.constant dense<0.000000e+00> : vector<32x2048xf32>
    %80 = tpu.matmul %77, %79, %cst_31 {dimension_numbers = #tpu.dot_dimension_numbers<[1], [0], [0], [1], [0, 0, 1, 1], [], []>} : vector<32x32xf32>, vector<32x2048xf32>, vector<32x2048xf32> -> vector<32x2048xf32>
    %81 = vector.broadcast %78 : vector<32x1xf32> to vector<32x2048xf32>
    %82 = arith.addf %80, %81 : vector<32x2048xf32>
    %cst_32 = arith.constant 0.000000e+00 : f32
    %83 = vector.broadcast %cst_32 : f32 to vector<32x2048xf32>
    %84 = arith.maximumf %82, %83 : vector<32x2048xf32>
    %c80 = arith.constant 80 : index
    %c0_33 = arith.constant 0 : index
    %85 = vector.load %arg2[%c80, %c0_33] : memref<160x128xf32, #tpu.memory_space<vmem>>, vector<32x32xf32>
    %c112 = arith.constant 112 : index
    %c0_34 = arith.constant 0 : index
    %86 = vector.load %arg2[%c112, %c0_34] : memref<160x128xf32, #tpu.memory_space<vmem>>, vector<32x1xf32>
    %cst_35 = arith.constant dense<0.000000e+00> : vector<32x2048xf32>
    %87 = tpu.matmul %85, %84, %cst_35 {dimension_numbers = #tpu.dot_dimension_numbers<[1], [0], [0], [1], [0, 0, 1, 1], [], []>} : vector<32x32xf32>, vector<32x2048xf32>, vector<32x2048xf32> -> vector<32x2048xf32>
    %88 = vector.broadcast %86 : vector<32x1xf32> to vector<32x2048xf32>
    %89 = arith.addf %87, %88 : vector<32x2048xf32>
    %cst_36 = arith.constant 0.000000e+00 : f32
    %90 = vector.broadcast %cst_36 : f32 to vector<32x2048xf32>
    %91 = arith.maximumf %89, %90 : vector<32x2048xf32>
    %c144 = arith.constant 144 : index
    %c0_37 = arith.constant 0 : index
    %92 = vector.load %arg2[%c144, %c0_37] : memref<160x128xf32, #tpu.memory_space<vmem>>, vector<3x32xf32>
    %c152 = arith.constant 152 : index
    %c0_38 = arith.constant 0 : index
    %93 = vector.load %arg2[%c152, %c0_38] : memref<160x128xf32, #tpu.memory_space<vmem>>, vector<3x1xf32>
    %cst_39 = arith.constant dense<0.000000e+00> : vector<3x2048xf32>
    %94 = tpu.matmul %92, %91, %cst_39 {dimension_numbers = #tpu.dot_dimension_numbers<[1], [0], [0], [1], [0, 0, 1, 1], [], []>} : vector<3x32xf32>, vector<32x2048xf32>, vector<3x2048xf32> -> vector<3x2048xf32>
    %95 = vector.broadcast %93 : vector<3x1xf32> to vector<3x2048xf32>
    %96 = arith.addf %94, %95 : vector<3x2048xf32>
    %c0_40 = arith.constant 0 : index
    %c0_41 = arith.constant 0 : index
    %97 = vector.load %arg3[%c0_40, %c0_41] : memref<3x2048xf32, #tpu.memory_space<vmem>>, vector<3x2048xf32>
    tpu.vector_store %arg3[%c0_40, %c0_41], %96 {strides = array<i32>} : memref<3x2048xf32, #tpu.memory_space<vmem>>, vector<3x2048xf32>,
    return
  }
  func.func @transform_0(%arg0: i32) -> (i32, i32) {
    %c0_i32 = arith.constant 0 : i32
    %c0_i32_0 = arith.constant 0 : i32
    return %c0_i32, %arg0 : i32, i32
  }
  func.func @transform_1(%arg0: i32) -> (i32, i32) {
    %c0_i32 = arith.constant 0 : i32
    %c0_i32_0 = arith.constant 0 : i32
    %c0_i32_1 = arith.constant 0 : i32
    return %c0_i32, %c0_i32_0 : i32, i32
  }
  func.func @transform_2(%arg0: i32) -> (i32, i32) {
    %c0_i32 = arith.constant 0 : i32
    %c0_i32_0 = arith.constant 0 : i32
    return %c0_i32, %arg0 : i32, i32
  }
}

</mosaic_0001>

<llo_original>
// kernel: forward.1
$region0: #{forward.1}
  #allocation0 [shape = 'u32[]', space=smem, size = 0x4, offset = 0x4, fixed_abs, tag = 'smem constant byte address 0x4 - core index']
  #allocation1 [shape = 'u32[72,128]{1,0:T(1,128)}', space=vmem, size = 0x9000, scoped, tag = 'internal scratch']
  #allocation2 [shape = 'f32[32,2048]{1,0:T(8,128)}', space=vmem, size = 0x40000, scoped, tag = 'scratch operand']
  %s0 = inlined_call_operand.hbm [shape: f32[2,4096], index: 0, kind: input, shape index: {}]
  %s1 = inlined_call_operand.hbm [shape: f32[160,128], index: 1, kind: input, shape index: {}]
  %s2 = inlined_call_operand.hbm [shape: f32[3,4096], index: 2, kind: output, shape index: {}]
  %s3 = sld [smem:[#allocation0]]
  $region49: #{forward.1} parent=0
    _
  %s5 = ssub.s32 1, %s3
  %s6 = scalar_select 0, %s5, %s3
  $region1: #{forward.1} parent=0
    #allocation3 [shape = 'u8[32768]{0}', space=vmem, size = 0x8000, scoped, tag = 'input window, operand 0']
    #allocation4 [shape = 's32[2]{0}', space=sflag, size = 0x8, scoped, tag = 'scoped memory for forward.1']
    #allocation5 [shape = 's32[2]{0}', space=sflag, size = 0x8, scoped, tag = 'scoped memory for forward.1']
    #allocation6 [shape = 'u8[81920]{0}', space=vmem, size = 0x14000, scoped, tag = 'input window, operand 1, single buffered']
    #allocation7 [shape = 's32[1]{0}', space=sflag, size = 0x4, scoped, tag = 'scoped memory for forward.1']
    #allocation8 [shape = 'u8[65536]{0}', space=vmem, size = 0x10000, scoped, tag = 'output window, operand 0']
    %7 = vsyncpa [#allocation4], 0
    %s8 = scalar_lea.sflag [#allocation4], 1
    %9 = vsyncpa %s8, 0
    %10 = vsyncpa [#allocation7], 0
    %11 = vsyncpa [#allocation5], 0
    %s12 = scalar_lea.sflag [#allocation5], 1
    %13 = vsyncpa %s12, 0
    loop: start=0, step=1, limit=4
    $region2: #{forward.1} parent=1 // loop_pre_header
      _
    $region3: #{forward.1} parent=1 // loop_header
      %s15 = sphi 0, %s19
      %p16 = scmp.ge.s32.totalorder %s15, 4
      %s25 = sphi 0, %s27
      %s28 = sphi 0, %s25
      %s29 = sphi 0, %s28
      %s45 = sphi 0, %s29
      %s49 = sphi 0, %s49
      %s51 = sphi 0, %s49
      %s52 = sphi 0, %s51
      %s66 = sphi 0, %s52
      %s72 = sphi 0, %s74
      %s75 = sphi 0, %s72
      %s76 = sphi 0, %s75
      %s92 = sphi 0, %s76
    $region4: #{forward.1} parent=1 // loop_header_branch
      %18 = sbr.rel (%p16) target = $region8
    $region5: #{forward.1} parent=1 // loop_body
      %s20 = ssub.s32 %s15, 1
      %s21 = ssub.s32 %s15, 2
      %s22 = sadd.s32 %s15, 1
      %s23 = ssub.s32 %s15, %s22
      %p24 = scmp.eq.s32.totalorder %s23, 0
      %s26 = sadd.s32 %s25, 1
      %s27 = scalar_select %p24, %s25, %s26
      %p30 = pneg %p24
      %p31 = scmp.eq.s32.totalorder %s15, 1
      %p32 = por %p30, %p31
      %p33 = scmp.ne.s32.totalorder %s25, %s28
      %p34 = scmp.eq.s32.totalorder %s15, 0
      %p35 = por %p33, %p34
      %p36 = scmp.ne.s32.totalorder %s25, %s28
      %p37 = scmp.eq.s32.totalorder %s20, 1
      %p38 = por %p36, %p37
      %p39 = scmp.ne.s32.totalorder %s28, %s29
      %p40 = scmp.eq.s32.totalorder %s20, 0
      %p41 = por %p39, %p40
      %p42 = scmp.ne.s32.totalorder %s28, %s29
      %p43 = scmp.eq.s32.totalorder %s21, 1
      %p44 = por %p42, %p43
      %p46 = scmp.ne.s32.totalorder %s29, %s45
      %p47 = scmp.eq.s32.totalorder %s21, 0
      %p48 = por %p46, %p47
      %s50 = sadd.s32 %s49, 1
      %p53 = scmp.eq.s32.totalorder %s15, 1
      %p54 = scmp.ne.s32.totalorder %s49, %s51
      %p55 = scmp.eq.s32.totalorder %s15, 0
      %p56 = por %p54, %p55
      %p57 = scmp.ne.s32.totalorder %s49, %s51
      %p58 = scmp.eq.s32.totalorder %s20, 1
      %p59 = por %p57, %p58
      %p60 = scmp.ne.s32.totalorder %s51, %s52
      %p61 = scmp.eq.s32.totalorder %s20, 0
      %p62 = por %p60, %p61
      %p63 = scmp.ne.s32.totalorder %s51, %s52
      %p64 = scmp.eq.s32.totalorder %s21, 1
      %p65 = por %p63, %p64
      %p67 = scmp.ne.s32.totalorder %s52, %s66
      %p68 = scmp.eq.s32.totalorder %s21, 0
      %p69 = por %p67, %p68
      %s70 = ssub.s32 %s15, %s22
      %p71 = scmp.eq.s32.totalorder %s70, 0
      %s73 = sadd.s32 %s72, 1
      %s74 = scalar_select %p71, %s72, %s73
      %p77 = pneg %p71
      %p78 = scmp.eq.s32.totalorder %s15, 1
      %p79 = por %p77, %p78
      %p80 = scmp.ne.s32.totalorder %s72, %s75
      %p81 = scmp.eq.s32.totalorder %s15, 0
      %p82 = por %p80, %p81
      %p83 = scmp.ne.s32.totalorder %s72, %s75
      %p84 = scmp.eq.s32.totalorder %s20, 1
      %p85 = por %p83, %p84
      %p86 = scmp.ne.s32.totalorder %s75, %s76
      %p87 = scmp.eq.s32.totalorder %s20, 0
      %p88 = por %p86, %p87
      %p89 = scmp.ne.s32.totalorder %s75, %s76
      %p90 = scmp.eq.s32.totalorder %s21, 1
      %p91 = por %p89, %p90
      %p93 = scmp.ne.s32.totalorder %s76, %s92
      %p94 = scmp.eq.s32.totalorder %s21, 0
      %p95 = por %p93, %p94
      %p96 = scmp.le.s32.totalorder 1, %s15
      %p97 = scmp.lt.s32.totalorder %s15, 3
      %p98 = pnand %p96, %p97
      %p99 = pneg %p98
      // Predicated region
      $region9: #{forward.1} parent=5 // pred_check
        _
      $region10: #{forward.1} parent=5 // pred_check_branch
        %101 = sbr.rel (%p98) target = $region12
      $region11: #{forward.1} parent=5 // pred_region
        %s102 = ssub.s32 %s15, 1
        // Predicated region
        $region13: #{forward.1} parent=11 // pred_check
          %p103 = pneg %p62
        $region14: #{forward.1} parent=11 // pred_check_branch
          %105 = sbr.rel (%p103) target = $region16
        $region15: #{forward.1} parent=11 // pred_region
          %107 = vsyncadd [#allocation7], 0
          %s108 = sshll.u32 %s1, 4
          %s109 = int_to_ptr.hbm [resolvable:$true] %s108
          %s110 = sshll.u32 [#allocation6], 4
          %s111 = int_to_ptr.vmem [resolvable:$true] %s110
          %116 = dma.hbm_to_vmem [thread:$0]  %s109, 2560, %s111, [#allocation7], 128, 128, 8
        $region16: #{forward.1} parent=11 // pred_fallthru
          _
      $region12: #{forward.1} parent=5 // pred_fallthru
        _
      %p117 = scmp.lt.s32.totalorder %s15, 2
      // Predicated region
      $region17: #{forward.1} parent=5 // pred_check
        %p118 = pneg %p117
      $region18: #{forward.1} parent=5 // pred_check_branch
        %120 = sbr.rel (%p118) target = $region20
      $region19: #{forward.1} parent=5 // pred_region
        // Predicated region
        $region21: #{forward.1} parent=19 // pred_check
          %p121 = pneg %p35
        $region22: #{forward.1} parent=19 // pred_check_branch
          %123 = sbr.rel (%p121) target = $region24
        $region23: #{forward.1} parent=19 // pred_region
          %s124 = sand.u32 %s25, 1
          %s125 = scalar_lea.sflag [#allocation4], %s124
          %s126 = sand.u32 %s25, 1
          %s127 = smul.addr %s126, 32
          %s128 = scalar_lea.vmem [#allocation3], %s127
          %s129 = smul.u32 16, %s15
          %131 = vsyncadd %s125, 0
          %s132 = smul.addr %s129, 2
          %s133 = scalar_lea.hbm %s0, %s132
          %s135 = sshll.u32 %s133, 4
          %s136 = int_to_ptr.hbm [resolvable:$true] %s135
          %s137 = sshll.u32 %s128, 4
          %s138 = int_to_ptr.vmem [resolvable:$true] %s137
          %140 = dma.hbm_to_vmem [thread:$0]  %s136, 512, %s138, %s125
        $region24: #{forward.1} parent=19 // pred_fallthru
          _
      $region20: #{forward.1} parent=5 // pred_fallthru
        _
      %p141 = scmp.le.s32.totalorder 1, %s15
      %p142 = scmp.lt.s32.totalorder %s15, 3
      %p143 = pnand %p141, %p142
      %p144 = pneg %p143
      // Predicated region
      $region25: #{forward.1} parent=5 // pred_check
        _
      $region26: #{forward.1} parent=5 // pred_check_branch
        %146 = sbr.rel (%p143) target = $region28
      $region27: #{forward.1} parent=5 // pred_region
        %s147 = ssub.s32 %s15, 1
        %s148 = sand.u32 %s28, 1
        %s149 = scalar_lea.sflag [#allocation4], %s148
        %s150 = sand.u32 %s28, 1
        %s151 = smul.addr %s150, 32
        %s152 = scalar_lea.vmem [#allocation3], %s151
        // Predicated region
        $region29: #{forward.1} parent=27 // pred_check
          %p153 = pneg %p41
        $region30: #{forward.1} parent=27 // pred_check_branch
          %155 = sbr.rel (%p153) target = $region32
        $region31: #{forward.1} parent=27 // pred_region
          %157 = dma.done %s149, 512
        $region32: #{forward.1} parent=27 // pred_fallthru
          _
        // Predicated region
        $region33: #{forward.1} parent=27 // pred_check
          %p158 = pneg %p62
        $region34: #{forward.1} parent=27 // pred_check_branch
          %160 = sbr.rel (%p158) target = $region36
        $region35: #{forward.1} parent=27 // pred_region
          %162 = dma.done [#allocation7], 2560
        $region36: #{forward.1} parent=27 // pred_fallthru
          _
        %s163 = sand.u32 %s28, 1
        %s164 = scalar_lea.sflag [#allocation4], %s163
        %s165 = sand.u32 %s28, 1
        %s166 = smul.addr %s165, 32
        %s167 = scalar_lea.vmem [#allocation3], %s166
        %p168 = pneg %p41
        %p169 = pneg %p38
        %p170 = pneg %p62
        %p171 = pneg %p59
        %p172 = pneg %p88
        %p173 = pneg %p85
        %s174 = sand.u32 %s75, 1
        %s175 = scalar_lea.sflag [#allocation5], %s174
        %s176 = sand.u32 %s75, 1
        %s177 = smul.addr %s176, 64
        %s178 = scalar_lea.vmem [#allocation8], %s177
        %s179 = smul.u32 16, %s20
        %s180 = smul.u32 16, %s20
        %v181 = vld [vmem:[%s152] sm:$0xff]
        %v182 = vld [vmem:[%s152 + $0x8] sm:$0xff]
        %v183 = vld [vmem:[%s152 + $0x10] sm:$0xff]
        %v184 = vld [vmem:[%s152 + $0x18] sm:$0xff]
        %v185 = vld [vmem:[#allocation6] sm:$0xff]
        %v186 = vld [vmem:[#allocation6 + $0x8] sm:$0xff]
        %188 = vset.pattern.permute.xlu0 0
        %189 = vperm.xlu0 %188, %v185
        %v190 = vpop.permute.xlu0 %189
        %193 = vset.pattern.permute.xlu0 0
        %194 = vperm.xlu0 %193, %v186
        %v195 = vpop.permute.xlu0 %194
        %v201 = vperm.slane %v181, 0
        %v202 = vperm.slane %v181, 2
        %v203 = vperm.slane %v181, 4
        %v204 = vperm.slane %v181, 6
        %v205 = vperm.slane %v182, 0
        %v206 = vperm.slane %v182, 2
        %v207 = vperm.slane %v182, 4
        %v208 = vperm.slane %v182, 6
        %v209 = vperm.slane %v183, 0
        %v210 = vperm.slane %v183, 2
        %v211 = vperm.slane %v183, 4
        %v212 = vperm.slane %v183, 6
        %v213 = vperm.slane %v184, 0
        %v214 = vperm.slane %v184, 2
        %v215 = vperm.slane %v184, 4
        %v216 = vperm.slane %v184, 6
        %v233 = vperm.slane %v201, 0
        %v234 = vperm.slane %v202, 0
        %v235 = vperm.slane %v203, 0
        %v236 = vperm.slane %v204, 0
        %v237 = vperm.slane %v205, 0
        %v238 = vperm.slane %v206, 0
        %v239 = vperm.slane %v207, 0
        %v240 = vperm.slane %v208, 0
        %v241 = vperm.slane %v209, 0
        %v242 = vperm.slane %v210, 0
        %v243 = vperm.slane %v211, 0
        %v244 = vperm.slane %v212, 0
        %v245 = vperm.slane %v213, 0
        %v246 = vperm.slane %v214, 0
        %v247 = vperm.slane %v215, 0
        %v248 = vperm.slane %v216, 0
        %v249 = vmul.f32 %v190, %v233
        %v250 = vmul.f32 %v190, %v234
        %v251 = vmul.f32 %v190, %v235
        %v252 = vmul.f32 %v190, %v236
        %v253 = vmul.f32 %v190, %v237
        %v254 = vmul.f32 %v190, %v238
        %v255 = vmul.f32 %v190, %v239
        %v256 = vmul.f32 %v190, %v240
        %v257 = vmul.f32 %v190, %v241
        %v258 = vmul.f32 %v190, %v242
        %v259 = vmul.f32 %v190, %v243
        %v260 = vmul.f32 %v190, %v244
        %v261 = vmul.f32 %v190, %v245
        %v262 = vmul.f32 %v190, %v246
        %v263 = vmul.f32 %v190, %v247
        %v264 = vmul.f32 %v190, %v248
        %v265 = vmul.f32 %v195, %v233
        %v266 = vmul.f32 %v195, %v234
        %v267 = vmul.f32 %v195, %v235
        %v268 = vmul.f32 %v195, %v236
        %v269 = vmul.f32 %v195, %v237
        %v270 = vmul.f32 %v195, %v238
        %v271 = vmul.f32 %v195, %v239
        %v272 = vmul.f32 %v195, %v240
        %v273 = vmul.f32 %v195, %v241
        %v274 = vmul.f32 %v195, %v242
        %v275 = vmul.f32 %v195, %v243
        %v276 = vmul.f32 %v195, %v244
        %v277 = vmul.f32 %v195, %v245
        %v278 = vmul.f32 %v195, %v246
        %v279 = vmul.f32 %v195, %v247
        %v280 = vmul.f32 %v195, %v248
        %281 = vset.pattern.permute.xlu0 1
        %282 = vperm.xlu0 %281, %v185
        %v283 = vpop.permute.xlu0 %282
        %285 = vset.pattern.permute.xlu0 1
        %286 = vperm.xlu0 %285, %v186
        %v287 = vpop.permute.xlu0 %286
        %v289 = vperm.slane %v181, 1
        %v290 = vperm.slane %v181, 3
        %v291 = vperm.slane %v181, 5
        %v292 = vperm.slane %v181, 7
        %v293 = vperm.slane %v182, 1
        %v294 = vperm.slane %v182, 3
        %v295 = vperm.slane %v182, 5
        %v296 = vperm.slane %v182, 7
        %v297 = vperm.slane %v183, 1
        %v298 = vperm.slane %v183, 3
        %v299 = vperm.slane %v183, 5
        %v300 = vperm.slane %v183, 7
        %v301 = vperm.slane %v184, 1
        %v302 = vperm.slane %v184, 3
        %v303 = vperm.slane %v184, 5
        %v304 = vperm.slane %v184, 7
        %v321 = vperm.slane %v289, 1
        %v322 = vperm.slane %v290, 1
        %v323 = vperm.slane %v291, 1
        %v324 = vperm.slane %v292, 1
        %v325 = vperm.slane %v293, 1
        %v326 = vperm.slane %v294, 1
        %v327 = vperm.slane %v295, 1
        %v328 = vperm.slane %v296, 1
        %v329 = vperm.slane %v297, 1
        %v330 = vperm.slane %v298, 1
        %v331 = vperm.slane %v299, 1
        %v332 = vperm.slane %v300, 1
        %v333 = vperm.slane %v301, 1
        %v334 = vperm.slane %v302, 1
        %v335 = vperm.slane %v303, 1
        %v336 = vperm.slane %v304, 1
        %v337 = vmul.f32 %v283, %v321
        %v338 = vmul.f32 %v283, %v322
        %v339 = vmul.f32 %v283, %v323
        %v340 = vmul.f32 %v283, %v324
        %v341 = vmul.f32 %v283, %v325
        %v342 = vmul.f32 %v283, %v326
        %v343 = vmul.f32 %v283, %v327
        %v344 = vmul.f32 %v283, %v328
        %v345 = vmul.f32 %v283, %v329
        %v346 = vmul.f32 %v283, %v330
        %v347 = vmul.f32 %v283, %v331
        %v348 = vmul.f32 %v283, %v332
        %v349 = vmul.f32 %v283, %v333
        %v350 = vmul.f32 %v283, %v334
        %v351 = vmul.f32 %v283, %v335
        %v352 = vmul.f32 %v283, %v336
        %v353 = vmul.f32 %v287, %v321
        %v354 = vmul.f32 %v287, %v322
        %v355 = vmul.f32 %v287, %v323
        %v356 = vmul.f32 %v287, %v324
        %v357 = vmul.f32 %v287, %v325
        %v358 = vmul.f32 %v287, %v326
        %v359 = vmul.f32 %v287, %v327
        %v360 = vmul.f32 %v287, %v328
        %v361 = vmul.f32 %v287, %v329
        %v362 = vmul.f32 %v287, %v330
        %v363 = vmul.f32 %v287, %v331
        %v364 = vmul.f32 %v287, %v332
        %v365 = vmul.f32 %v287, %v333
        %v366 = vmul.f32 %v287, %v334
        %v367 = vmul.f32 %v287, %v335
        %v368 = vmul.f32 %v287, %v336
        %v369 = vadd.f32 %v249, %v337
        %v370 = vadd.f32 %v250, %v338
        %v371 = vadd.f32 %v251, %v339
        %v372 = vadd.f32 %v252, %v340
        %v373 = vadd.f32 %v253, %v341
        %v374 = vadd.f32 %v254, %v342
        %v375 = vadd.f32 %v255, %v343
        %v376 = vadd.f32 %v256, %v344
        %v377 = vadd.f32 %v257, %v345
        %v378 = vadd.f32 %v258, %v346
        %v379 = vadd.f32 %v259, %v347
        %v380 = vadd.f32 %v260, %v348
        %v381 = vadd.f32 %v261, %v349
        %v382 = vadd.f32 %v262, %v350
        %v383 = vadd.f32 %v263, %v351
        %v384 = vadd.f32 %v264, %v352
        %v385 = vadd.f32 %v265, %v353
        %v386 = vadd.f32 %v266, %v354
        %v387 = vadd.f32 %v267, %v355
        %v388 = vadd.f32 %v268, %v356
        %v389 = vadd.f32 %v269, %v357
        %v390 = vadd.f32 %v270, %v358
        %v391 = vadd.f32 %v271, %v359
        %v392 = vadd.f32 %v272, %v360
        %v393 = vadd.f32 %v273, %v361
        %v394 = vadd.f32 %v274, %v362
        %v395 = vadd.f32 %v275, %v363
        %v396 = vadd.f32 %v276, %v364
        %v397 = vadd.f32 %v277, %v365
        %v398 = vadd.f32 %v278, %v366
        %v399 = vadd.f32 %v279, %v367
        %v400 = vadd.f32 %v280, %v368
        %v401 = vadd.f32 %v369, 0.5
        %v402 = vadd.f32 %v370, 0.5
        %v403 = vadd.f32 %v371, 0.5
        %v404 = vadd.f32 %v372, 0.5
        %v405 = vadd.f32 %v373, 0.5
        %v406 = vadd.f32 %v374, 0.5
        %v407 = vadd.f32 %v375, 0.5
        %v408 = vadd.f32 %v376, 0.5
        %v409 = vadd.f32 %v377, 0.5
        %v410 = vadd.f32 %v378, 0.5
        %v411 = vadd.f32 %v379, 0.5
        %v412 = vadd.f32 %v380, 0.5
        %v413 = vadd.f32 %v381, 0.5
        %v414 = vadd.f32 %v382, 0.5
        %v415 = vadd.f32 %v383, 0.5
        %v416 = vadd.f32 %v384, 0.5
        %v417 = vadd.f32 %v385, 0.5
        %v418 = vadd.f32 %v386, 0.5
        %v419 = vadd.f32 %v387, 0.5
        %v420 = vadd.f32 %v388, 0.5
        %v421 = vadd.f32 %v389, 0.5
        %v422 = vadd.f32 %v390, 0.5
        %v423 = vadd.f32 %v391, 0.5
        %v424 = vadd.f32 %v392, 0.5
        %v425 = vadd.f32 %v393, 0.5
        %v426 = vadd.f32 %v394, 0.5
        %v427 = vadd.f32 %v395, 0.5
        %v428 = vadd.f32 %v396, 0.5
        %v429 = vadd.f32 %v397, 0.5
        %v430 = vadd.f32 %v398, 0.5
        %v431 = vadd.f32 %v399, 0.5
        %v432 = vadd.f32 %v400, 0.5
        %v433 = vfloor.f32 %v401
        %v434 = vfloor.f32 %v402
        %v435 = vfloor.f32 %v403
        %v436 = vfloor.f32 %v404
        %v437 = vfloor.f32 %v405
        %v438 = vfloor.f32 %v406
        %v439 = vfloor.f32 %v407
        %v440 = vfloor.f32 %v408
        %v441 = vfloor.f32 %v409
        %v442 = vfloor.f32 %v410
        %v443 = vfloor.f32 %v411
        %v444 = vfloor.f32 %v412
        %v445 = vfloor.f32 %v413
        %v446 = vfloor.f32 %v414
        %v447 = vfloor.f32 %v415
        %v448 = vfloor.f32 %v416
        %v449 = vfloor.f32 %v417
        %v450 = vfloor.f32 %v418
        %v451 = vfloor.f32 %v419
        %v452 = vfloor.f32 %v420
        %v453 = vfloor.f32 %v421
        %v454 = vfloor.f32 %v422
        %v455 = vfloor.f32 %v423
        %v456 = vfloor.f32 %v424
        %v457 = vfloor.f32 %v425
        %v458 = vfloor.f32 %v426
        %v459 = vfloor.f32 %v427
        %v460 = vfloor.f32 %v428
        %v461 = vfloor.f32 %v429
        %v462 = vfloor.f32 %v430
        %v463 = vfloor.f32 %v431
        %v464 = vfloor.f32 %v432
        %v465 = vsub.f32 %v369, %v433
        %v466 = vsub.f32 %v370, %v434
        %v467 = vsub.f32 %v371, %v435
        %v468 = vsub.f32 %v372, %v436
        %v469 = vsub.f32 %v373, %v437
        %v470 = vsub.f32 %v374, %v438
        %v471 = vsub.f32 %v375, %v439
        %v472 = vsub.f32 %v376, %v440
        %v473 = vsub.f32 %v377, %v441
        %v474 = vsub.f32 %v378, %v442
        %v475 = vsub.f32 %v379, %v443
        %v476 = vsub.f32 %v380, %v444
        %v477 = vsub.f32 %v381, %v445
        %v478 = vsub.f32 %v382, %v446
        %v479 = vsub.f32 %v383, %v447
        %v480 = vsub.f32 %v384, %v448
        %v481 = vsub.f32 %v385, %v449
        %v482 = vsub.f32 %v386, %v450
        %v483 = vsub.f32 %v387, %v451
        %v484 = vsub.f32 %v388, %v452
        %v485 = vsub.f32 %v389, %v453
        %v486 = vsub.f32 %v390, %v454
        %v487 = vsub.f32 %v391, %v455
        %v488 = vsub.f32 %v392, %v456
        %v489 = vsub.f32 %v393, %v457
        %v490 = vsub.f32 %v394, %v458
        %v491 = vsub.f32 %v395, %v459
        %v492 = vsub.f32 %v396, %v460
        %v493 = vsub.f32 %v397, %v461
        %v494 = vsub.f32 %v398, %v462
        %v495 = vsub.f32 %v399, %v463
        %v496 = vsub.f32 %v400, %v464
        %v497 = vmul.f32 %v465, %v465
        %v498 = vmul.f32 %v466, %v466
        %v499 = vmul.f32 %v467, %v467
        %v500 = vmul.f32 %v468, %v468
        %v501 = vmul.f32 %v469, %v469
        %v502 = vmul.f32 %v470, %v470
        %v503 = vmul.f32 %v471, %v471
        %v504 = vmul.f32 %v472, %v472
        %v505 = vmul.f32 %v473, %v473
        %v506 = vmul.f32 %v474, %v474
        %v507 = vmul.f32 %v475, %v475
        %v508 = vmul.f32 %v476, %v476
        %v509 = vmul.f32 %v477, %v477
        %v510 = vmul.f32 %v478, %v478
        %v511 = vmul.f32 %v479, %v479
        %v512 = vmul.f32 %v480, %v480
        %v513 = vmul.f32 %v481, %v481
        %v514 = vmul.f32 %v482, %v482
        %v515 = vmul.f32 %v483, %v483
        %v516 = vmul.f32 %v484, %v484
        %v517 = vmul.f32 %v485, %v485
        %v518 = vmul.f32 %v486, %v486
        %v519 = vmul.f32 %v487, %v487
        %v520 = vmul.f32 %v488, %v488
        %v521 = vmul.f32 %v489, %v489
        %v522 = vmul.f32 %v490, %v490
        %v523 = vmul.f32 %v491, %v491
        %v524 = vmul.f32 %v492, %v492
        %v525 = vmul.f32 %v493, %v493
        %v526 = vmul.f32 %v494, %v494
        %v527 = vmul.f32 %v495, %v495
        %v528 = vmul.f32 %v496, %v496
        %v529 = vmul.f32 %v497, -0.036382843
        %v530 = vmul.f32 %v498, -0.036382843
        %v531 = vmul.f32 %v499, -0.036382843
        %v532 = vmul.f32 %v500, -0.036382843
        %v533 = vmul.f32 %v501, -0.036382843
        %v534 = vmul.f32 %v502, -0.036382843
        %v535 = vmul.f32 %v503, -0.036382843
        %v536 = vmul.f32 %v504, -0.036382843
        %v537 = vmul.f32 %v505, -0.036382843
        %v538 = vmul.f32 %v506, -0.036382843
        %v539 = vmul.f32 %v507, -0.036382843
        %v540 = vmul.f32 %v508, -0.036382843
        %v541 = vmul.f32 %v509, -0.036382843
        %v542 = vmul.f32 %v510, -0.036382843
        %v543 = vmul.f32 %v511, -0.036382843
        %v544 = vmul.f32 %v512, -0.036382843
        %v545 = vmul.f32 %v513, -0.036382843
        %v546 = vmul.f32 %v514, -0.036382843
        %v547 = vmul.f32 %v515, -0.036382843
        %v548 = vmul.f32 %v516, -0.036382843
        %v549 = vmul.f32 %v517, -0.036382843
        %v550 = vmul.f32 %v518, -0.036382843
        %v551 = vmul.f32 %v519, -0.036382843
        %v552 = vmul.f32 %v520, -0.036382843
        %v553 = vmul.f32 %v521, -0.036382843
        %v554 = vmul.f32 %v522, -0.036382843
        %v555 = vmul.f32 %v523, -0.036382843
        %v556 = vmul.f32 %v524, -0.036382843
        %v557 = vmul.f32 %v525, -0.036382843
        %v558 = vmul.f32 %v526, -0.036382843
        %v559 = vmul.f32 %v527, -0.036382843
        %v560 = vmul.f32 %v528, -0.036382843
        %v561 = vadd.f32 %v529, 0.28200597
        %v562 = vadd.f32 %v530, 0.28200597
        %v563 = vadd.f32 %v531, 0.28200597
        %v564 = vadd.f32 %v532, 0.28200597
        %v565 = vadd.f32 %v533, 0.28200597
        %v566 = vadd.f32 %v534, 0.28200597
        %v567 = vadd.f32 %v535, 0.28200597
        %v568 = vadd.f32 %v536, 0.28200597
        %v569 = vadd.f32 %v537, 0.28200597
        %v570 = vadd.f32 %v538, 0.28200597
        %v571 = vadd.f32 %v539, 0.28200597
        %v572 = vadd.f32 %v540, 0.28200597
        %v573 = vadd.f32 %v541, 0.28200597
        %v574 = vadd.f32 %v542, 0.28200597
        %v575 = vadd.f32 %v543, 0.28200597
        %v576 = vadd.f32 %v544, 0.28200597
        %v577 = vadd.f32 %v545, 0.28200597
        %v578 = vadd.f32 %v546, 0.28200597
        %v579 = vadd.f32 %v547, 0.28200597
        %v580 = vadd.f32 %v548, 0.28200597
        %v581 = vadd.f32 %v549, 0.28200597
        %v582 = vadd.f32 %v550, 0.28200597
        %v583 = vadd.f32 %v551, 0.28200597
        %v584 = vadd.f32 %v552, 0.28200597
        %v585 = vadd.f32 %v553, 0.28200597
        %v586 = vadd.f32 %v554, 0.28200597
        %v587 = vadd.f32 %v555, 0.28200597
        %v588 = vadd.f32 %v556, 0.28200597
        %v589 = vadd.f32 %v557, 0.28200597
        %v590 = vadd.f32 %v558, 0.28200597
        %v591 = vadd.f32 %v559, 0.28200597
        %v592 = vadd.f32 %v560, 0.28200597
        %v593 = vmul.f32 %v497, -0.012031586
        %v594 = vmul.f32 %v498, -0.012031586
        %v595 = vmul.f32 %v499, -0.012031586
        %v596 = vmul.f32 %v500, -0.012031586
        %v597 = vmul.f32 %v501, -0.012031586
        %v598 = vmul.f32 %v502, -0.012031586
        %v599 = vmul.f32 %v503, -0.012031586
        %v600 = vmul.f32 %v504, -0.012031586
        %v601 = vmul.f32 %v505, -0.012031586
        %v602 = vmul.f32 %v506, -0.012031586
        %v603 = vmul.f32 %v507, -0.012031586
        %v604 = vmul.f32 %v508, -0.012031586
        %v605 = vmul.f32 %v509, -0.012031586
        %v606 = vmul.f32 %v510, -0.012031586
        %v607 = vmul.f32 %v511, -0.012031586
        %v608 = vmul.f32 %v512, -0.012031586
        %v609 = vmul.f32 %v513, -0.012031586
        %v610 = vmul.f32 %v514, -0.012031586
        %v611 = vmul.f32 %v515, -0.012031586
        %v612 = vmul.f32 %v516, -0.012031586
        %v613 = vmul.f32 %v517, -0.012031586
        %v614 = vmul.f32 %v518, -0.012031586
        %v615 = vmul.f32 %v519, -0.012031586
        %v616 = vmul.f32 %v520, -0.012031586
        %v617 = vmul.f32 %v521, -0.012031586
        %v618 = vmul.f32 %v522, -0.012031586
        %v619 = vmul.f32 %v523, -0.012031586
        %v620 = vmul.f32 %v524, -0.012031586
        %v621 = vmul.f32 %v525, -0.012031586
        %v622 = vmul.f32 %v526, -0.012031586
        %v623 = vmul.f32 %v527, -0.012031586
        %v624 = vmul.f32 %v528, -0.012031586
        %v625 = vadd.f32 %v593, 0.10422916
        %v626 = vadd.f32 %v594, 0.10422916
        %v627 = vadd.f32 %v595, 0.10422916
        %v628 = vadd.f32 %v596, 0.10422916
        %v629 = vadd.f32 %v597, 0.10422916
        %v630 = vadd.f32 %v598, 0.10422916
        %v631 = vadd.f32 %v599, 0.10422916
        %v632 = vadd.f32 %v600, 0.10422916
        %v633 = vadd.f32 %v601, 0.10422916
        %v634 = vadd.f32 %v602, 0.10422916
        %v635 = vadd.f32 %v603, 0.10422916
        %v636 = vadd.f32 %v604, 0.10422916
        %v637 = vadd.f32 %v605, 0.10422916
        %v638 = vadd.f32 %v606, 0.10422916
        %v639 = vadd.f32 %v607, 0.10422916
        %v640 = vadd.f32 %v608, 0.10422916
        %v641 = vadd.f32 %v609, 0.10422916
        %v642 = vadd.f32 %v610, 0.10422916
        %v643 = vadd.f32 %v611, 0.10422916
        %v644 = vadd.f32 %v612, 0.10422916
        %v645 = vadd.f32 %v613, 0.10422916
        %v646 = vadd.f32 %v614, 0.10422916
        %v647 = vadd.f32 %v615, 0.10422916
        %v648 = vadd.f32 %v616, 0.10422916
        %v649 = vadd.f32 %v617, 0.10422916
        %v650 = vadd.f32 %v618, 0.10422916
        %v651 = vadd.f32 %v619, 0.10422916
        %v652 = vadd.f32 %v620, 0.10422916
        %v653 = vadd.f32 %v621, 0.10422916
        %v654 = vadd.f32 %v622, 0.10422916
        %v655 = vadd.f32 %v623, 0.10422916
        %v656 = vadd.f32 %v624, 0.10422916
        %v657 = vmul.f32 %v561, %v497
        %v658 = vmul.f32 %v562, %v498
        %v659 = vmul.f32 %v563, %v499
        %v660 = vmul.f32 %v564, %v500
        %v661 = vmul.f32 %v565, %v501
        %v662 = vmul.f32 %v566, %v502
        %v663 = vmul.f32 %v567, %v503
        %v664 = vmul.f32 %v568, %v504
        %v665 = vmul.f32 %v569, %v505
        %v666 = vmul.f32 %v570, %v506
        %v667 = vmul.f32 %v571, %v507
        %v668 = vmul.f32 %v572, %v508
        %v669 = vmul.f32 %v573, %v509
        %v670 = vmul.f32 %v574, %v510
        %v671 = vmul.f32 %v575, %v511
        %v672 = vmul.f32 %v576, %v512
        %v673 = vmul.f32 %v577, %v513
        %v674 = vmul.f32 %v578, %v514
        %v675 = vmul.f32 %v579, %v515
        %v676 = vmul.f32 %v580, %v516
        %v677 = vmul.f32 %v581, %v517
        %v678 = vmul.f32 %v582, %v518
        %v679 = vmul.f32 %v583, %v519
        %v680 = vmul.f32 %v584, %v520
        %v681 = vmul.f32 %v585, %v521
        %v682 = vmul.f32 %v586, %v522
        %v683 = vmul.f32 %v587, %v523
        %v684 = vmul.f32 %v588, %v524
        %v685 = vmul.f32 %v589, %v525
        %v686 = vmul.f32 %v590, %v526
        %v687 = vmul.f32 %v591, %v527
        %v688 = vmul.f32 %v592, %v528
        %v689 = vadd.f32 %v657, -1.7143908
        %v690 = vadd.f32 %v658, -1.7143908
        %v691 = vadd.f32 %v659, -1.7143908
        %v692 = vadd.f32 %v660, -1.7143908
        %v693 = vadd.f32 %v661, -1.7143908
        %v694 = vadd.f32 %v662, -1.7143908
        %v695 = vadd.f32 %v663, -1.7143908
        %v696 = vadd.f32 %v664, -1.7143908
        %v697 = vadd.f32 %v665, -1.7143908
        %v698 = vadd.f32 %v666, -1.7143908
        %v699 = vadd.f32 %v667, -1.7143908
        %v700 = vadd.f32 %v668, -1.7143908
        %v701 = vadd.f32 %v669, -1.7143908
        %v702 = vadd.f32 %v670, -1.7143908
        %v703 = vadd.f32 %v671, -1.7143908
        %v704 = vadd.f32 %v672, -1.7143908
        %v705 = vadd.f32 %v673, -1.7143908
        %v706 = vadd.f32 %v674, -1.7143908
        %v707 = vadd.f32 %v675, -1.7143908
        %v708 = vadd.f32 %v676, -1.7143908
        %v709 = vadd.f32 %v677, -1.7143908
        %v710 = vadd.f32 %v678, -1.7143908
        %v711 = vadd.f32 %v679, -1.7143908
        %v712 = vadd.f32 %v680, -1.7143908
        %v713 = vadd.f32 %v681, -1.7143908
        %v714 = vadd.f32 %v682, -1.7143908
        %v715 = vadd.f32 %v683, -1.7143908
        %v716 = vadd.f32 %v684, -1.7143908
        %v717 = vadd.f32 %v685, -1.7143908
        %v718 = vadd.f32 %v686, -1.7143908
        %v719 = vadd.f32 %v687, -1.7143908
        %v720 = vadd.f32 %v688, -1.7143908
        %v721 = vmul.f32 %v625, %v497
        %v722 = vmul.f32 %v626, %v498
        %v723 = vmul.f32 %v627, %v499
        %v724 = vmul.f32 %v628, %v500
        %v725 = vmul.f32 %v629, %v501
        %v726 = vmul.f32 %v630, %v502
        %v727 = vmul.f32 %v631, %v503
        %v728 = vmul.f32 %v632, %v504
        %v729 = vmul.f32 %v633, %v505
        %v730 = vmul.f32 %v634, %v506
        %v731 = vmul.f32 %v635, %v507
        %v732 = vmul.f32 %v636, %v508
        %v733 = vmul.f32 %v637, %v509
        %v734 = vmul.f32 %v638, %v510
        %v735 = vmul.f32 %v639, %v511
        %v736 = vmul.f32 %v640, %v512
        %v737 = vmul.f32 %v641, %v513
        %v738 = vmul.f32 %v642, %v514
        %v739 = vmul.f32 %v643, %v515
        %v740 = vmul.f32 %v644, %v516
        %v741 = vmul.f32 %v645, %v517
        %v742 = vmul.f32 %v646, %v518
        %v743 = vmul.f32 %v647, %v519
        %v744 = vmul.f32 %v648, %v520
        %v745 = vmul.f32 %v649, %v521
        %v746 = vmul.f32 %v650, %v522
        %v747 = vmul.f32 %v651, %v523
        %v748 = vmul.f32 %v652, %v524
        %v749 = vmul.f32 %v653, %v525
        %v750 = vmul.f32 %v654, %v526
        %v751 = vmul.f32 %v655, %v527
        %v752 = vmul.f32 %v656, %v528
        %v753 = vadd.f32 %v721, -0.7181223
        %v754 = vadd.f32 %v722, -0.7181223
        %v755 = vadd.f32 %v723, -0.7181223
        %v756 = vadd.f32 %v724, -0.7181223
        %v757 = vadd.f32 %v725, -0.7181223
        %v758 = vadd.f32 %v726, -0.7181223
        %v759 = vadd.f32 %v727, -0.7181223
        %v760 = vadd.f32 %v728, -0.7181223
        %v761 = vadd.f32 %v729, -0.7181223
        %v762 = vadd.f32 %v730, -0.7181223
        %v763 = vadd.f32 %v731, -0.7181223
        %v764 = vadd.f32 %v732, -0.7181223
        %v765 = vadd.f32 %v733, -0.7181223
        %v766 = vadd.f32 %v734, -0.7181223
        %v767 = vadd.f32 %v735, -0.7181223
        %v768 = vadd.f32 %v736, -0.7181223
        %v769 = vadd.f32 %v737, -0.7181223
        %v770 = vadd.f32 %v738, -0.7181223
        %v771 = vadd.f32 %v739, -0.7181223
        %v772 = vadd.f32 %v740, -0.7181223
        %v773 = vadd.f32 %v741, -0.7181223
        %v774 = vadd.f32 %v742, -0.7181223
        %v775 = vadd.f32 %v743, -0.7181223
        %v776 = vadd.f32 %v744, -0.7181223
        %v777 = vadd.f32 %v745, -0.7181223
        %v778 = vadd.f32 %v746, -0.7181223
        %v779 = vadd.f32 %v747, -0.7181223
        %v780 = vadd.f32 %v748, -0.7181223
        %v781 = vadd.f32 %v749, -0.7181223
        %v782 = vadd.f32 %v750, -0.7181223
        %v783 = vadd.f32 %v751, -0.7181223
        %v784 = vadd.f32 %v752, -0.7181223
        %v785 = vmul.f32 %v689, %v497
        %v786 = vmul.f32 %v690, %v498
        %v787 = vmul.f32 %v691, %v499
        %v788 = vmul.f32 %v692, %v500
        %v789 = vmul.f32 %v693, %v501
        %v790 = vmul.f32 %v694, %v502
        %v791 = vmul.f32 %v695, %v503
        %v792 = vmul.f32 %v696, %v504
        %v793 = vmul.f32 %v697, %v505
        %v794 = vmul.f32 %v698, %v506
        %v795 = vmul.f32 %v699, %v507
        %v796 = vmul.f32 %v700, %v508
        %v797 = vmul.f32 %v701, %v509
        %v798 = vmul.f32 %v702, %v510
        %v799 = vmul.f32 %v703, %v511
        %v800 = vmul.f32 %v704, %v512
        %v801 = vmul.f32 %v705, %v513
        %v802 = vmul.f32 %v706, %v514
        %v803 = vmul.f32 %v707, %v515
        %v804 = vmul.f32 %v708, %v516
        %v805 = vmul.f32 %v709, %v517
        %v806 = vmul.f32 %v710, %v518
        %v807 = vmul.f32 %v711, %v519
        %v808 = vmul.f32 %v712, %v520
        %v809 = vmul.f32 %v713, %v521
        %v810 = vmul.f32 %v714, %v522
        %v811 = vmul.f32 %v715, %v523
        %v812 = vmul.f32 %v716, %v524
        %v813 = vmul.f32 %v717, %v525
        %v814 = vmul.f32 %v718, %v526
        %v815 = vmul.f32 %v719, %v527
        %v816 = vmul.f32 %v720, %v528
        %v817 = vadd.f32 %v785, 7.9035363
        %v818 = vadd.f32 %v786, 7.9035363
        %v819 = vadd.f32 %v787, 7.9035363
        %v820 = vadd.f32 %v788, 7.9035363
        %v821 = vadd.f32 %v789, 7.9035363
        %v822 = vadd.f32 %v790, 7.9035363
        %v823 = vadd.f32 %v791, 7.9035363
        %v824 = vadd.f32 %v792, 7.9035363
        %v825 = vadd.f32 %v793, 7.9035363
        %v826 = vadd.f32 %v794, 7.9035363
        %v827 = vadd.f32 %v795, 7.9035363
        %v828 = vadd.f32 %v796, 7.9035363
        %v829 = vadd.f32 %v797, 7.9035363
        %v830 = vadd.f32 %v798, 7.9035363
        %v831 = vadd.f32 %v799, 7.9035363
        %v832 = vadd.f32 %v800, 7.9035363
        %v833 = vadd.f32 %v801, 7.9035363
        %v834 = vadd.f32 %v802, 7.9035363
        %v835 = vadd.f32 %v803, 7.9035363
        %v836 = vadd.f32 %v804, 7.9035363
        %v837 = vadd.f32 %v805, 7.9035363
        %v838 = vadd.f32 %v806, 7.9035363
        %v839 = vadd.f32 %v807, 7.9035363
        %v840 = vadd.f32 %v808, 7.9035363
        %v841 = vadd.f32 %v809, 7.9035363
        %v842 = vadd.f32 %v810, 7.9035363
        %v843 = vadd.f32 %v811, 7.9035363
        %v844 = vadd.f32 %v812, 7.9035363
        %v845 = vadd.f32 %v813, 7.9035363
        %v846 = vadd.f32 %v814, 7.9035363
        %v847 = vadd.f32 %v815, 7.9035363
        %v848 = vadd.f32 %v816, 7.9035363
        %v849 = vmul.f32 %v753, %v497
        %v850 = vmul.f32 %v754, %v498
        %v851 = vmul.f32 %v755, %v499
        %v852 = vmul.f32 %v756, %v500
        %v853 = vmul.f32 %v757, %v501
        %v854 = vmul.f32 %v758, %v502
        %v855 = vmul.f32 %v759, %v503
        %v856 = vmul.f32 %v760, %v504
        %v857 = vmul.f32 %v761, %v505
        %v858 = vmul.f32 %v762, %v506
        %v859 = vmul.f32 %v763, %v507
        %v860 = vmul.f32 %v764, %v508
        %v861 = vmul.f32 %v765, %v509
        %v862 = vmul.f32 %v766, %v510
        %v863 = vmul.f32 %v767, %v511
        %v864 = vmul.f32 %v768, %v512
        %v865 = vmul.f32 %v769, %v513
        %v866 = vmul.f32 %v770, %v514
        %v867 = vmul.f32 %v771, %v515
        %v868 = vmul.f32 %v772, %v516
        %v869 = vmul.f32 %v773, %v517
        %v870 = vmul.f32 %v774, %v518
        %v871 = vmul.f32 %v775, %v519
        %v872 = vmul.f32 %v776, %v520
        %v873 = vmul.f32 %v777, %v521
        %v874 = vmul.f32 %v778, %v522
        %v875 = vmul.f32 %v779, %v523
        %v876 = vmul.f32 %v780, %v524
        %v877 = vmul.f32 %v781, %v525
        %v878 = vmul.f32 %v782, %v526
        %v879 = vmul.f32 %v783, %v527
        %v880 = vmul.f32 %v784, %v528
        %v881 = vadd.f32 %v849, 3.8199525
        %v882 = vadd.f32 %v850, 3.8199525
        %v883 = vadd.f32 %v851, 3.8199525
        %v884 = vadd.f32 %v852, 3.8199525
        %v885 = vadd.f32 %v853, 3.8199525
        %v886 = vadd.f32 %v854, 3.8199525
        %v887 = vadd.f32 %v855, 3.8199525
        %v888 = vadd.f32 %v856, 3.8199525
        %v889 = vadd.f32 %v857, 3.8199525
        %v890 = vadd.f32 %v858, 3.8199525
        %v891 = vadd.f32 %v859, 3.8199525
        %v892 = vadd.f32 %v860, 3.8199525
        %v893 = vadd.f32 %v861, 3.8199525
        %v894 = vadd.f32 %v862, 3.8199525
        %v895 = vadd.f32 %v863, 3.8199525
        %v896 = vadd.f32 %v864, 3.8199525
        %v897 = vadd.f32 %v865, 3.8199525
        %v898 = vadd.f32 %v866, 3.8199525
        %v899 = vadd.f32 %v867, 3.8199525
        %v900 = vadd.f32 %v868, 3.8199525
        %v901 = vadd.f32 %v869, 3.8199525
        %v902 = vadd.f32 %v870, 3.8199525
        %v903 = vadd.f32 %v871, 3.8199525
        %v904 = vadd.f32 %v872, 3.8199525
        %v905 = vadd.f32 %v873, 3.8199525
        %v906 = vadd.f32 %v874, 3.8199525
        %v907 = vadd.f32 %v875, 3.8199525
        %v908 = vadd.f32 %v876, 3.8199525
        %v909 = vadd.f32 %v877, 3.8199525
        %v910 = vadd.f32 %v878, 3.8199525
        %v911 = vadd.f32 %v879, 3.8199525
        %v912 = vadd.f32 %v880, 3.8199525
        %v913 = vmul.f32 %v817, %v497
        %v914 = vmul.f32 %v818, %v498
        %v915 = vmul.f32 %v819, %v499
        %v916 = vmul.f32 %v820, %v500
        %v917 = vmul.f32 %v821, %v501
        %v918 = vmul.f32 %v822, %v502
        %v919 = vmul.f32 %v823, %v503
        %v920 = vmul.f32 %v824, %v504
        %v921 = vmul.f32 %v825, %v505
        %v922 = vmul.f32 %v826, %v506
        %v923 = vmul.f32 %v827, %v507
        %v924 = vmul.f32 %v828, %v508
        %v925 = vmul.f32 %v829, %v509
        %v926 = vmul.f32 %v830, %v510
        %v927 = vmul.f32 %v831, %v511
        %v928 = vmul.f32 %v832, %v512
        %v929 = vmul.f32 %v833, %v513
        %v930 = vmul.f32 %v834, %v514
        %v931 = vmul.f32 %v835, %v515
        %v932 = vmul.f32 %v836, %v516
        %v933 = vmul.f32 %v837, %v517
        %v934 = vmul.f32 %v838, %v518
        %v935 = vmul.f32 %v839, %v519
        %v936 = vmul.f32 %v840, %v520
        %v937 = vmul.f32 %v841, %v521
        %v938 = vmul.f32 %v842, %v522
        %v939 = vmul.f32 %v843, %v523
        %v940 = vmul.f32 %v844, %v524
        %v941 = vmul.f32 %v845, %v525
        %v942 = vmul.f32 %v846, %v526
        %v943 = vmul.f32 %v847, %v527
        %v944 = vmul.f32 %v848, %v528
        %v945 = vadd.f32 %v913, -26.426256
        %v946 = vadd.f32 %v914, -26.426256
        %v947 = vadd.f32 %v915, -26.426256
        %v948 = vadd.f32 %v916, -26.426256
        %v949 = vadd.f32 %v917, -26.426256
        %v950 = vadd.f32 %v918, -26.426256
        %v951 = vadd.f32 %v919, -26.426256
        %v952 = vadd.f32 %v920, -26.426256
        %v953 = vadd.f32 %v921, -26.426256
        %v954 = vadd.f32 %v922, -26.426256
        %v955 = vadd.f32 %v923, -26.426256
        %v956 = vadd.f32 %v924, -26.426256
        %v957 = vadd.f32 %v925, -26.426256
        %v958 = vadd.f32 %v926, -26.426256
        %v959 = vadd.f32 %v927, -26.426256
        %v960 = vadd.f32 %v928, -26.426256
        %v961 = vadd.f32 %v929, -26.426256
        %v962 = vadd.f32 %v930, -26.426256
        %v963 = vadd.f32 %v931, -26.426256
        %v964 = vadd.f32 %v932, -26.426256
        %v965 = vadd.f32 %v933, -26.426256
        %v966 = vadd.f32 %v934, -26.426256
        %v967 = vadd.f32 %v935, -26.426256
        %v968 = vadd.f32 %v936, -26.426256
        %v969 = vadd.f32 %v937, -26.426256
        %v970 = vadd.f32 %v938, -26.426256
        %v971 = vadd.f32 %v939, -26.426256
        %v972 = vadd.f32 %v940, -26.426256
        %v973 = vadd.f32 %v941, -26.426256
        %v974 = vadd.f32 %v942, -26.426256
        %v975 = vadd.f32 %v943, -26.426256
        %v976 = vadd.f32 %v944, -26.426256
        %v977 = vmul.f32 %v881, %v497
        %v978 = vmul.f32 %v882, %v498
        %v979 = vmul.f32 %v883, %v499
        %v980 = vmul.f32 %v884, %v500
        %v981 = vmul.f32 %v885, %v501
        %v982 = vmul.f32 %v886, %v502
        %v983 = vmul.f32 %v887, %v503
        %v984 = vmul.f32 %v888, %v504
        %v985 = vmul.f32 %v889, %v505
        %v986 = vmul.f32 %v890, %v506
        %v987 = vmul.f32 %v891, %v507
        %v988 = vmul.f32 %v892, %v508
        %v989 = vmul.f32 %v893, %v509
        %v990 = vmul.f32 %v894, %v510
        %v991 = vmul.f32 %v895, %v511
        %v992 = vmul.f32 %v896, %v512
        %v993 = vmul.f32 %v897, %v513
        %v994 = vmul.f32 %v898, %v514
        %v995 = vmul.f32 %v899, %v515
        %v996 = vmul.f32 %v900, %v516
        %v997 = vmul.f32 %v901, %v517
        %v998 = vmul.f32 %v902, %v518
        %v999 = vmul.f32 %v903, %v519
        %v1000 = vmul.f32 %v904, %v520
        %v1001 = vmul.f32 %v905, %v521
        %v1002 = vmul.f32 %v906, %v522
        %v1003 = vmul.f32 %v907, %v523
        %v1004 = vmul.f32 %v908, %v524
        %v1005 = vmul.f32 %v909, %v525
        %v1006 = vmul.f32 %v910, %v526
        %v1007 = vmul.f32 %v911, %v527
        %v1008 = vmul.f32 %v912, %v528
        %v1009 = vadd.f32 %v977, -15.094643
        %v1010 = vadd.f32 %v978, -15.094643
        %v1011 = vadd.f32 %v979, -15.094643
        %v1012 = vadd.f32 %v980, -15.094643
        %v1013 = vadd.f32 %v981, -15.094643
        %v1014 = vadd.f32 %v982, -15.094643
        %v1015 = vadd.f32 %v983, -15.094643
        %v1016 = vadd.f32 %v984, -15.094643
        %v1017 = vadd.f32 %v985, -15.094643
        %v1018 = vadd.f32 %v986, -15.094643
        %v1019 = vadd.f32 %v987, -15.094643
        %v1020 = vadd.f32 %v988, -15.094643
        %v1021 = vadd.f32 %v989, -15.094643
        %v1022 = vadd.f32 %v990, -15.094643
        %v1023 = vadd.f32 %v991, -15.094643
        %v1024 = vadd.f32 %v992, -15.094643
        %v1025 = vadd.f32 %v993, -15.094643
        %v1026 = vadd.f32 %v994, -15.094643
        %v1027 = vadd.f32 %v995, -15.094643
        %v1028 = vadd.f32 %v996, -15.094643
        %v1029 = vadd.f32 %v997, -15.094643
        %v1030 = vadd.f32 %v998, -15.094643
        %v1031 = vadd.f32 %v999, -15.094643
        %v1032 = vadd.f32 %v1000, -15.094643
        %v1033 = vadd.f32 %v1001, -15.094643
        %v1034 = vadd.f32 %v1002, -15.094643
        %v1035 = vadd.f32 %v1003, -15.094643
        %v1036 = vadd.f32 %v1004, -15.094643
        %v1037 = vadd.f32 %v1005, -15.094643
        %v1038 = vadd.f32 %v1006, -15.094643
        %v1039 = vadd.f32 %v1007, -15.094643
        %v1040 = vadd.f32 %v1008, -15.094643
        %v1041 = vmul.f32 %v945, %v497
        %v1042 = vmul.f32 %v946, %v498
        %v1043 = vmul.f32 %v947, %v499
        %v1044 = vmul.f32 %v948, %v500
        %v1045 = vmul.f32 %v949, %v501
        %v1046 = vmul.f32 %v950, %v502
        %v1047 = vmul.f32 %v951, %v503
        %v1048 = vmul.f32 %v952, %v504
        %v1049 = vmul.f32 %v953, %v505
        %v1050 = vmul.f32 %v954, %v506
        %v1051 = vmul.f32 %v955, %v507
        %v1052 = vmul.f32 %v956, %v508
        %v1053 = vmul.f32 %v957, %v509
        %v1054 = vmul.f32 %v958, %v510
        %v1055 = vmul.f32 %v959, %v511
        %v1056 = vmul.f32 %v960, %v512
        %v1057 = vmul.f32 %v961, %v513
        %v1058 = vmul.f32 %v962, %v514
        %v1059 = vmul.f32 %v963, %v515
        %v1060 = vmul.f32 %v964, %v516
        %v1061 = vmul.f32 %v965, %v517
        %v1062 = vmul.f32 %v966, %v518
        %v1063 = vmul.f32 %v967, %v519
        %v1064 = vmul.f32 %v968, %v520
        %v1065 = vmul.f32 %v969, %v521
        %v1066 = vmul.f32 %v970, %v522
        %v1067 = vmul.f32 %v971, %v523
        %v1068 = vmul.f32 %v972, %v524
        %v1069 = vmul.f32 %v973, %v525
        %v1070 = vmul.f32 %v974, %v526
        %v1071 = vmul.f32 %v975, %v527
        %v1072 = vmul.f32 %v976, %v528
        %v1073 = vadd.f32 %v1041, 60.24464
        %v1074 = vadd.f32 %v1042, 60.24464
        %v1075 = vadd.f32 %v1043, 60.24464
        %v1076 = vadd.f32 %v1044, 60.24464
        %v1077 = vadd.f32 %v1045, 60.24464
        %v1078 = vadd.f32 %v1046, 60.24464
        %v1079 = vadd.f32 %v1047, 60.24464
        %v1080 = vadd.f32 %v1048, 60.24464
        %v1081 = vadd.f32 %v1049, 60.24464
        %v1082 = vadd.f32 %v1050, 60.24464
        %v1083 = vadd.f32 %v1051, 60.24464
        %v1084 = vadd.f32 %v1052, 60.24464
        %v1085 = vadd.f32 %v1053, 60.24464
        %v1086 = vadd.f32 %v1054, 60.24464
        %v1087 = vadd.f32 %v1055, 60.24464
        %v1088 = vadd.f32 %v1056, 60.24464
        %v1089 = vadd.f32 %v1057, 60.24464
        %v1090 = vadd.f32 %v1058, 60.24464
        %v1091 = vadd.f32 %v1059, 60.24464
        %v1092 = vadd.f32 %v1060, 60.24464
        %v1093 = vadd.f32 %v1061, 60.24464
        %v1094 = vadd.f32 %v1062, 60.24464
        %v1095 = vadd.f32 %v1063, 60.24464
        %v1096 = vadd.f32 %v1064, 60.24464
        %v1097 = vadd.f32 %v1065, 60.24464
        %v1098 = vadd.f32 %v1066, 60.24464
        %v1099 = vadd.f32 %v1067, 60.24464
        %v1100 = vadd.f32 %v1068, 60.24464
        %v1101 = vadd.f32 %v1069, 60.24464
        %v1102 = vadd.f32 %v1070, 60.24464
        %v1103 = vadd.f32 %v1071, 60.24464
        %v1104 = vadd.f32 %v1072, 60.24464
        %v1105 = vmul.f32 %v1009, %v497
        %v1106 = vmul.f32 %v1010, %v498
        %v1107 = vmul.f32 %v1011, %v499
        %v1108 = vmul.f32 %v1012, %v500
        %v1109 = vmul.f32 %v1013, %v501
        %v1110 = vmul.f32 %v1014, %v502
        %v1111 = vmul.f32 %v1015, %v503
        %v1112 = vmul.f32 %v1016, %v504
        %v1113 = vmul.f32 %v1017, %v505
        %v1114 = vmul.f32 %v1018, %v506
        %v1115 = vmul.f32 %v1019, %v507
        %v1116 = vmul.f32 %v1020, %v508
        %v1117 = vmul.f32 %v1021, %v509
        %v1118 = vmul.f32 %v1022, %v510
        %v1119 = vmul.f32 %v1023, %v511
        %v1120 = vmul.f32 %v1024, %v512
        %v1121 = vmul.f32 %v1025, %v513
        %v1122 = vmul.f32 %v1026, %v514
        %v1123 = vmul.f32 %v1027, %v515
        %v1124 = vmul.f32 %v1028, %v516
        %v1125 = vmul.f32 %v1029, %v517
        %v1126 = vmul.f32 %v1030, %v518
        %v1127 = vmul.f32 %v1031, %v519
        %v1128 = vmul.f32 %v1032, %v520
        %v1129 = vmul.f32 %v1033, %v521
        %v1130 = vmul.f32 %v1034, %v522
        %v1131 = vmul.f32 %v1035, %v523
        %v1132 = vmul.f32 %v1036, %v524
        %v1133 = vmul.f32 %v1037, %v525
        %v1134 = vmul.f32 %v1038, %v526
        %v1135 = vmul.f32 %v1039, %v527
        %v1136 = vmul.f32 %v1040, %v528
        %v1137 = vadd.f32 %v1105, 42.058693
        %v1138 = vadd.f32 %v1106, 42.058693
        %v1139 = vadd.f32 %v1107, 42.058693
        %v1140 = vadd.f32 %v1108, 42.058693
        %v1141 = vadd.f32 %v1109, 42.058693
        %v1142 = vadd.f32 %v1110, 42.058693
        %v1143 = vadd.f32 %v1111, 42.058693
        %v1144 = vadd.f32 %v1112, 42.058693
        %v1145 = vadd.f32 %v1113, 42.058693
        %v1146 = vadd.f32 %v1114, 42.058693
        %v1147 = vadd.f32 %v1115, 42.058693
        %v1148 = vadd.f32 %v1116, 42.058693
        %v1149 = vadd.f32 %v1117, 42.058693
        %v1150 = vadd.f32 %v1118, 42.058693
        %v1151 = vadd.f32 %v1119, 42.058693
        %v1152 = vadd.f32 %v1120, 42.058693
        %v1153 = vadd.f32 %v1121, 42.058693
        %v1154 = vadd.f32 %v1122, 42.058693
        %v1155 = vadd.f32 %v1123, 42.058693
        %v1156 = vadd.f32 %v1124, 42.058693
        %v1157 = vadd.f32 %v1125, 42.058693
        %v1158 = vadd.f32 %v1126, 42.058693
        %v1159 = vadd.f32 %v1127, 42.058693
        %v1160 = vadd.f32 %v1128, 42.058693
        %v1161 = vadd.f32 %v1129, 42.058693
        %v1162 = vadd.f32 %v1130, 42.058693
        %v1163 = vadd.f32 %v1131, 42.058693
        %v1164 = vadd.f32 %v1132, 42.058693
        %v1165 = vadd.f32 %v1133, 42.058693
        %v1166 = vadd.f32 %v1134, 42.058693
        %v1167 = vadd.f32 %v1135, 42.058693
        %v1168 = vadd.f32 %v1136, 42.058693
        %v1169 = vmul.f32 %v1073, %v497
        %v1170 = vmul.f32 %v1074, %v498
        %v1171 = vmul.f32 %v1075, %v499
        %v1172 = vmul.f32 %v1076, %v500
        %v1173 = vmul.f32 %v1077, %v501
        %v1174 = vmul.f32 %v1078, %v502
        %v1175 = vmul.f32 %v1079, %v503
        %v1176 = vmul.f32 %v1080, %v504
        %v1177 = vmul.f32 %v1081, %v505
        %v1178 = vmul.f32 %v1082, %v506
        %v1179 = vmul.f32 %v1083, %v507
        %v1180 = vmul.f32 %v1084, %v508
        %v1181 = vmul.f32 %v1085, %v509
        %v1182 = vmul.f32 %v1086, %v510
        %v1183 = vmul.f32 %v1087, %v511
        %v1184 = vmul.f32 %v1088, %v512
        %v1185 = vmul.f32 %v1089, %v513
        %v1186 = vmul.f32 %v1090, %v514
        %v1187 = vmul.f32 %v1091, %v515
        %v1188 = vmul.f32 %v1092, %v516
        %v1189 = vmul.f32 %v1093, %v517
        %v1190 = vmul.f32 %v1094, %v518
        %v1191 = vmul.f32 %v1095, %v519
        %v1192 = vmul.f32 %v1096, %v520
        %v1193 = vmul.f32 %v1097, %v521
        %v1194 = vmul.f32 %v1098, %v522
        %v1195 = vmul.f32 %v1099, %v523
        %v1196 = vmul.f32 %v1100, %v524
        %v1197 = vmul.f32 %v1101, %v525
        %v1198 = vmul.f32 %v1102, %v526
        %v1199 = vmul.f32 %v1103, %v527
        %v1200 = vmul.f32 %v1104, %v528
        %v1201 = vadd.f32 %v1169, -85.45682
        %v1202 = vadd.f32 %v1170, -85.45682
        %v1203 = vadd.f32 %v1171, -85.45682
        %v1204 = vadd.f32 %v1172, -85.45682
        %v1205 = vadd.f32 %v1173, -85.45682
        %v1206 = vadd.f32 %v1174, -85.45682
        %v1207 = vadd.f32 %v1175, -85.45682
        %v1208 = vadd.f32 %v1176, -85.45682
        %v1209 = vadd.f32 %v1177, -85.45682
        %v1210 = vadd.f32 %v1178, -85.45682
        %v1211 = vadd.f32 %v1179, -85.45682
        %v1212 = vadd.f32 %v1180, -85.45682
        %v1213 = vadd.f32 %v1181, -85.45682
        %v1214 = vadd.f32 %v1182, -85.45682
        %v1215 = vadd.f32 %v1183, -85.45682
        %v1216 = vadd.f32 %v1184, -85.45682
        %v1217 = vadd.f32 %v1185, -85.45682
        %v1218 = vadd.f32 %v1186, -85.45682
        %v1219 = vadd.f32 %v1187, -85.45682
        %v1220 = vadd.f32 %v1188, -85.45682
        %v1221 = vadd.f32 %v1189, -85.45682
        %v1222 = vadd.f32 %v1190, -85.45682
        %v1223 = vadd.f32 %v1191, -85.45682
        %v1224 = vadd.f32 %v1192, -85.45682
        %v1225 = vadd.f32 %v1193, -85.45682
        %v1226 = vadd.f32 %v1194, -85.45682
        %v1227 = vadd.f32 %v1195, -85.45682
        %v1228 = vadd.f32 %v1196, -85.45682
        %v1229 = vadd.f32 %v1197, -85.45682
        %v1230 = vadd.f32 %v1198, -85.45682
        %v1231 = vadd.f32 %v1199, -85.45682
        %v1232 = vadd.f32 %v1200, -85.45682
        %v1233 = vmul.f32 %v1137, %v497
        %v1234 = vmul.f32 %v1138, %v498
        %v1235 = vmul.f32 %v1139, %v499
        %v1236 = vmul.f32 %v1140, %v500
        %v1237 = vmul.f32 %v1141, %v501
        %v1238 = vmul.f32 %v1142, %v502
        %v1239 = vmul.f32 %v1143, %v503
        %v1240 = vmul.f32 %v1144, %v504
        %v1241 = vmul.f32 %v1145, %v505
        %v1242 = vmul.f32 %v1146, %v506
        %v1243 = vmul.f32 %v1147, %v507
        %v1244 = vmul.f32 %v1148, %v508
        %v1245 = vmul.f32 %v1149, %v509
        %v1246 = vmul.f32 %v1150, %v510
        %v1247 = vmul.f32 %v1151, %v511
        %v1248 = vmul.f32 %v1152, %v512
        %v1249 = vmul.f32 %v1153, %v513
        %v1250 = vmul.f32 %v1154, %v514
        %v1251 = vmul.f32 %v1155, %v515
        %v1252 = vmul.f32 %v1156, %v516
        %v1253 = vmul.f32 %v1157, %v517
        %v1254 = vmul.f32 %v1158, %v518
        %v1255 = vmul.f32 %v1159, %v519
        %v1256 = vmul.f32 %v1160, %v520
        %v1257 = vmul.f32 %v1161, %v521
        %v1258 = vmul.f32 %v1162, %v522
        %v1259 = vmul.f32 %v1163, %v523
        %v1260 = vmul.f32 %v1164, %v524
        %v1261 = vmul.f32 %v1165, %v525
        %v1262 = vmul.f32 %v1166, %v526
        %v1263 = vmul.f32 %v1167, %v527
        %v1264 = vmul.f32 %v1168, %v528
        %v1265 = vadd.f32 %v1233, -76.70586
        %v1266 = vadd.f32 %v1234, -76.70586
        %v1267 = vadd.f32 %v1235, -76.70586
        %v1268 = vadd.f32 %v1236, -76.70586
        %v1269 = vadd.f32 %v1237, -76.70586
        %v1270 = vadd.f32 %v1238, -76.70586
        %v1271 = vadd.f32 %v1239, -76.70586
        %v1272 = vadd.f32 %v1240, -76.70586
        %v1273 = vadd.f32 %v1241, -76.70586
        %v1274 = vadd.f32 %v1242, -76.70586
        %v1275 = vadd.f32 %v1243, -76.70586
        %v1276 = vadd.f32 %v1244, -76.70586
        %v1277 = vadd.f32 %v1245, -76.70586
        %v1278 = vadd.f32 %v1246, -76.70586
        %v1279 = vadd.f32 %v1247, -76.70586
        %v1280 = vadd.f32 %v1248, -76.70586
        %v1281 = vadd.f32 %v1249, -76.70586
        %v1282 = vadd.f32 %v1250, -76.70586
        %v1283 = vadd.f32 %v1251, -76.70586
        %v1284 = vadd.f32 %v1252, -76.70586
        %v1285 = vadd.f32 %v1253, -76.70586
        %v1286 = vadd.f32 %v1254, -76.70586
        %v1287 = vadd.f32 %v1255, -76.70586
        %v1288 = vadd.f32 %v1256, -76.70586
        %v1289 = vadd.f32 %v1257, -76.70586
        %v1290 = vadd.f32 %v1258, -76.70586
        %v1291 = vadd.f32 %v1259, -76.70586
        %v1292 = vadd.f32 %v1260, -76.70586
        %v1293 = vadd.f32 %v1261, -76.70586
        %v1294 = vadd.f32 %v1262, -76.70586
        %v1295 = vadd.f32 %v1263, -76.70586
        %v1296 = vadd.f32 %v1264, -76.70586
        %v1297 = vmul.f32 %v1201, %v497
        %v1298 = vmul.f32 %v1202, %v498
        %v1299 = vmul.f32 %v1203, %v499
        %v1300 = vmul.f32 %v1204, %v500
        %v1301 = vmul.f32 %v1205, %v501
        %v1302 = vmul.f32 %v1206, %v502
        %v1303 = vmul.f32 %v1207, %v503
        %v1304 = vmul.f32 %v1208, %v504
        %v1305 = vmul.f32 %v1209, %v505
        %v1306 = vmul.f32 %v1210, %v506
        %v1307 = vmul.f32 %v1211, %v507
        %v1308 = vmul.f32 %v1212, %v508
        %v1309 = vmul.f32 %v1213, %v509
        %v1310 = vmul.f32 %v1214, %v510
        %v1311 = vmul.f32 %v1215, %v511
        %v1312 = vmul.f32 %v1216, %v512
        %v1313 = vmul.f32 %v1217, %v513
        %v1314 = vmul.f32 %v1218, %v514
        %v1315 = vmul.f32 %v1219, %v515
        %v1316 = vmul.f32 %v1220, %v516
        %v1317 = vmul.f32 %v1221, %v517
        %v1318 = vmul.f32 %v1222, %v518
        %v1319 = vmul.f32 %v1223, %v519
        %v1320 = vmul.f32 %v1224, %v520
        %v1321 = vmul.f32 %v1225, %v521
        %v1322 = vmul.f32 %v1226, %v522
        %v1323 = vmul.f32 %v1227, %v523
        %v1324 = vmul.f32 %v1228, %v524
        %v1325 = vmul.f32 %v1229, %v525
        %v1326 = vmul.f32 %v1230, %v526
        %v1327 = vmul.f32 %v1231, %v527
        %v1328 = vmul.f32 %v1232, %v528
        %v1329 = vadd.f32 %v1297, 64.93939
        %v1330 = vadd.f32 %v1298, 64.93939
        %v1331 = vadd.f32 %v1299, 64.93939
        %v1332 = vadd.f32 %v1300, 64.93939
        %v1333 = vadd.f32 %v1301, 64.93939
        %v1334 = vadd.f32 %v1302, 64.93939
        %v1335 = vadd.f32 %v1303, 64.93939
        %v1336 = vadd.f32 %v1304, 64.93939
        %v1337 = vadd.f32 %v1305, 64.93939
        %v1338 = vadd.f32 %v1306, 64.93939
        %v1339 = vadd.f32 %v1307, 64.93939
        %v1340 = vadd.f32 %v1308, 64.93939
        %v1341 = vadd.f32 %v1309, 64.93939
        %v1342 = vadd.f32 %v1310, 64.93939
        %v1343 = vadd.f32 %v1311, 64.93939
        %v1344 = vadd.f32 %v1312, 64.93939
        %v1345 = vadd.f32 %v1313, 64.93939
        %v1346 = vadd.f32 %v1314, 64.93939
        %v1347 = vadd.f32 %v1315, 64.93939
        %v1348 = vadd.f32 %v1316, 64.93939
        %v1349 = vadd.f32 %v1317, 64.93939
        %v1350 = vadd.f32 %v1318, 64.93939
        %v1351 = vadd.f32 %v1319, 64.93939
        %v1352 = vadd.f32 %v1320, 64.93939
        %v1353 = vadd.f32 %v1321, 64.93939
        %v1354 = vadd.f32 %v1322, 64.93939
        %v1355 = vadd.f32 %v1323, 64.93939
        %v1356 = vadd.f32 %v1324, 64.93939
        %v1357 = vadd.f32 %v1325, 64.93939
        %v1358 = vadd.f32 %v1326, 64.93939
        %v1359 = vadd.f32 %v1327, 64.93939
        %v1360 = vadd.f32 %v1328, 64.93939
        %v1361 = vmul.f32 %v1265, %v497
        %v1362 = vmul.f32 %v1266, %v498
        %v1363 = vmul.f32 %v1267, %v499
        %v1364 = vmul.f32 %v1268, %v500
        %v1365 = vmul.f32 %v1269, %v501
        %v1366 = vmul.f32 %v1270, %v502
        %v1367 = vmul.f32 %v1271, %v503
        %v1368 = vmul.f32 %v1272, %v504
        %v1369 = vmul.f32 %v1273, %v505
        %v1370 = vmul.f32 %v1274, %v506
        %v1371 = vmul.f32 %v1275, %v507
        %v1372 = vmul.f32 %v1276, %v508
        %v1373 = vmul.f32 %v1277, %v509
        %v1374 = vmul.f32 %v1278, %v510
        %v1375 = vmul.f32 %v1279, %v511
        %v1376 = vmul.f32 %v1280, %v512
        %v1377 = vmul.f32 %v1281, %v513
        %v1378 = vmul.f32 %v1282, %v514
        %v1379 = vmul.f32 %v1283, %v515
        %v1380 = vmul.f32 %v1284, %v516
        %v1381 = vmul.f32 %v1285, %v517
        %v1382 = vmul.f32 %v1286, %v518
        %v1383 = vmul.f32 %v1287, %v519
        %v1384 = vmul.f32 %v1288, %v520
        %v1385 = vmul.f32 %v1289, %v521
        %v1386 = vmul.f32 %v1290, %v522
        %v1387 = vmul.f32 %v1291, %v523
        %v1388 = vmul.f32 %v1292, %v524
        %v1389 = vmul.f32 %v1293, %v525
        %v1390 = vmul.f32 %v1294, %v526
        %v1391 = vmul.f32 %v1295, %v527
        %v1392 = vmul.f32 %v1296, %v528
        %v1393 = vadd.f32 %v1361, 81.60525
        %v1394 = vadd.f32 %v1362, 81.60525
        %v1395 = vadd.f32 %v1363, 81.60525
        %v1396 = vadd.f32 %v1364, 81.60525
        %v1397 = vadd.f32 %v1365, 81.60525
        %v1398 = vadd.f32 %v1366, 81.60525
        %v1399 = vadd.f32 %v1367, 81.60525
        %v1400 = vadd.f32 %v1368, 81.60525
        %v1401 = vadd.f32 %v1369, 81.60525
        %v1402 = vadd.f32 %v1370, 81.60525
        %v1403 = vadd.f32 %v1371, 81.60525
        %v1404 = vadd.f32 %v1372, 81.60525
        %v1405 = vadd.f32 %v1373, 81.60525
        %v1406 = vadd.f32 %v1374, 81.60525
        %v1407 = vadd.f32 %v1375, 81.60525
        %v1408 = vadd.f32 %v1376, 81.60525
        %v1409 = vadd.f32 %v1377, 81.60525
        %v1410 = vadd.f32 %v1378, 81.60525
        %v1411 = vadd.f32 %v1379, 81.60525
        %v1412 = vadd.f32 %v1380, 81.60525
        %v1413 = vadd.f32 %v1381, 81.60525
        %v1414 = vadd.f32 %v1382, 81.60525
        %v1415 = vadd.f32 %v1383, 81.60525
        %v1416 = vadd.f32 %v1384, 81.60525
        %v1417 = vadd.f32 %v1385, 81.60525
        %v1418 = vadd.f32 %v1386, 81.60525
        %v1419 = vadd.f32 %v1387, 81.60525
        %v1420 = vadd.f32 %v1388, 81.60525
        %v1421 = vadd.f32 %v1389, 81.60525
        %v1422 = vadd.f32 %v1390, 81.60525
        %v1423 = vadd.f32 %v1391, 81.60525
        %v1424 = vadd.f32 %v1392, 81.60525
        %v1425 = vmul.f32 %v1329, %v497
        %v1426 = vmul.f32 %v1330, %v498
        %v1427 = vmul.f32 %v1331, %v499
        %v1428 = vmul.f32 %v1332, %v500
        %v1429 = vmul.f32 %v1333, %v501
        %v1430 = vmul.f32 %v1334, %v502
        %v1431 = vmul.f32 %v1335, %v503
        %v1432 = vmul.f32 %v1336, %v504
        %v1433 = vmul.f32 %v1337, %v505
        %v1434 = vmul.f32 %v1338, %v506
        %v1435 = vmul.f32 %v1339, %v507
        %v1436 = vmul.f32 %v1340, %v508
        %v1437 = vmul.f32 %v1341, %v509
        %v1438 = vmul.f32 %v1342, %v510
        %v1439 = vmul.f32 %v1343, %v511
        %v1440 = vmul.f32 %v1344, %v512
        %v1441 = vmul.f32 %v1345, %v513
        %v1442 = vmul.f32 %v1346, %v514
        %v1443 = vmul.f32 %v1347, %v515
        %v1444 = vmul.f32 %v1348, %v516
        %v1445 = vmul.f32 %v1349, %v517
        %v1446 = vmul.f32 %v1350, %v518
        %v1447 = vmul.f32 %v1351, %v519
        %v1448 = vmul.f32 %v1352, %v520
        %v1449 = vmul.f32 %v1353, %v521
        %v1450 = vmul.f32 %v1354, %v522
        %v1451 = vmul.f32 %v1355, %v523
        %v1452 = vmul.f32 %v1356, %v524
        %v1453 = vmul.f32 %v1357, %v525
        %v1454 = vmul.f32 %v1358, %v526
        %v1455 = vmul.f32 %v1359, %v527
        %v1456 = vmul.f32 %v1360, %v528
        %v1457 = vadd.f32 %v1425, -19.739208
        %v1458 = vadd.f32 %v1426, -19.739208
        %v1459 = vadd.f32 %v1427, -19.739208
        %v1460 = vadd.f32 %v1428, -19.739208
        %v1461 = vadd.f32 %v1429, -19.739208
        %v1462 = vadd.f32 %v1430, -19.739208
        %v1463 = vadd.f32 %v1431, -19.739208
        %v1464 = vadd.f32 %v1432, -19.739208
        %v1465 = vadd.f32 %v1433, -19.739208
        %v1466 = vadd.f32 %v1434, -19.739208
        %v1467 = vadd.f32 %v1435, -19.739208
        %v1468 = vadd.f32 %v1436, -19.739208
        %v1469 = vadd.f32 %v1437, -19.739208
        %v1470 = vadd.f32 %v1438, -19.739208
        %v1471 = vadd.f32 %v1439, -19.739208
        %v1472 = vadd.f32 %v1440, -19.739208
        %v1473 = vadd.f32 %v1441, -19.739208
        %v1474 = vadd.f32 %v1442, -19.739208
        %v1475 = vadd.f32 %v1443, -19.739208
        %v1476 = vadd.f32 %v1444, -19.739208
        %v1477 = vadd.f32 %v1445, -19.739208
        %v1478 = vadd.f32 %v1446, -19.739208
        %v1479 = vadd.f32 %v1447, -19.739208
        %v1480 = vadd.f32 %v1448, -19.739208
        %v1481 = vadd.f32 %v1449, -19.739208
        %v1482 = vadd.f32 %v1450, -19.739208
        %v1483 = vadd.f32 %v1451, -19.739208
        %v1484 = vadd.f32 %v1452, -19.739208
        %v1485 = vadd.f32 %v1453, -19.739208
        %v1486 = vadd.f32 %v1454, -19.739208
        %v1487 = vadd.f32 %v1455, -19.739208
        %v1488 = vadd.f32 %v1456, -19.739208
        %v1489 = vmul.f32 %v1393, %v497
        %v1490 = vmul.f32 %v1394, %v498
        %v1491 = vmul.f32 %v1395, %v499
        %v1492 = vmul.f32 %v1396, %v500
        %v1493 = vmul.f32 %v1397, %v501
        %v1494 = vmul.f32 %v1398, %v502
        %v1495 = vmul.f32 %v1399, %v503
        %v1496 = vmul.f32 %v1400, %v504
        %v1497 = vmul.f32 %v1401, %v505
        %v1498 = vmul.f32 %v1402, %v506
        %v1499 = vmul.f32 %v1403, %v507
        %v1500 = vmul.f32 %v1404, %v508
        %v1501 = vmul.f32 %v1405, %v509
        %v1502 = vmul.f32 %v1406, %v510
        %v1503 = vmul.f32 %v1407, %v511
        %v1504 = vmul.f32 %v1408, %v512
        %v1505 = vmul.f32 %v1409, %v513
        %v1506 = vmul.f32 %v1410, %v514
        %v1507 = vmul.f32 %v1411, %v515
        %v1508 = vmul.f32 %v1412, %v516
        %v1509 = vmul.f32 %v1413, %v517
        %v1510 = vmul.f32 %v1414, %v518
        %v1511 = vmul.f32 %v1415, %v519
        %v1512 = vmul.f32 %v1416, %v520
        %v1513 = vmul.f32 %v1417, %v521
        %v1514 = vmul.f32 %v1418, %v522
        %v1515 = vmul.f32 %v1419, %v523
        %v1516 = vmul.f32 %v1420, %v524
        %v1517 = vmul.f32 %v1421, %v525
        %v1518 = vmul.f32 %v1422, %v526
        %v1519 = vmul.f32 %v1423, %v527
        %v1520 = vmul.f32 %v1424, %v528
        %v1521 = vadd.f32 %v1489, -41.3417
        %v1522 = vadd.f32 %v1490, -41.3417
        %v1523 = vadd.f32 %v1491, -41.3417
        %v1524 = vadd.f32 %v1492, -41.3417
        %v1525 = vadd.f32 %v1493, -41.3417
        %v1526 = vadd.f32 %v1494, -41.3417
        %v1527 = vadd.f32 %v1495, -41.3417
        %v1528 = vadd.f32 %v1496, -41.3417
        %v1529 = vadd.f32 %v1497, -41.3417
        %v1530 = vadd.f32 %v1498, -41.3417
        %v1531 = vadd.f32 %v1499, -41.3417
        %v1532 = vadd.f32 %v1500, -41.3417
        %v1533 = vadd.f32 %v1501, -41.3417
        %v1534 = vadd.f32 %v1502, -41.3417
        %v1535 = vadd.f32 %v1503, -41.3417
        %v1536 = vadd.f32 %v1504, -41.3417
        %v1537 = vadd.f32 %v1505, -41.3417
        %v1538 = vadd.f32 %v1506, -41.3417
        %v1539 = vadd.f32 %v1507, -41.3417
        %v1540 = vadd.f32 %v1508, -41.3417
        %v1541 = vadd.f32 %v1509, -41.3417
        %v1542 = vadd.f32 %v1510, -41.3417
        %v1543 = vadd.f32 %v1511, -41.3417
        %v1544 = vadd.f32 %v1512, -41.3417
        %v1545 = vadd.f32 %v1513, -41.3417
        %v1546 = vadd.f32 %v1514, -41.3417
        %v1547 = vadd.f32 %v1515, -41.3417
        %v1548 = vadd.f32 %v1516, -41.3417
        %v1549 = vadd.f32 %v1517, -41.3417
        %v1550 = vadd.f32 %v1518, -41.3417
        %v1551 = vadd.f32 %v1519, -41.3417
        %v1552 = vadd.f32 %v1520, -41.3417
        %v1553 = vmul.f32 %v1457, %v497
        %v1554 = vmul.f32 %v1458, %v498
        %v1555 = vmul.f32 %v1459, %v499
        %v1556 = vmul.f32 %v1460, %v500
        %v1557 = vmul.f32 %v1461, %v501
        %v1558 = vmul.f32 %v1462, %v502
        %v1559 = vmul.f32 %v1463, %v503
        %v1560 = vmul.f32 %v1464, %v504
        %v1561 = vmul.f32 %v1465, %v505
        %v1562 = vmul.f32 %v1466, %v506
        %v1563 = vmul.f32 %v1467, %v507
        %v1564 = vmul.f32 %v1468, %v508
        %v1565 = vmul.f32 %v1469, %v509
        %v1566 = vmul.f32 %v1470, %v510
        %v1567 = vmul.f32 %v1471, %v511
        %v1568 = vmul.f32 %v1472, %v512
        %v1569 = vmul.f32 %v1473, %v513
        %v1570 = vmul.f32 %v1474, %v514
        %v1571 = vmul.f32 %v1475, %v515
        %v1572 = vmul.f32 %v1476, %v516
        %v1573 = vmul.f32 %v1477, %v517
        %v1574 = vmul.f32 %v1478, %v518
        %v1575 = vmul.f32 %v1479, %v519
        %v1576 = vmul.f32 %v1480, %v520
        %v1577 = vmul.f32 %v1481, %v521
        %v1578 = vmul.f32 %v1482, %v522
        %v1579 = vmul.f32 %v1483, %v523
        %v1580 = vmul.f32 %v1484, %v524
        %v1581 = vmul.f32 %v1485, %v525
        %v1582 = vmul.f32 %v1486, %v526
        %v1583 = vmul.f32 %v1487, %v527
        %v1584 = vmul.f32 %v1488, %v528
        %v1585 = vadd.f32 %v1553, 1.0
        %v1586 = vadd.f32 %v1554, 1.0
        %v1587 = vadd.f32 %v1555, 1.0
        %v1588 = vadd.f32 %v1556, 1.0
        %v1589 = vadd.f32 %v1557, 1.0
        %v1590 = vadd.f32 %v1558, 1.0
        %v1591 = vadd.f32 %v1559, 1.0
        %v1592 = vadd.f32 %v1560, 1.0
        %v1593 = vadd.f32 %v1561, 1.0
        %v1594 = vadd.f32 %v1562, 1.0
        %v1595 = vadd.f32 %v1563, 1.0
        %v1596 = vadd.f32 %v1564, 1.0
        %v1597 = vadd.f32 %v1565, 1.0
        %v1598 = vadd.f32 %v1566, 1.0
        %v1599 = vadd.f32 %v1567, 1.0
        %v1600 = vadd.f32 %v1568, 1.0
        %v1601 = vadd.f32 %v1569, 1.0
        %v1602 = vadd.f32 %v1570, 1.0
        %v1603 = vadd.f32 %v1571, 1.0
        %v1604 = vadd.f32 %v1572, 1.0
        %v1605 = vadd.f32 %v1573, 1.0
        %v1606 = vadd.f32 %v1574, 1.0
        %v1607 = vadd.f32 %v1575, 1.0
        %v1608 = vadd.f32 %v1576, 1.0
        %v1609 = vadd.f32 %v1577, 1.0
        %v1610 = vadd.f32 %v1578, 1.0
        %v1611 = vadd.f32 %v1579, 1.0
        %v1612 = vadd.f32 %v1580, 1.0
        %v1613 = vadd.f32 %v1581, 1.0
        %v1614 = vadd.f32 %v1582, 1.0
        %v1615 = vadd.f32 %v1583, 1.0
        %v1616 = vadd.f32 %v1584, 1.0
        %v1617 = vmul.f32 %v1521, %v497
        %v1618 = vmul.f32 %v1522, %v498
        %v1619 = vmul.f32 %v1523, %v499
        %v1620 = vmul.f32 %v1524, %v500
        %v1621 = vmul.f32 %v1525, %v501
        %v1622 = vmul.f32 %v1526, %v502
        %v1623 = vmul.f32 %v1527, %v503
        %v1624 = vmul.f32 %v1528, %v504
        %v1625 = vmul.f32 %v1529, %v505
        %v1626 = vmul.f32 %v1530, %v506
        %v1627 = vmul.f32 %v1531, %v507
        %v1628 = vmul.f32 %v1532, %v508
        %v1629 = vmul.f32 %v1533, %v509
        %v1630 = vmul.f32 %v1534, %v510
        %v1631 = vmul.f32 %v1535, %v511
        %v1632 = vmul.f32 %v1536, %v512
        %v1633 = vmul.f32 %v1537, %v513
        %v1634 = vmul.f32 %v1538, %v514
        %v1635 = vmul.f32 %v1539, %v515
        %v1636 = vmul.f32 %v1540, %v516
        %v1637 = vmul.f32 %v1541, %v517
        %v1638 = vmul.f32 %v1542, %v518
        %v1639 = vmul.f32 %v1543, %v519
        %v1640 = vmul.f32 %v1544, %v520
        %v1641 = vmul.f32 %v1545, %v521
        %v1642 = vmul.f32 %v1546, %v522
        %v1643 = vmul.f32 %v1547, %v523
        %v1644 = vmul.f32 %v1548, %v524
        %v1645 = vmul.f32 %v1549, %v525
        %v1646 = vmul.f32 %v1550, %v526
        %v1647 = vmul.f32 %v1551, %v527
        %v1648 = vmul.f32 %v1552, %v528
        %v1649 = vadd.f32 %v1617, 6.2831855
        %v1650 = vadd.f32 %v1618, 6.2831855
        %v1651 = vadd.f32 %v1619, 6.2831855
        %v1652 = vadd.f32 %v1620, 6.2831855
        %v1653 = vadd.f32 %v1621, 6.2831855
        %v1654 = vadd.f32 %v1622, 6.2831855
        %v1655 = vadd.f32 %v1623, 6.2831855
        %v1656 = vadd.f32 %v1624, 6.2831855
        %v1657 = vadd.f32 %v1625, 6.2831855
        %v1658 = vadd.f32 %v1626, 6.2831855
        %v1659 = vadd.f32 %v1627, 6.2831855
        %v1660 = vadd.f32 %v1628, 6.2831855
        %v1661 = vadd.f32 %v1629, 6.2831855
        %v1662 = vadd.f32 %v1630, 6.2831855
        %v1663 = vadd.f32 %v1631, 6.2831855
        %v1664 = vadd.f32 %v1632, 6.2831855
        %v1665 = vadd.f32 %v1633, 6.2831855
        %v1666 = vadd.f32 %v1634, 6.2831855
        %v1667 = vadd.f32 %v1635, 6.2831855
        %v1668 = vadd.f32 %v1636, 6.2831855
        %v1669 = vadd.f32 %v1637, 6.2831855
        %v1670 = vadd.f32 %v1638, 6.2831855
        %v1671 = vadd.f32 %v1639, 6.2831855
        %v1672 = vadd.f32 %v1640, 6.2831855
        %v1673 = vadd.f32 %v1641, 6.2831855
        %v1674 = vadd.f32 %v1642, 6.2831855
        %v1675 = vadd.f32 %v1643, 6.2831855
        %v1676 = vadd.f32 %v1644, 6.2831855
        %v1677 = vadd.f32 %v1645, 6.2831855
        %v1678 = vadd.f32 %v1646, 6.2831855
        %v1679 = vadd.f32 %v1647, 6.2831855
        %v1680 = vadd.f32 %v1648, 6.2831855
        %v1681 = vmul.f32 %v1649, %v465
        %v1682 = vmul.f32 %v1650, %v466
        %v1683 = vmul.f32 %v1651, %v467
        %v1684 = vmul.f32 %v1652, %v468
        %v1685 = vmul.f32 %v1653, %v469
        %v1686 = vmul.f32 %v1654, %v470
        %v1687 = vmul.f32 %v1655, %v471
        %v1688 = vmul.f32 %v1656, %v472
        %v1689 = vmul.f32 %v1657, %v473
        %v1690 = vmul.f32 %v1658, %v474
        %v1691 = vmul.f32 %v1659, %v475
        %v1692 = vmul.f32 %v1660, %v476
        %v1693 = vmul.f32 %v1661, %v477
        %v1694 = vmul.f32 %v1662, %v478
        %v1695 = vmul.f32 %v1663, %v479
        %v1696 = vmul.f32 %v1664, %v480
        %v1697 = vmul.f32 %v1665, %v481
        %v1698 = vmul.f32 %v1666, %v482
        %v1699 = vmul.f32 %v1667, %v483
        %v1700 = vmul.f32 %v1668, %v484
        %v1701 = vmul.f32 %v1669, %v485
        %v1702 = vmul.f32 %v1670, %v486
        %v1703 = vmul.f32 %v1671, %v487
        %v1704 = vmul.f32 %v1672, %v488
        %v1705 = vmul.f32 %v1673, %v489
        %v1706 = vmul.f32 %v1674, %v490
        %v1707 = vmul.f32 %v1675, %v491
        %v1708 = vmul.f32 %v1676, %v492
        %v1709 = vmul.f32 %v1677, %v493
        %v1710 = vmul.f32 %v1678, %v494
        %v1711 = vmul.f32 %v1679, %v495
        %v1712 = vmul.f32 %v1680, %v496
        %1713 = vst [vmem:[#allocation2] sm:$0xff] %v1585
        %1714 = vst [vmem:[#allocation2 + $0x8] sm:$0xff] %v1586
        %1715 = vst [vmem:[#allocation2 + $0x10] sm:$0xff] %v1587
        %1716 = vst [vmem:[#allocation2 + $0x18] sm:$0xff] %v1588
        %1717 = vst [vmem:[#allocation2 + $0x20] sm:$0xff] %v1589
        %1718 = vst [vmem:[#allocation2 + $0x28] sm:$0xff] %v1590
        %1719 = vst [vmem:[#allocation2 + $0x30] sm:$0xff] %v1591
        %1720 = vst [vmem:[#allocation2 + $0x38] sm:$0xff] %v1592
        %1721 = vst [vmem:[#allocation2 + $0x40] sm:$0xff] %v1593
        %1722 = vst [vmem:[#allocation2 + $0x48] sm:$0xff] %v1594
        %1723 = vst [vmem:[#allocation2 + $0x50] sm:$0xff] %v1595
        %1724 = vst [vmem:[#allocation2 + $0x58] sm:$0xff] %v1596
        %1725 = vst [vmem:[#allocation2 + $0x60] sm:$0xff] %v1597
        %1726 = vst [vmem:[#allocation2 + $0x68] sm:$0xff] %v1598
        %1727 = vst [vmem:[#allocation2 + $0x70] sm:$0xff] %v1599
        %1728 = vst [vmem:[#allocation2 + $0x78] sm:$0xff] %v1600
        %1729 = vst [vmem:[#allocation2 + $0x80] sm:$0xff] %v1601
        %1730 = vst [vmem:[#allocation2 + $0x88] sm:$0xff] %v1602
        %1731 = vst [vmem:[#allocation2 + $0x90] sm:$0xff] %v1603
        %1732 = vst [vmem:[#allocation2 + $0x98] sm:$0xff] %v1604
        %1733 = vst [vmem:[#allocation2 + $0xa0] sm:$0xff] %v1605
        %1734 = vst [vmem:[#allocation2 + $0xa8] sm:$0xff] %v1606
        %1735 = vst [vmem:[#allocation2 + $0xb0] sm:$0xff] %v1607
        %1736 = vst [vmem:[#allocation2 + $0xb8] sm:$0xff] %v1608
        %1737 = vst [vmem:[#allocation2 + $0xc0] sm:$0xff] %v1609
        %1738 = vst [vmem:[#allocation2 + $0xc8] sm:$0xff] %v1610
        %1739 = vst [vmem:[#allocation2 + $0xd0] sm:$0xff] %v1611
        %1740 = vst [vmem:[#allocation2 + $0xd8] sm:$0xff] %v1612
        %1741 = vst [vmem:[#allocation2 + $0xe0] sm:$0xff] %v1613
        %1742 = vst [vmem:[#allocation2 + $0xe8] sm:$0xff] %v1614
        %1743 = vst [vmem:[#allocation2 + $0xf0] sm:$0xff] %v1615
        %1744 = vst [vmem:[#allocation2 + $0xf8] sm:$0xff] %v1616
        %1745 = vst [vmem:[#allocation2 + $0x100] sm:$0xff] %v1681
        %1746 = vst [vmem:[#allocation2 + $0x108] sm:$0xff] %v1682
        %1747 = vst [vmem:[#allocation2 + $0x110] sm:$0xff] %v1683
        %1748 = vst [vmem:[#allocation2 + $0x118] sm:$0xff] %v1684
        %1749 = vst [vmem:[#allocation2 + $0x120] sm:$0xff] %v1685
        %1750 = vst [vmem:[#allocation2 + $0x128] sm:$0xff] %v1686
        %1751 = vst [vmem:[#allocation2 + $0x130] sm:$0xff] %v1687
        %1752 = vst [vmem:[#allocation2 + $0x138] sm:$0xff] %v1688
        %1753 = vst [vmem:[#allocation2 + $0x140] sm:$0xff] %v1689
        %1754 = vst [vmem:[#allocation2 + $0x148] sm:$0xff] %v1690
        %1755 = vst [vmem:[#allocation2 + $0x150] sm:$0xff] %v1691
        %1756 = vst [vmem:[#allocation2 + $0x158] sm:$0xff] %v1692
        %1757 = vst [vmem:[#allocation2 + $0x160] sm:$0xff] %v1693
        %1758 = vst [vmem:[#allocation2 + $0x168] sm:$0xff] %v1694
        %1759 = vst [vmem:[#allocation2 + $0x170] sm:$0xff] %v1695
        %1760 = vst [vmem:[#allocation2 + $0x178] sm:$0xff] %v1696
        %1761 = vst [vmem:[#allocation2 + $0x180] sm:$0xff] %v1697
        %1762 = vst [vmem:[#allocation2 + $0x188] sm:$0xff] %v1698
        %1763 = vst [vmem:[#allocation2 + $0x190] sm:$0xff] %v1699
        %1764 = vst [vmem:[#allocation2 + $0x198] sm:$0xff] %v1700
        %1765 = vst [vmem:[#allocation2 + $0x1a0] sm:$0xff] %v1701
        %1766 = vst [vmem:[#allocation2 + $0x1a8] sm:$0xff] %v1702
        %1767 = vst [vmem:[#allocation2 + $0x1b0] sm:$0xff] %v1703
        %1768 = vst [vmem:[#allocation2 + $0x1b8] sm:$0xff] %v1704
        %1769 = vst [vmem:[#allocation2 + $0x1c0] sm:$0xff] %v1705
        %1770 = vst [vmem:[#allocation2 + $0x1c8] sm:$0xff] %v1706
        %1771 = vst [vmem:[#allocation2 + $0x1d0] sm:$0xff] %v1707
        %1772 = vst [vmem:[#allocation2 + $0x1d8] sm:$0xff] %v1708
        %1773 = vst [vmem:[#allocation2 + $0x1e0] sm:$0xff] %v1709
        %1774 = vst [vmem:[#allocation2 + $0x1e8] sm:$0xff] %v1710
        %1775 = vst [vmem:[#allocation2 + $0x1f0] sm:$0xff] %v1711
        %1776 = vst [vmem:[#allocation2 + $0x1f8] sm:$0xff] %v1712
        %v1777 = vld [vmem:[#allocation6 + $0x10] sm:$0xff]
        %v1778 = vld [vmem:[#allocation6 + $0x18] sm:$0xff]
        %v1779 = vld [vmem:[#allocation6 + $0x20] sm:$0xff]
        %v1780 = vld [vmem:[#allocation6 + $0x28] sm:$0xff]
        %v1781 = vld [vmem:[#allocation6 + $0x30] sm:$0xff]
        %v1782 = vld [vmem:[#allocation6 + $0x38] sm:$0xff]
        %v1783 = vld [vmem:[#allocation6 + $0x40] sm:$0xff]
        %v1784 = vld [vmem:[#allocation6 + $0x48] sm:$0xff]
        %v1785 = vld [vmem:[#allocation2] sm:$0xff]
        %v1786 = vld [vmem:[#allocation2 + $0x8] sm:$0xff]
        %v1787 = vld [vmem:[#allocation2 + $0x10] sm:$0xff]
        %v1788 = vld [vmem:[#allocation2 + $0x18] sm:$0xff]
        %v1789 = vld [vmem:[#allocation2 + $0x20] sm:$0xff]
        %v1790 = vld [vmem:[#allocation2 + $0x28] sm:$0xff]
        %v1791 = vld [vmem:[#allocation2 + $0x30] sm:$0xff]
        %v1792 = vld [vmem:[#allocation2 + $0x38] sm:$0xff]
        %v1793 = vld [vmem:[#allocation2 + $0x40] sm:$0xff]
        %v1794 = vld [vmem:[#allocation2 + $0x48] sm:$0xff]
        %v1795 = vld [vmem:[#allocation2 + $0x50] sm:$0xff]
        %v1796 = vld [vmem:[#allocation2 + $0x58] sm:$0xff]
        %v1797 = vld [vmem:[#allocation2 + $0x60] sm:$0xff]
        %v1798 = vld [vmem:[#allocation2 + $0x68] sm:$0xff]
        %v1799 = vld [vmem:[#allocation2 + $0x70] sm:$0xff]
        %v1800 = vld [vmem:[#allocation2 + $0x78] sm:$0xff]
        %v1801 = vld [vmem:[#allocation2 + $0x80] sm:$0xff]
        %v1802 = vld [vmem:[#allocation2 + $0x88] sm:$0xff]
        %v1803 = vld [vmem:[#allocation2 + $0x90] sm:$0xff]
        %v1804 = vld [vmem:[#allocation2 + $0x98] sm:$0xff]
        %v1805 = vld [vmem:[#allocation2 + $0xa0] sm:$0xff]
        %v1806 = vld [vmem:[#allocation2 + $0xa8] sm:$0xff]
        %v1807 = vld [vmem:[#allocation2 + $0xb0] sm:$0xff]
        %v1808 = vld [vmem:[#allocation2 + $0xb8] sm:$0xff]
        %v1809 = vld [vmem:[#allocation2 + $0xc0] sm:$0xff]
        %v1810 = vld [vmem:[#allocation2 + $0xc8] sm:$0xff]
        %v1811 = vld [vmem:[#allocation2 + $0xd0] sm:$0xff]
        %v1812 = vld [vmem:[#allocation2 + $0xd8] sm:$0xff]
        %v1813 = vld [vmem:[#allocation2 + $0xe0] sm:$0xff]
        %v1814 = vld [vmem:[#allocation2 + $0xe8] sm:$0xff]
        %v1815 = vld [vmem:[#allocation2 + $0xf0] sm:$0xff]
        %v1816 = vld [vmem:[#allocation2 + $0xf8] sm:$0xff]
        %v1817 = vld [vmem:[#allocation2 + $0x100] sm:$0xff]
        %v1818 = vld [vmem:[#allocation2 + $0x108] sm:$0xff]
        %v1819 = vld [vmem:[#allocation2 + $0x110] sm:$0xff]
        %v1820 = vld [vmem:[#allocation2 + $0x118] sm:$0xff]
        %v1821 = vld [vmem:[#allocation2 + $0x120] sm:$0xff]
        %v1822 = vld [vmem:[#allocation2 + $0x128] sm:$0xff]
        %v1823 = vld [vmem:[#allocation2 + $0x130] sm:$0xff]
        %v1824 = vld [vmem:[#allocation2 + $0x138] sm:$0xff]
        %v1825 = vld [vmem:[#allocation2 + $0x140] sm:$0xff]
        %v1826 = vld [vmem:[#allocation2 + $0x148] sm:$0xff]
        %v1827 = vld [vmem:[#allocation2 + $0x150] sm:$0xff]
        %v1828 = vld [vmem:[#allocation2 + $0x158] sm:$0xff]
        %v1829 = vld [vmem:[#allocation2 + $0x160] sm:$0xff]
        %v1830 = vld [vmem:[#allocation2 + $0x168] sm:$0xff]
        %v1831 = vld [vmem:[#allocation2 + $0x170] sm:$0xff]
        %v1832 = vld [vmem:[#allocation2 + $0x178] sm:$0xff]
        %v1833 = vld [vmem:[#allocation2 + $0x180] sm:$0xff]
        %v1834 = vld [vmem:[#allocation2 + $0x188] sm:$0xff]
        %v1835 = vld [vmem:[#allocation2 + $0x190] sm:$0xff]
        %v1836 = vld [vmem:[#allocation2 + $0x198] sm:$0xff]
        %v1837 = vld [vmem:[#allocation2 + $0x1a0] sm:$0xff]
        %v1838 = vld [vmem:[#allocation2 + $0x1a8] sm:$0xff]
        %v1839 = vld [vmem:[#allocation2 + $0x1b0] sm:$0xff]
        %v1840 = vld [vmem:[#allocation2 + $0x1b8] sm:$0xff]
        %v1841 = vld [vmem:[#allocation2 + $0x1c0] sm:$0xff]
        %v1842 = vld [vmem:[#allocation2 + $0x1c8] sm:$0xff]
        %v1843 = vld [vmem:[#allocation2 + $0x1d0] sm:$0xff]
        %v1844 = vld [vmem:[#allocation2 + $0x1d8] sm:$0xff]
        %v1845 = vld [vmem:[#allocation2 + $0x1e0] sm:$0xff]
        %v1846 = vld [vmem:[#allocation2 + $0x1e8] sm:$0xff]
        %v1847 = vld [vmem:[#allocation2 + $0x1f0] sm:$0xff]
        %v1848 = vld [vmem:[#allocation2 + $0x1f8] sm:$0xff]
        %1850 = vset.pattern.permute.xlu0 0
        %1851 = vperm.xlu0 %1850, %v1781
        %v1852 = vpop.permute.xlu0 %1851
        %1855 = vset.pattern.permute.xlu0 0
        %1856 = vperm.xlu0 %1855, %v1782
        %v1857 = vpop.permute.xlu0 %1856
        %1860 = vset.pattern.permute.xlu0 0
        %1861 = vperm.xlu0 %1860, %v1783
        %v1862 = vpop.permute.xlu0 %1861
        %1865 = vset.pattern.permute.xlu0 0
        %1866 = vperm.xlu0 %1865, %v1784
        %v1867 = vpop.permute.xlu0 %1866
        %vm1869 = vcmask 261120
        %v1871 = vsel %vm1869, %v1777, 0
        %v1874 = vsel %vm1869, %v1778, 0
        %v1877 = vsel %vm1869, %v1779, 0
        %v1880 = vsel %vm1869, %v1780, 0
        %1882 = vmatpush.msra.mxu0 0.0
        %1883 = vmatpush.msra.mxu0 0.0
        %1884 = vmatpush.msra.mxu0 0.0
        %1885 = vmatpush.msra.mxu0 0.0
        %1886 = vmatpush.msra.mxu0 0.0
        %1887 = vmatpush.msra.mxu0 0.0
        %1888 = vmatpush.msra.mxu0 0.0
        %1889 = vmatpush.msra.mxu0 0.0
        %1890 = vmatpush.msra.mxu0 0.0
        %1891 = vmatpush.msra.mxu0 0.0
        %1892 = vmatpush.msra.mxu0 0.0
        %1893 = vmatpush.msra.mxu0 0.0
        %1894 = vmatpush.msra.mxu0 %v1833
        %1895 = vmatpush.msra.mxu0 %v1817
        %1896 = vmatpush.msra.mxu0 %v1801
        %1897 = vmatpush.msra.mxu0 %v1785
        %1898 = vmatmul.f32.gmra.mxu0 %v1871
        %v1899 = vpop.f32.mrf.mxu0
        %v1900 = vadd.f32 %v1852, %v1899
        %1901 = vmatmul.f32.gmra.mxu0 %v1874
        %v1902 = vpop.f32.mrf.mxu0
        %v1903 = vadd.f32 %v1857, %v1902
        %1904 = vmatmul.f32.gmra.mxu0 %v1877
        %v1905 = vpop.f32.mrf.mxu0
        %v1906 = vadd.f32 %v1862, %v1905
        %1907 = vmatmul.f32.gmra.mxu0 %v1880
        %v1908 = vpop.f32.mrf.mxu0
        %v1909 = vadd.f32 %v1867, %v1908
        %1910 = vdwg.mxu0
        %1911 = vmatpush.msra.mxu0 0.0
        %1912 = vmatpush.msra.mxu0 0.0
        %1913 = vmatpush.msra.mxu0 0.0
        %1914 = vmatpush.msra.mxu0 0.0
        %1915 = vmatpush.msra.mxu0 0.0
        %1916 = vmatpush.msra.mxu0 0.0
        %1917 = vmatpush.msra.mxu0 0.0
        %1918 = vmatpush.msra.mxu0 0.0
        %1919 = vmatpush.msra.mxu0 0.0
        %1920 = vmatpush.msra.mxu0 0.0
        %1921 = vmatpush.msra.mxu0 0.0
        %1922 = vmatpush.msra.mxu0 0.0
        %1923 = vmatpush.msra.mxu0 %v1834
        %1924 = vmatpush.msra.mxu0 %v1818
        %1925 = vmatpush.msra.mxu0 %v1802
        %1926 = vmatpush.msra.mxu0 %v1786
        %1927 = vmatmul.f32.gmra.mxu0 %v1871
        %v1928 = vpop.f32.mrf.mxu0
        %v1929 = vadd.f32 %v1852, %v1928
        %1930 = vmatmul.f32.gmra.mxu0 %v1874
        %v1931 = vpop.f32.mrf.mxu0
        %v1932 = vadd.f32 %v1857, %v1931
        %1933 = vmatmul.f32.gmra.mxu0 %v1877
        %v1934 = vpop.f32.mrf.mxu0
        %v1935 = vadd.f32 %v1862, %v1934
        %1936 = vmatmul.f32.gmra.mxu0 %v1880
        %v1937 = vpop.f32.mrf.mxu0
        %v1938 = vadd.f32 %v1867, %v1937
        %1939 = vdwg.mxu0
        %1940 = vmatpush.msra.mxu0 0.0
        %1941 = vmatpush.msra.mxu0 0.0
        %1942 = vmatpush.msra.mxu0 0.0
        %1943 = vmatpush.msra.mxu0 0.0
        %1944 = vmatpush.msra.mxu0 0.0
        %1945 = vmatpush.msra.mxu0 0.0
        %1946 = vmatpush.msra.mxu0 0.0
        %1947 = vmatpush.msra.mxu0 0.0
        %1948 = vmatpush.msra.mxu0 0.0
        %1949 = vmatpush.msra.mxu0 0.0
        %1950 = vmatpush.msra.mxu0 0.0
        %1951 = vmatpush.msra.mxu0 0.0
        %1952 = vmatpush.msra.mxu0 %v1835
        %1953 = vmatpush.msra.mxu0 %v1819
        %1954 = vmatpush.msra.mxu0 %v1803
        %1955 = vmatpush.msra.mxu0 %v1787
        %1956 = vmatmul.f32.gmra.mxu0 %v1871
        %v1957 = vpop.f32.mrf.mxu0
        %v1958 = vadd.f32 %v1852, %v1957
        %1959 = vmatmul.f32.gmra.mxu0 %v1874
        %v1960 = vpop.f32.mrf.mxu0
        %v1961 = vadd.f32 %v1857, %v1960
        %1962 = vmatmul.f32.gmra.mxu0 %v1877
        %v1963 = vpop.f32.mrf.mxu0
        %v1964 = vadd.f32 %v1862, %v1963
        %1965 = vmatmul.f32.gmra.mxu0 %v1880
        %v1966 = vpop.f32.mrf.mxu0
        %v1967 = vadd.f32 %v1867, %v1966
        %1968 = vdwg.mxu0
        %1969 = vmatpush.msra.mxu0 0.0
        %1970 = vmatpush.msra.mxu0 0.0
        %1971 = vmatpush.msra.mxu0 0.0
        %1972 = vmatpush.msra.mxu0 0.0
        %1973 = vmatpush.msra.mxu0 0.0
        %1974 = vmatpush.msra.mxu0 0.0
        %1975 = vmatpush.msra.mxu0 0.0
        %1976 = vmatpush.msra.mxu0 0.0
        %1977 = vmatpush.msra.mxu0 0.0
        %1978 = vmatpush.msra.mxu0 0.0
        %1979 = vmatpush.msra.mxu0 0.0
        %1980 = vmatpush.msra.mxu0 0.0
        %1981 = vmatpush.msra.mxu0 %v1836
        %1982 = vmatpush.msra.mxu0 %v1820
        %1983 = vmatpush.msra.mxu0 %v1804
        %1984 = vmatpush.msra.mxu0 %v1788
        %1985 = vmatmul.f32.gmra.mxu0 %v1871
        %v1986 = vpop.f32.mrf.mxu0
        %v1987 = vadd.f32 %v1852, %v1986
        %1988 = vmatmul.f32.gmra.mxu0 %v1874
        %v1989 = vpop.f32.mrf.mxu0
        %v1990 = vadd.f32 %v1857, %v1989
        %1991 = vmatmul.f32.gmra.mxu0 %v1877
        %v1992 = vpop.f32.mrf.mxu0
        %v1993 = vadd.f32 %v1862, %v1992
        %1994 = vmatmul.f32.gmra.mxu0 %v1880
        %v1995 = vpop.f32.mrf.mxu0
        %v1996 = vadd.f32 %v1867, %v1995
        %1997 = vdwg.mxu0
        %1998 = vmatpush.msra.mxu0 0.0
        %1999 = vmatpush.msra.mxu0 0.0
        %2000 = vmatpush.msra.mxu0 0.0
        %2001 = vmatpush.msra.mxu0 0.0
        %2002 = vmatpush.msra.mxu0 0.0
        %2003 = vmatpush.msra.mxu0 0.0
        %2004 = vmatpush.msra.mxu0 0.0
        %2005 = vmatpush.msra.mxu0 0.0
        %2006 = vmatpush.msra.mxu0 0.0
        %2007 = vmatpush.msra.mxu0 0.0
        %2008 = vmatpush.msra.mxu0 0.0
        %2009 = vmatpush.msra.mxu0 0.0
        %2010 = vmatpush.msra.mxu0 %v1837
        %2011 = vmatpush.msra.mxu0 %v1821
        %2012 = vmatpush.msra.mxu0 %v1805
        %2013 = vmatpush.msra.mxu0 %v1789
        %2014 = vmatmul.f32.gmra.mxu0 %v1871
        %v2015 = vpop.f32.mrf.mxu0
        %v2016 = vadd.f32 %v1852, %v2015
        %2017 = vmatmul.f32.gmra.mxu0 %v1874
        %v2018 = vpop.f32.mrf.mxu0
        %v2019 = vadd.f32 %v1857, %v2018
        %2020 = vmatmul.f32.gmra.mxu0 %v1877
        %v2021 = vpop.f32.mrf.mxu0
        %v2022 = vadd.f32 %v1862, %v2021
        %2023 = vmatmul.f32.gmra.mxu0 %v1880
        %v2024 = vpop.f32.mrf.mxu0
        %v2025 = vadd.f32 %v1867, %v2024
        %2026 = vdwg.mxu0
        %2027 = vmatpush.msra.mxu0 0.0
        %2028 = vmatpush.msra.mxu0 0.0
        %2029 = vmatpush.msra.mxu0 0.0
        %2030 = vmatpush.msra.mxu0 0.0
        %2031 = vmatpush.msra.mxu0 0.0
        %2032 = vmatpush.msra.mxu0 0.0
        %2033 = vmatpush.msra.mxu0 0.0
        %2034 = vmatpush.msra.mxu0 0.0
        %2035 = vmatpush.msra.mxu0 0.0
        %2036 = vmatpush.msra.mxu0 0.0
        %2037 = vmatpush.msra.mxu0 0.0
        %2038 = vmatpush.msra.mxu0 0.0
        %2039 = vmatpush.msra.mxu0 %v1838
        %2040 = vmatpush.msra.mxu0 %v1822
        %2041 = vmatpush.msra.mxu0 %v1806
        %2042 = vmatpush.msra.mxu0 %v1790
        %2043 = vmatmul.f32.gmra.mxu0 %v1871
        %v2044 = vpop.f32.mrf.mxu0
        %v2045 = vadd.f32 %v1852, %v2044
        %2046 = vmatmul.f32.gmra.mxu0 %v1874
        %v2047 = vpop.f32.mrf.mxu0
        %v2048 = vadd.f32 %v1857, %v2047
        %2049 = vmatmul.f32.gmra.mxu0 %v1877
        %v2050 = vpop.f32.mrf.mxu0
        %v2051 = vadd.f32 %v1862, %v2050
        %2052 = vmatmul.f32.gmra.mxu0 %v1880
        %v2053 = vpop.f32.mrf.mxu0
        %v2054 = vadd.f32 %v1867, %v2053
        %2055 = vdwg.mxu0
        %2056 = vmatpush.msra.mxu0 0.0
        %2057 = vmatpush.msra.mxu0 0.0
        %2058 = vmatpush.msra.mxu0 0.0
        %2059 = vmatpush.msra.mxu0 0.0
        %2060 = vmatpush.msra.mxu0 0.0
        %2061 = vmatpush.msra.mxu0 0.0
        %2062 = vmatpush.msra.mxu0 0.0
        %2063 = vmatpush.msra.mxu0 0.0
        %2064 = vmatpush.msra.mxu0 0.0
        %2065 = vmatpush.msra.mxu0 0.0
        %2066 = vmatpush.msra.mxu0 0.0
        %2067 = vmatpush.msra.mxu0 0.0
        %2068 = vmatpush.msra.mxu0 %v1839
        %2069 = vmatpush.msra.mxu0 %v1823
        %2070 = vmatpush.msra.mxu0 %v1807
        %2071 = vmatpush.msra.mxu0 %v1791
        %2072 = vmatmul.f32.gmra.mxu0 %v1871
        %v2073 = vpop.f32.mrf.mxu0
        %v2074 = vadd.f32 %v1852, %v2073
        %2075 = vmatmul.f32.gmra.mxu0 %v1874
        %v2076 = vpop.f32.mrf.mxu0
        %v2077 = vadd.f32 %v1857, %v2076
        %2078 = vmatmul.f32.gmra.mxu0 %v1877
        %v2079 = vpop.f32.mrf.mxu0
        %v2080 = vadd.f32 %v1862, %v2079
        %2081 = vmatmul.f32.gmra.mxu0 %v1880
        %v2082 = vpop.f32.mrf.mxu0
        %v2083 = vadd.f32 %v1867, %v2082
        %2084 = vdwg.mxu0
        %2085 = vmatpush.msra.mxu0 0.0
        %2086 = vmatpush.msra.mxu0 0.0
        %2087 = vmatpush.msra.mxu0 0.0
        %2088 = vmatpush.msra.mxu0 0.0
        %2089 = vmatpush.msra.mxu0 0.0
        %2090 = vmatpush.msra.mxu0 0.0
        %2091 = vmatpush.msra.mxu0 0.0
        %2092 = vmatpush.msra.mxu0 0.0
        %2093 = vmatpush.msra.mxu0 0.0
        %2094 = vmatpush.msra.mxu0 0.0
        %2095 = vmatpush.msra.mxu0 0.0
        %2096 = vmatpush.msra.mxu0 0.0
        %2097 = vmatpush.msra.mxu0 %v1840
        %2098 = vmatpush.msra.mxu0 %v1824
        %2099 = vmatpush.msra.mxu0 %v1808
        %2100 = vmatpush.msra.mxu0 %v1792
        %2101 = vmatmul.f32.gmra.mxu0 %v1871
        %v2102 = vpop.f32.mrf.mxu0
        %v2103 = vadd.f32 %v1852, %v2102
        %2104 = vmatmul.f32.gmra.mxu0 %v1874
        %v2105 = vpop.f32.mrf.mxu0
        %v2106 = vadd.f32 %v1857, %v2105
        %2107 = vmatmul.f32.gmra.mxu0 %v1877
        %v2108 = vpop.f32.mrf.mxu0
        %v2109 = vadd.f32 %v1862, %v2108
        %2110 = vmatmul.f32.gmra.mxu0 %v1880
        %v2111 = vpop.f32.mrf.mxu0
        %v2112 = vadd.f32 %v1867, %v2111
        %2113 = vdwg.mxu0
        %2114 = vmatpush.msra.mxu0 0.0
        %2115 = vmatpush.msra.mxu0 0.0
        %2116 = vmatpush.msra.mxu0 0.0
        %2117 = vmatpush.msra.mxu0 0.0
        %2118 = vmatpush.msra.mxu0 0.0
        %2119 = vmatpush.msra.mxu0 0.0
        %2120 = vmatpush.msra.mxu0 0.0
        %2121 = vmatpush.msra.mxu0 0.0
        %2122 = vmatpush.msra.mxu0 0.0
        %2123 = vmatpush.msra.mxu0 0.0
        %2124 = vmatpush.msra.mxu0 0.0
        %2125 = vmatpush.msra.mxu0 0.0
        %2126 = vmatpush.msra.mxu0 %v1841
        %2127 = vmatpush.msra.mxu0 %v1825
        %2128 = vmatpush.msra.mxu0 %v1809
        %2129 = vmatpush.msra.mxu0 %v1793
        %2130 = vmatmul.f32.gmra.mxu0 %v1871
        %v2131 = vpop.f32.mrf.mxu0
        %v2132 = vadd.f32 %v1852, %v2131
        %2133 = vmatmul.f32.gmra.mxu0 %v1874
        %v2134 = vpop.f32.mrf.mxu0
        %v2135 = vadd.f32 %v1857, %v2134
        %2136 = vmatmul.f32.gmra.mxu0 %v1877
        %v2137 = vpop.f32.mrf.mxu0
        %v2138 = vadd.f32 %v1862, %v2137
        %2139 = vmatmul.f32.gmra.mxu0 %v1880
        %v2140 = vpop.f32.mrf.mxu0
        %v2141 = vadd.f32 %v1867, %v2140
        %2142 = vdwg.mxu0
        %2143 = vmatpush.msra.mxu0 0.0
        %2144 = vmatpush.msra.mxu0 0.0
        %2145 = vmatpush.msra.mxu0 0.0
        %2146 = vmatpush.msra.mxu0 0.0
        %2147 = vmatpush.msra.mxu0 0.0
        %2148 = vmatpush.msra.mxu0 0.0
        %2149 = vmatpush.msra.mxu0 0.0
        %2150 = vmatpush.msra.mxu0 0.0
        %2151 = vmatpush.msra.mxu0 0.0
        %2152 = vmatpush.msra.mxu0 0.0
        %2153 = vmatpush.msra.mxu0 0.0
        %2154 = vmatpush.msra.mxu0 0.0
        %2155 = vmatpush.msra.mxu0 %v1842
        %2156 = vmatpush.msra.mxu0 %v1826
        %2157 = vmatpush.msra.mxu0 %v1810
        %2158 = vmatpush.msra.mxu0 %v1794
        %2159 = vmatmul.f32.gmra.mxu0 %v1871
        %v2160 = vpop.f32.mrf.mxu0
        %v2161 = vadd.f32 %v1852, %v2160
        %2162 = vmatmul.f32.gmra.mxu0 %v1874
        %v2163 = vpop.f32.mrf.mxu0
        %v2164 = vadd.f32 %v1857, %v2163
        %2165 = vmatmul.f32.gmra.mxu0 %v1877
        %v2166 = vpop.f32.mrf.mxu0
        %v2167 = vadd.f32 %v1862, %v2166
        %2168 = vmatmul.f32.gmra.mxu0 %v1880
        %v2169 = vpop.f32.mrf.mxu0
        %v2170 = vadd.f32 %v1867, %v2169
        %2171 = vdwg.mxu0
        %2172 = vmatpush.msra.mxu0 0.0
        %2173 = vmatpush.msra.mxu0 0.0
        %2174 = vmatpush.msra.mxu0 0.0
        %2175 = vmatpush.msra.mxu0 0.0
        %2176 = vmatpush.msra.mxu0 0.0
        %2177 = vmatpush.msra.mxu0 0.0
        %2178 = vmatpush.msra.mxu0 0.0
        %2179 = vmatpush.msra.mxu0 0.0
        %2180 = vmatpush.msra.mxu0 0.0
        %2181 = vmatpush.msra.mxu0 0.0
        %2182 = vmatpush.msra.mxu0 0.0
        %2183 = vmatpush.msra.mxu0 0.0
        %2184 = vmatpush.msra.mxu0 %v1843
        %2185 = vmatpush.msra.mxu0 %v1827
        %2186 = vmatpush.msra.mxu0 %v1811
        %2187 = vmatpush.msra.mxu0 %v1795
        %2188 = vmatmul.f32.gmra.mxu0 %v1871
        %v2189 = vpop.f32.mrf.mxu0
        %v2190 = vadd.f32 %v1852, %v2189
        %2191 = vmatmul.f32.gmra.mxu0 %v1874
        %v2192 = vpop.f32.mrf.mxu0
        %v2193 = vadd.f32 %v1857, %v2192
        %2194 = vmatmul.f32.gmra.mxu0 %v1877
        %v2195 = vpop.f32.mrf.mxu0
        %v2196 = vadd.f32 %v1862, %v2195
        %2197 = vmatmul.f32.gmra.mxu0 %v1880
        %v2198 = vpop.f32.mrf.mxu0
        %v2199 = vadd.f32 %v1867, %v2198
        %2200 = vdwg.mxu0
        %2201 = vmatpush.msra.mxu0 0.0
        %2202 = vmatpush.msra.mxu0 0.0
        %2203 = vmatpush.msra.mxu0 0.0
        %2204 = vmatpush.msra.mxu0 0.0
        %2205 = vmatpush.msra.mxu0 0.0
        %2206 = vmatpush.msra.mxu0 0.0
        %2207 = vmatpush.msra.mxu0 0.0
        %2208 = vmatpush.msra.mxu0 0.0
        %2209 = vmatpush.msra.mxu0 0.0
        %2210 = vmatpush.msra.mxu0 0.0
        %2211 = vmatpush.msra.mxu0 0.0
        %2212 = vmatpush.msra.mxu0 0.0
        %2213 = vmatpush.msra.mxu0 %v1844
        %2214 = vmatpush.msra.mxu0 %v1828
        %2215 = vmatpush.msra.mxu0 %v1812
        %2216 = vmatpush.msra.mxu0 %v1796
        %2217 = vmatmul.f32.gmra.mxu0 %v1871
        %v2218 = vpop.f32.mrf.mxu0
        %v2219 = vadd.f32 %v1852, %v2218
        %2220 = vmatmul.f32.gmra.mxu0 %v1874
        %v2221 = vpop.f32.mrf.mxu0
        %v2222 = vadd.f32 %v1857, %v2221
        %2223 = vmatmul.f32.gmra.mxu0 %v1877
        %v2224 = vpop.f32.mrf.mxu0
        %v2225 = vadd.f32 %v1862, %v2224
        %2226 = vmatmul.f32.gmra.mxu0 %v1880
        %v2227 = vpop.f32.mrf.mxu0
        %v2228 = vadd.f32 %v1867, %v2227
        %2229 = vdwg.mxu0
        %2230 = vmatpush.msra.mxu0 0.0
        %2231 = vmatpush.msra.mxu0 0.0
        %2232 = vmatpush.msra.mxu0 0.0
        %2233 = vmatpush.msra.mxu0 0.0
        %2234 = vmatpush.msra.mxu0 0.0
        %2235 = vmatpush.msra.mxu0 0.0
        %2236 = vmatpush.msra.mxu0 0.0
        %2237 = vmatpush.msra.mxu0 0.0
        %2238 = vmatpush.msra.mxu0 0.0
        %2239 = vmatpush.msra.mxu0 0.0
        %2240 = vmatpush.msra.mxu0 0.0
        %2241 = vmatpush.msra.mxu0 0.0
        %2242 = vmatpush.msra.mxu0 %v1845
        %2243 = vmatpush.msra.mxu0 %v1829
        %2244 = vmatpush.msra.mxu0 %v1813
        %2245 = vmatpush.msra.mxu0 %v1797
        %2246 = vmatmul.f32.gmra.mxu0 %v1871
        %v2247 = vpop.f32.mrf.mxu0
        %v2248 = vadd.f32 %v1852, %v2247
        %2249 = vmatmul.f32.gmra.mxu0 %v1874
        %v2250 = vpop.f32.mrf.mxu0
        %v2251 = vadd.f32 %v1857, %v2250
        %2252 = vmatmul.f32.gmra.mxu0 %v1877
        %v2253 = vpop.f32.mrf.mxu0
        %v2254 = vadd.f32 %v1862, %v2253
        %2255 = vmatmul.f32.gmra.mxu0 %v1880
        %v2256 = vpop.f32.mrf.mxu0
        %v2257 = vadd.f32 %v1867, %v2256
        %2258 = vdwg.mxu0
        %2259 = vmatpush.msra.mxu0 0.0
        %2260 = vmatpush.msra.mxu0 0.0
        %2261 = vmatpush.msra.mxu0 0.0
        %2262 = vmatpush.msra.mxu0 0.0
        %2263 = vmatpush.msra.mxu0 0.0
        %2264 = vmatpush.msra.mxu0 0.0
        %2265 = vmatpush.msra.mxu0 0.0
        %2266 = vmatpush.msra.mxu0 0.0
        %2267 = vmatpush.msra.mxu0 0.0
        %2268 = vmatpush.msra.mxu0 0.0
        %2269 = vmatpush.msra.mxu0 0.0
        %2270 = vmatpush.msra.mxu0 0.0
        %2271 = vmatpush.msra.mxu0 %v1846
        %2272 = vmatpush.msra.mxu0 %v1830
        %2273 = vmatpush.msra.mxu0 %v1814
        %2274 = vmatpush.msra.mxu0 %v1798
        %2275 = vmatmul.f32.gmra.mxu0 %v1871
        %v2276 = vpop.f32.mrf.mxu0
        %v2277 = vadd.f32 %v1852, %v2276
        %2278 = vmatmul.f32.gmra.mxu0 %v1874
        %v2279 = vpop.f32.mrf.mxu0
        %v2280 = vadd.f32 %v1857, %v2279
        %2281 = vmatmul.f32.gmra.mxu0 %v1877
        %v2282 = vpop.f32.mrf.mxu0
        %v2283 = vadd.f32 %v1862, %v2282
        %2284 = vmatmul.f32.gmra.mxu0 %v1880
        %v2285 = vpop.f32.mrf.mxu0
        %v2286 = vadd.f32 %v1867, %v2285
        %2287 = vdwg.mxu0
        %2288 = vmatpush.msra.mxu0 0.0
        %2289 = vmatpush.msra.mxu0 0.0
        %2290 = vmatpush.msra.mxu0 0.0
        %2291 = vmatpush.msra.mxu0 0.0
        %2292 = vmatpush.msra.mxu0 0.0
        %2293 = vmatpush.msra.mxu0 0.0
        %2294 = vmatpush.msra.mxu0 0.0
        %2295 = vmatpush.msra.mxu0 0.0
        %2296 = vmatpush.msra.mxu0 0.0
        %2297 = vmatpush.msra.mxu0 0.0
        %2298 = vmatpush.msra.mxu0 0.0
        %2299 = vmatpush.msra.mxu0 0.0
        %2300 = vmatpush.msra.mxu0 %v1847
        %2301 = vmatpush.msra.mxu0 %v1831
        %2302 = vmatpush.msra.mxu0 %v1815
        %2303 = vmatpush.msra.mxu0 %v1799
        %2304 = vmatmul.f32.gmra.mxu0 %v1871
        %v2305 = vpop.f32.mrf.mxu0
        %v2306 = vadd.f32 %v1852, %v2305
        %2307 = vmatmul.f32.gmra.mxu0 %v1874
        %v2308 = vpop.f32.mrf.mxu0
        %v2309 = vadd.f32 %v1857, %v2308
        %2310 = vmatmul.f32.gmra.mxu0 %v1877
        %v2311 = vpop.f32.mrf.mxu0
        %v2312 = vadd.f32 %v1862, %v2311
        %2313 = vmatmul.f32.gmra.mxu0 %v1880
        %v2314 = vpop.f32.mrf.mxu0
        %v2315 = vadd.f32 %v1867, %v2314
        %2316 = vdwg.mxu0
        %2317 = vmatpush.msra.mxu0 0.0
        %2318 = vmatpush.msra.mxu0 0.0
        %2319 = vmatpush.msra.mxu0 0.0
        %2320 = vmatpush.msra.mxu0 0.0
        %2321 = vmatpush.msra.mxu0 0.0
        %2322 = vmatpush.msra.mxu0 0.0
        %2323 = vmatpush.msra.mxu0 0.0
        %2324 = vmatpush.msra.mxu0 0.0
        %2325 = vmatpush.msra.mxu0 0.0
        %2326 = vmatpush.msra.mxu0 0.0
        %2327 = vmatpush.msra.mxu0 0.0
        %2328 = vmatpush.msra.mxu0 0.0
        %2329 = vmatpush.msra.mxu0 %v1848
        %2330 = vmatpush.msra.mxu0 %v1832
        %2331 = vmatpush.msra.mxu0 %v1816
        %2332 = vmatpush.msra.mxu0 %v1800
        %2333 = vmatmul.f32.gmra.mxu0 %v1871
        %v2334 = vpop.f32.mrf.mxu0
        %v2335 = vadd.f32 %v1852, %v2334
        %2336 = vmatmul.f32.gmra.mxu0 %v1874
        %v2337 = vpop.f32.mrf.mxu0
        %v2338 = vadd.f32 %v1857, %v2337
        %2339 = vmatmul.f32.gmra.mxu0 %v1877
        %v2340 = vpop.f32.mrf.mxu0
        %v2341 = vadd.f32 %v1862, %v2340
        %2342 = vmatmul.f32.gmra.mxu0 %v1880
        %v2343 = vpop.f32.mrf.mxu0
        %v2344 = vadd.f32 %v1867, %v2343
        %2345 = vdwg.mxu0
        %v2346 = vmax.f32 %v1900, 0.0
        %v2347 = vmax.f32 %v1929, 0.0
        %v2348 = vmax.f32 %v1958, 0.0
        %v2349 = vmax.f32 %v1987, 0.0
        %v2350 = vmax.f32 %v2016, 0.0
        %v2351 = vmax.f32 %v2045, 0.0
        %v2352 = vmax.f32 %v2074, 0.0
        %v2353 = vmax.f32 %v2103, 0.0
        %v2354 = vmax.f32 %v2132, 0.0
        %v2355 = vmax.f32 %v2161, 0.0
        %v2356 = vmax.f32 %v2190, 0.0
        %v2357 = vmax.f32 %v2219, 0.0
        %v2358 = vmax.f32 %v2248, 0.0
        %v2359 = vmax.f32 %v2277, 0.0
        %v2360 = vmax.f32 %v2306, 0.0
        %v2361 = vmax.f32 %v2335, 0.0
        %v2362 = vmax.f32 %v1903, 0.0
        %v2363 = vmax.f32 %v1932, 0.0
        %v2364 = vmax.f32 %v1961, 0.0
        %v2365 = vmax.f32 %v1990, 0.0
        %v2366 = vmax.f32 %v2019, 0.0
        %v2367 = vmax.f32 %v2048, 0.0
        %v2368 = vmax.f32 %v2077, 0.0
        %v2369 = vmax.f32 %v2106, 0.0
        %v2370 = vmax.f32 %v2135, 0.0
        %v2371 = vmax.f32 %v2164, 0.0
        %v2372 = vmax.f32 %v2193, 0.0
        %v2373 = vmax.f32 %v2222, 0.0
        %v2374 = vmax.f32 %v2251, 0.0
        %v2375 = vmax.f32 %v2280, 0.0
        %v2376 = vmax.f32 %v2309, 0.0
        %v2377 = vmax.f32 %v2338, 0.0
        %v2378 = vmax.f32 %v1906, 0.0
        %v2379 = vmax.f32 %v1935, 0.0
        %v2380 = vmax.f32 %v1964, 0.0
        %v2381 = vmax.f32 %v1993, 0.0
        %v2382 = vmax.f32 %v2022, 0.0
        %v2383 = vmax.f32 %v2051, 0.0
        %v2384 = vmax.f32 %v2080, 0.0
        %v2385 = vmax.f32 %v2109, 0.0
        %v2386 = vmax.f32 %v2138, 0.0
        %v2387 = vmax.f32 %v2167, 0.0
        %v2388 = vmax.f32 %v2196, 0.0
        %v2389 = vmax.f32 %v2225, 0.0
        %v2390 = vmax.f32 %v2254, 0.0
        %v2391 = vmax.f32 %v2283, 0.0
        %v2392 = vmax.f32 %v2312, 0.0
        %v2393 = vmax.f32 %v2341, 0.0
        %v2394 = vmax.f32 %v1909, 0.0
        %v2395 = vmax.f32 %v1938, 0.0
        %v2396 = vmax.f32 %v1967, 0.0
        %v2397 = vmax.f32 %v1996, 0.0
        %v2398 = vmax.f32 %v2025, 0.0
        %v2399 = vmax.f32 %v2054, 0.0
        %v2400 = vmax.f32 %v2083, 0.0
        %v2401 = vmax.f32 %v2112, 0.0
        %v2402 = vmax.f32 %v2141, 0.0
        %v2403 = vmax.f32 %v2170, 0.0
        %v2404 = vmax.f32 %v2199, 0.0
        %v2405 = vmax.f32 %v2228, 0.0
        %v2406 = vmax.f32 %v2257, 0.0
        %v2407 = vmax.f32 %v2286, 0.0
        %v2408 = vmax.f32 %v2315, 0.0
        %v2409 = vmax.f32 %v2344, 0.0
        %v2410 = vld [vmem:[#allocation6 + $0x50] sm:$0xff]
        %v2411 = vld [vmem:[#allocation6 + $0x58] sm:$0xff]
        %v2412 = vld [vmem:[#allocation6 + $0x60] sm:$0xff]
        %v2413 = vld [vmem:[#allocation6 + $0x68] sm:$0xff]
        %v2414 = vld [vmem:[#allocation6 + $0x70] sm:$0xff]
        %v2415 = vld [vmem:[#allocation6 + $0x78] sm:$0xff]
        %v2416 = vld [vmem:[#allocation6 + $0x80] sm:$0xff]
        %v2417 = vld [vmem:[#allocation6 + $0x88] sm:$0xff]
        %2419 = vset.pattern.permute.xlu0 0
        %2420 = vperm.xlu0 %2419, %v2414
        %v2421 = vpop.permute.xlu0 %2420
        %2424 = vset.pattern.permute.xlu0 0
        %2425 = vperm.xlu0 %2424, %v2415
        %v2426 = vpop.permute.xlu0 %2425
        %2429 = vset.pattern.permute.xlu0 0
        %2430 = vperm.xlu0 %2429, %v2416
        %v2431 = vpop.permute.xlu0 %2430
        %2434 = vset.pattern.permute.xlu0 0
        %2435 = vperm.xlu0 %2434, %v2417
        %v2436 = vpop.permute.xlu0 %2435
        %v2439 = vsel %vm1869, %v2410, 0
        %v2442 = vsel %vm1869, %v2411, 0
        %v2445 = vsel %vm1869, %v2412, 0
        %v2448 = vsel %vm1869, %v2413, 0
        %2450 = vmatpush.msra.mxu0 0.0
        %2451 = vmatpush.msra.mxu0 0.0
        %2452 = vmatpush.msra.mxu0 0.0
        %2453 = vmatpush.msra.mxu0 0.0
        %2454 = vmatpush.msra.mxu0 0.0
        %2455 = vmatpush.msra.mxu0 0.0
        %2456 = vmatpush.msra.mxu0 0.0
        %2457 = vmatpush.msra.mxu0 0.0
        %2458 = vmatpush.msra.mxu0 0.0
        %2459 = vmatpush.msra.mxu0 0.0
        %2460 = vmatpush.msra.mxu0 0.0
        %2461 = vmatpush.msra.mxu0 0.0
        %2462 = vmatpush.msra.mxu0 %v2394
        %2463 = vmatpush.msra.mxu0 %v2378
        %2464 = vmatpush.msra.mxu0 %v2362
        %2465 = vmatpush.msra.mxu0 %v2346
        %2466 = vmatmul.f32.gmra.mxu0 %v2439
        %v2467 = vpop.f32.mrf.mxu0
        %v2468 = vadd.f32 %v2421, %v2467
        %2469 = vmatmul.f32.gmra.mxu0 %v2442
        %v2470 = vpop.f32.mrf.mxu0
        %v2471 = vadd.f32 %v2426, %v2470
        %2472 = vmatmul.f32.gmra.mxu0 %v2445
        %v2473 = vpop.f32.mrf.mxu0
        %v2474 = vadd.f32 %v2431, %v2473
        %2475 = vmatmul.f32.gmra.mxu0 %v2448
        %v2476 = vpop.f32.mrf.mxu0
        %v2477 = vadd.f32 %v2436, %v2476
        %2478 = vdwg.mxu0
        %2479 = vmatpush.msra.mxu0 0.0
        %2480 = vmatpush.msra.mxu0 0.0
        %2481 = vmatpush.msra.mxu0 0.0
        %2482 = vmatpush.msra.mxu0 0.0
        %2483 = vmatpush.msra.mxu0 0.0
        %2484 = vmatpush.msra.mxu0 0.0
        %2485 = vmatpush.msra.mxu0 0.0
        %2486 = vmatpush.msra.mxu0 0.0
        %2487 = vmatpush.msra.mxu0 0.0
        %2488 = vmatpush.msra.mxu0 0.0
        %2489 = vmatpush.msra.mxu0 0.0
        %2490 = vmatpush.msra.mxu0 0.0
        %2491 = vmatpush.msra.mxu0 %v2395
        %2492 = vmatpush.msra.mxu0 %v2379
        %2493 = vmatpush.msra.mxu0 %v2363
        %2494 = vmatpush.msra.mxu0 %v2347
        %2495 = vmatmul.f32.gmra.mxu0 %v2439
        %v2496 = vpop.f32.mrf.mxu0
        %v2497 = vadd.f32 %v2421, %v2496
        %2498 = vmatmul.f32.gmra.mxu0 %v2442
        %v2499 = vpop.f32.mrf.mxu0
        %v2500 = vadd.f32 %v2426, %v2499
        %2501 = vmatmul.f32.gmra.mxu0 %v2445
        %v2502 = vpop.f32.mrf.mxu0
        %v2503 = vadd.f32 %v2431, %v2502
        %2504 = vmatmul.f32.gmra.mxu0 %v2448
        %v2505 = vpop.f32.mrf.mxu0
        %v2506 = vadd.f32 %v2436, %v2505
        %2507 = vdwg.mxu0
        %2508 = vmatpush.msra.mxu0 0.0
        %2509 = vmatpush.msra.mxu0 0.0
        %2510 = vmatpush.msra.mxu0 0.0
        %2511 = vmatpush.msra.mxu0 0.0
        %2512 = vmatpush.msra.mxu0 0.0
        %2513 = vmatpush.msra.mxu0 0.0
        %2514 = vmatpush.msra.mxu0 0.0
        %2515 = vmatpush.msra.mxu0 0.0
        %2516 = vmatpush.msra.mxu0 0.0
        %2517 = vmatpush.msra.mxu0 0.0
        %2518 = vmatpush.msra.mxu0 0.0
        %2519 = vmatpush.msra.mxu0 0.0
        %2520 = vmatpush.msra.mxu0 %v2396
        %2521 = vmatpush.msra.mxu0 %v2380
        %2522 = vmatpush.msra.mxu0 %v2364
        %2523 = vmatpush.msra.mxu0 %v2348
        %2524 = vmatmul.f32.gmra.mxu0 %v2439
        %v2525 = vpop.f32.mrf.mxu0
        %v2526 = vadd.f32 %v2421, %v2525
        %2527 = vmatmul.f32.gmra.mxu0 %v2442
        %v2528 = vpop.f32.mrf.mxu0
        %v2529 = vadd.f32 %v2426, %v2528
        %2530 = vmatmul.f32.gmra.mxu0 %v2445
        %v2531 = vpop.f32.mrf.mxu0
        %v2532 = vadd.f32 %v2431, %v2531
        %2533 = vmatmul.f32.gmra.mxu0 %v2448
        %v2534 = vpop.f32.mrf.mxu0
        %v2535 = vadd.f32 %v2436, %v2534
        %2536 = vdwg.mxu0
        %2537 = vmatpush.msra.mxu0 0.0
        %2538 = vmatpush.msra.mxu0 0.0
        %2539 = vmatpush.msra.mxu0 0.0
        %2540 = vmatpush.msra.mxu0 0.0
        %2541 = vmatpush.msra.mxu0 0.0
        %2542 = vmatpush.msra.mxu0 0.0
        %2543 = vmatpush.msra.mxu0 0.0
        %2544 = vmatpush.msra.mxu0 0.0
        %2545 = vmatpush.msra.mxu0 0.0
        %2546 = vmatpush.msra.mxu0 0.0
        %2547 = vmatpush.msra.mxu0 0.0
        %2548 = vmatpush.msra.mxu0 0.0
        %2549 = vmatpush.msra.mxu0 %v2397
        %2550 = vmatpush.msra.mxu0 %v2381
        %2551 = vmatpush.msra.mxu0 %v2365
        %2552 = vmatpush.msra.mxu0 %v2349
        %2553 = vmatmul.f32.gmra.mxu0 %v2439
        %v2554 = vpop.f32.mrf.mxu0
        %v2555 = vadd.f32 %v2421, %v2554
        %2556 = vmatmul.f32.gmra.mxu0 %v2442
        %v2557 = vpop.f32.mrf.mxu0
        %v2558 = vadd.f32 %v2426, %v2557
        %2559 = vmatmul.f32.gmra.mxu0 %v2445
        %v2560 = vpop.f32.mrf.mxu0
        %v2561 = vadd.f32 %v2431, %v2560
        %2562 = vmatmul.f32.gmra.mxu0 %v2448
        %v2563 = vpop.f32.mrf.mxu0
        %v2564 = vadd.f32 %v2436, %v2563
        %2565 = vdwg.mxu0
        %2566 = vmatpush.msra.mxu0 0.0
        %2567 = vmatpush.msra.mxu0 0.0
        %2568 = vmatpush.msra.mxu0 0.0
        %2569 = vmatpush.msra.mxu0 0.0
        %2570 = vmatpush.msra.mxu0 0.0
        %2571 = vmatpush.msra.mxu0 0.0
        %2572 = vmatpush.msra.mxu0 0.0
        %2573 = vmatpush.msra.mxu0 0.0
        %2574 = vmatpush.msra.mxu0 0.0
        %2575 = vmatpush.msra.mxu0 0.0
        %2576 = vmatpush.msra.mxu0 0.0
        %2577 = vmatpush.msra.mxu0 0.0
        %2578 = vmatpush.msra.mxu0 %v2398
        %2579 = vmatpush.msra.mxu0 %v2382
        %2580 = vmatpush.msra.mxu0 %v2366
        %2581 = vmatpush.msra.mxu0 %v2350
        %2582 = vmatmul.f32.gmra.mxu0 %v2439
        %v2583 = vpop.f32.mrf.mxu0
        %v2584 = vadd.f32 %v2421, %v2583
        %2585 = vmatmul.f32.gmra.mxu0 %v2442
        %v2586 = vpop.f32.mrf.mxu0
        %v2587 = vadd.f32 %v2426, %v2586
        %2588 = vmatmul.f32.gmra.mxu0 %v2445
        %v2589 = vpop.f32.mrf.mxu0
        %v2590 = vadd.f32 %v2431, %v2589
        %2591 = vmatmul.f32.gmra.mxu0 %v2448
        %v2592 = vpop.f32.mrf.mxu0
        %v2593 = vadd.f32 %v2436, %v2592
        %2594 = vdwg.mxu0
        %2595 = vmatpush.msra.mxu0 0.0
        %2596 = vmatpush.msra.mxu0 0.0
        %2597 = vmatpush.msra.mxu0 0.0
        %2598 = vmatpush.msra.mxu0 0.0
        %2599 = vmatpush.msra.mxu0 0.0
        %2600 = vmatpush.msra.mxu0 0.0
        %2601 = vmatpush.msra.mxu0 0.0
        %2602 = vmatpush.msra.mxu0 0.0
        %2603 = vmatpush.msra.mxu0 0.0
        %2604 = vmatpush.msra.mxu0 0.0
        %2605 = vmatpush.msra.mxu0 0.0
        %2606 = vmatpush.msra.mxu0 0.0
        %2607 = vmatpush.msra.mxu0 %v2399
        %2608 = vmatpush.msra.mxu0 %v2383
        %2609 = vmatpush.msra.mxu0 %v2367
        %2610 = vmatpush.msra.mxu0 %v2351
        %2611 = vmatmul.f32.gmra.mxu0 %v2439
        %v2612 = vpop.f32.mrf.mxu0
        %v2613 = vadd.f32 %v2421, %v2612
        %2614 = vmatmul.f32.gmra.mxu0 %v2442
        %v2615 = vpop.f32.mrf.mxu0
        %v2616 = vadd.f32 %v2426, %v2615
        %2617 = vmatmul.f32.gmra.mxu0 %v2445
        %v2618 = vpop.f32.mrf.mxu0
        %v2619 = vadd.f32 %v2431, %v2618
        %2620 = vmatmul.f32.gmra.mxu0 %v2448
        %v2621 = vpop.f32.mrf.mxu0
        %v2622 = vadd.f32 %v2436, %v2621
        %2623 = vdwg.mxu0
        %2624 = vmatpush.msra.mxu0 0.0
        %2625 = vmatpush.msra.mxu0 0.0
        %2626 = vmatpush.msra.mxu0 0.0
        %2627 = vmatpush.msra.mxu0 0.0
        %2628 = vmatpush.msra.mxu0 0.0
        %2629 = vmatpush.msra.mxu0 0.0
        %2630 = vmatpush.msra.mxu0 0.0
        %2631 = vmatpush.msra.mxu0 0.0
        %2632 = vmatpush.msra.mxu0 0.0
        %2633 = vmatpush.msra.mxu0 0.0
        %2634 = vmatpush.msra.mxu0 0.0
        %2635 = vmatpush.msra.mxu0 0.0
        %2636 = vmatpush.msra.mxu0 %v2400
        %2637 = vmatpush.msra.mxu0 %v2384
        %2638 = vmatpush.msra.mxu0 %v2368
        %2639 = vmatpush.msra.mxu0 %v2352
        %2640 = vmatmul.f32.gmra.mxu0 %v2439
        %v2641 = vpop.f32.mrf.mxu0
        %v2642 = vadd.f32 %v2421, %v2641
        %2643 = vmatmul.f32.gmra.mxu0 %v2442
        %v2644 = vpop.f32.mrf.mxu0
        %v2645 = vadd.f32 %v2426, %v2644
        %2646 = vmatmul.f32.gmra.mxu0 %v2445
        %v2647 = vpop.f32.mrf.mxu0
        %v2648 = vadd.f32 %v2431, %v2647
        %2649 = vmatmul.f32.gmra.mxu0 %v2448
        %v2650 = vpop.f32.mrf.mxu0
        %v2651 = vadd.f32 %v2436, %v2650
        %2652 = vdwg.mxu0
        %2653 = vmatpush.msra.mxu0 0.0
        %2654 = vmatpush.msra.mxu0 0.0
        %2655 = vmatpush.msra.mxu0 0.0
        %2656 = vmatpush.msra.mxu0 0.0
        %2657 = vmatpush.msra.mxu0 0.0
        %2658 = vmatpush.msra.mxu0 0.0
        %2659 = vmatpush.msra.mxu0 0.0
        %2660 = vmatpush.msra.mxu0 0.0
        %2661 = vmatpush.msra.mxu0 0.0
        %2662 = vmatpush.msra.mxu0 0.0
        %2663 = vmatpush.msra.mxu0 0.0
        %2664 = vmatpush.msra.mxu0 0.0
        %2665 = vmatpush.msra.mxu0 %v2401
        %2666 = vmatpush.msra.mxu0 %v2385
        %2667 = vmatpush.msra.mxu0 %v2369
        %2668 = vmatpush.msra.mxu0 %v2353
        %2669 = vmatmul.f32.gmra.mxu0 %v2439
        %v2670 = vpop.f32.mrf.mxu0
        %v2671 = vadd.f32 %v2421, %v2670
        %2672 = vmatmul.f32.gmra.mxu0 %v2442
        %v2673 = vpop.f32.mrf.mxu0
        %v2674 = vadd.f32 %v2426, %v2673
        %2675 = vmatmul.f32.gmra.mxu0 %v2445
        %v2676 = vpop.f32.mrf.mxu0
        %v2677 = vadd.f32 %v2431, %v2676
        %2678 = vmatmul.f32.gmra.mxu0 %v2448
        %v2679 = vpop.f32.mrf.mxu0
        %v2680 = vadd.f32 %v2436, %v2679
        %2681 = vdwg.mxu0
        %2682 = vmatpush.msra.mxu0 0.0
        %2683 = vmatpush.msra.mxu0 0.0
        %2684 = vmatpush.msra.mxu0 0.0
        %2685 = vmatpush.msra.mxu0 0.0
        %2686 = vmatpush.msra.mxu0 0.0
        %2687 = vmatpush.msra.mxu0 0.0
        %2688 = vmatpush.msra.mxu0 0.0
        %2689 = vmatpush.msra.mxu0 0.0
        %2690 = vmatpush.msra.mxu0 0.0
        %2691 = vmatpush.msra.mxu0 0.0
        %2692 = vmatpush.msra.mxu0 0.0
        %2693 = vmatpush.msra.mxu0 0.0
        %2694 = vmatpush.msra.mxu0 %v2402
        %2695 = vmatpush.msra.mxu0 %v2386
        %2696 = vmatpush.msra.mxu0 %v2370
        %2697 = vmatpush.msra.mxu0 %v2354
        %2698 = vmatmul.f32.gmra.mxu0 %v2439
        %v2699 = vpop.f32.mrf.mxu0
        %v2700 = vadd.f32 %v2421, %v2699
        %2701 = vmatmul.f32.gmra.mxu0 %v2442
        %v2702 = vpop.f32.mrf.mxu0
        %v2703 = vadd.f32 %v2426, %v2702
        %2704 = vmatmul.f32.gmra.mxu0 %v2445
        %v2705 = vpop.f32.mrf.mxu0
        %v2706 = vadd.f32 %v2431, %v2705
        %2707 = vmatmul.f32.gmra.mxu0 %v2448
        %v2708 = vpop.f32.mrf.mxu0
        %v2709 = vadd.f32 %v2436, %v2708
        %2710 = vdwg.mxu0
        %2711 = vmatpush.msra.mxu0 0.0
        %2712 = vmatpush.msra.mxu0 0.0
        %2713 = vmatpush.msra.mxu0 0.0
        %2714 = vmatpush.msra.mxu0 0.0
        %2715 = vmatpush.msra.mxu0 0.0
        %2716 = vmatpush.msra.mxu0 0.0
        %2717 = vmatpush.msra.mxu0 0.0
        %2718 = vmatpush.msra.mxu0 0.0
        %2719 = vmatpush.msra.mxu0 0.0
        %2720 = vmatpush.msra.mxu0 0.0
        %2721 = vmatpush.msra.mxu0 0.0
        %2722 = vmatpush.msra.mxu0 0.0
        %2723 = vmatpush.msra.mxu0 %v2403
        %2724 = vmatpush.msra.mxu0 %v2387
        %2725 = vmatpush.msra.mxu0 %v2371
        %2726 = vmatpush.msra.mxu0 %v2355
        %2727 = vmatmul.f32.gmra.mxu0 %v2439
        %v2728 = vpop.f32.mrf.mxu0
        %v2729 = vadd.f32 %v2421, %v2728
        %2730 = vmatmul.f32.gmra.mxu0 %v2442
        %v2731 = vpop.f32.mrf.mxu0
        %v2732 = vadd.f32 %v2426, %v2731
        %2733 = vmatmul.f32.gmra.mxu0 %v2445
        %v2734 = vpop.f32.mrf.mxu0
        %v2735 = vadd.f32 %v2431, %v2734
        %2736 = vmatmul.f32.gmra.mxu0 %v2448
        %v2737 = vpop.f32.mrf.mxu0
        %v2738 = vadd.f32 %v2436, %v2737
        %2739 = vdwg.mxu0
        %2740 = vmatpush.msra.mxu0 0.0
        %2741 = vmatpush.msra.mxu0 0.0
        %2742 = vmatpush.msra.mxu0 0.0
        %2743 = vmatpush.msra.mxu0 0.0
        %2744 = vmatpush.msra.mxu0 0.0
        %2745 = vmatpush.msra.mxu0 0.0
        %2746 = vmatpush.msra.mxu0 0.0
        %2747 = vmatpush.msra.mxu0 0.0
        %2748 = vmatpush.msra.mxu0 0.0
        %2749 = vmatpush.msra.mxu0 0.0
        %2750 = vmatpush.msra.mxu0 0.0
        %2751 = vmatpush.msra.mxu0 0.0
        %2752 = vmatpush.msra.mxu0 %v2404
        %2753 = vmatpush.msra.mxu0 %v2388
        %2754 = vmatpush.msra.mxu0 %v2372
        %2755 = vmatpush.msra.mxu0 %v2356
        %2756 = vmatmul.f32.gmra.mxu0 %v2439
        %v2757 = vpop.f32.mrf.mxu0
        %v2758 = vadd.f32 %v2421, %v2757
        %2759 = vmatmul.f32.gmra.mxu0 %v2442
        %v2760 = vpop.f32.mrf.mxu0
        %v2761 = vadd.f32 %v2426, %v2760
        %2762 = vmatmul.f32.gmra.mxu0 %v2445
        %v2763 = vpop.f32.mrf.mxu0
        %v2764 = vadd.f32 %v2431, %v2763
        %2765 = vmatmul.f32.gmra.mxu0 %v2448
        %v2766 = vpop.f32.mrf.mxu0
        %v2767 = vadd.f32 %v2436, %v2766
        %2768 = vdwg.mxu0
        %2769 = vmatpush.msra.mxu0 0.0
        %2770 = vmatpush.msra.mxu0 0.0
        %2771 = vmatpush.msra.mxu0 0.0
        %2772 = vmatpush.msra.mxu0 0.0
        %2773 = vmatpush.msra.mxu0 0.0
        %2774 = vmatpush.msra.mxu0 0.0
        %2775 = vmatpush.msra.mxu0 0.0
        %2776 = vmatpush.msra.mxu0 0.0
        %2777 = vmatpush.msra.mxu0 0.0
        %2778 = vmatpush.msra.mxu0 0.0
        %2779 = vmatpush.msra.mxu0 0.0
        %2780 = vmatpush.msra.mxu0 0.0
        %2781 = vmatpush.msra.mxu0 %v2405
        %2782 = vmatpush.msra.mxu0 %v2389
        %2783 = vmatpush.msra.mxu0 %v2373
        %2784 = vmatpush.msra.mxu0 %v2357
        %2785 = vmatmul.f32.gmra.mxu0 %v2439
        %v2786 = vpop.f32.mrf.mxu0
        %v2787 = vadd.f32 %v2421, %v2786
        %2788 = vmatmul.f32.gmra.mxu0 %v2442
        %v2789 = vpop.f32.mrf.mxu0
        %v2790 = vadd.f32 %v2426, %v2789
        %2791 = vmatmul.f32.gmra.mxu0 %v2445
        %v2792 = vpop.f32.mrf.mxu0
        %v2793 = vadd.f32 %v2431, %v2792
        %2794 = vmatmul.f32.gmra.mxu0 %v2448
        %v2795 = vpop.f32.mrf.mxu0
        %v2796 = vadd.f32 %v2436, %v2795
        %2797 = vdwg.mxu0
        %2798 = vmatpush.msra.mxu0 0.0
        %2799 = vmatpush.msra.mxu0 0.0
        %2800 = vmatpush.msra.mxu0 0.0
        %2801 = vmatpush.msra.mxu0 0.0
        %2802 = vmatpush.msra.mxu0 0.0
        %2803 = vmatpush.msra.mxu0 0.0
        %2804 = vmatpush.msra.mxu0 0.0
        %2805 = vmatpush.msra.mxu0 0.0
        %2806 = vmatpush.msra.mxu0 0.0
        %2807 = vmatpush.msra.mxu0 0.0
        %2808 = vmatpush.msra.mxu0 0.0
        %2809 = vmatpush.msra.mxu0 0.0
        %2810 = vmatpush.msra.mxu0 %v2406
        %2811 = vmatpush.msra.mxu0 %v2390
        %2812 = vmatpush.msra.mxu0 %v2374
        %2813 = vmatpush.msra.mxu0 %v2358
        %2814 = vmatmul.f32.gmra.mxu0 %v2439
        %v2815 = vpop.f32.mrf.mxu0
        %v2816 = vadd.f32 %v2421, %v2815
        %2817 = vmatmul.f32.gmra.mxu0 %v2442
        %v2818 = vpop.f32.mrf.mxu0
        %v2819 = vadd.f32 %v2426, %v2818
        %2820 = vmatmul.f32.gmra.mxu0 %v2445
        %v2821 = vpop.f32.mrf.mxu0
        %v2822 = vadd.f32 %v2431, %v2821
        %2823 = vmatmul.f32.gmra.mxu0 %v2448
        %v2824 = vpop.f32.mrf.mxu0
        %v2825 = vadd.f32 %v2436, %v2824
        %2826 = vdwg.mxu0
        %2827 = vmatpush.msra.mxu0 0.0
        %2828 = vmatpush.msra.mxu0 0.0
        %2829 = vmatpush.msra.mxu0 0.0
        %2830 = vmatpush.msra.mxu0 0.0
        %2831 = vmatpush.msra.mxu0 0.0
        %2832 = vmatpush.msra.mxu0 0.0
        %2833 = vmatpush.msra.mxu0 0.0
        %2834 = vmatpush.msra.mxu0 0.0
        %2835 = vmatpush.msra.mxu0 0.0
        %2836 = vmatpush.msra.mxu0 0.0
        %2837 = vmatpush.msra.mxu0 0.0
        %2838 = vmatpush.msra.mxu0 0.0
        %2839 = vmatpush.msra.mxu0 %v2407
        %2840 = vmatpush.msra.mxu0 %v2391
        %2841 = vmatpush.msra.mxu0 %v2375
        %2842 = vmatpush.msra.mxu0 %v2359
        %2843 = vmatmul.f32.gmra.mxu0 %v2439
        %v2844 = vpop.f32.mrf.mxu0
        %v2845 = vadd.f32 %v2421, %v2844
        %2846 = vmatmul.f32.gmra.mxu0 %v2442
        %v2847 = vpop.f32.mrf.mxu0
        %v2848 = vadd.f32 %v2426, %v2847
        %2849 = vmatmul.f32.gmra.mxu0 %v2445
        %v2850 = vpop.f32.mrf.mxu0
        %v2851 = vadd.f32 %v2431, %v2850
        %2852 = vmatmul.f32.gmra.mxu0 %v2448
        %v2853 = vpop.f32.mrf.mxu0
        %v2854 = vadd.f32 %v2436, %v2853
        %2855 = vdwg.mxu0
        %2856 = vmatpush.msra.mxu0 0.0
        %2857 = vmatpush.msra.mxu0 0.0
        %2858 = vmatpush.msra.mxu0 0.0
        %2859 = vmatpush.msra.mxu0 0.0
        %2860 = vmatpush.msra.mxu0 0.0
        %2861 = vmatpush.msra.mxu0 0.0
        %2862 = vmatpush.msra.mxu0 0.0
        %2863 = vmatpush.msra.mxu0 0.0
        %2864 = vmatpush.msra.mxu0 0.0
        %2865 = vmatpush.msra.mxu0 0.0
        %2866 = vmatpush.msra.mxu0 0.0
        %2867 = vmatpush.msra.mxu0 0.0
        %2868 = vmatpush.msra.mxu0 %v2408
        %2869 = vmatpush.msra.mxu0 %v2392
        %2870 = vmatpush.msra.mxu0 %v2376
        %2871 = vmatpush.msra.mxu0 %v2360
        %2872 = vmatmul.f32.gmra.mxu0 %v2439
        %v2873 = vpop.f32.mrf.mxu0
        %v2874 = vadd.f32 %v2421, %v2873
        %2875 = vmatmul.f32.gmra.mxu0 %v2442
        %v2876 = vpop.f32.mrf.mxu0
        %v2877 = vadd.f32 %v2426, %v2876
        %2878 = vmatmul.f32.gmra.mxu0 %v2445
        %v2879 = vpop.f32.mrf.mxu0
        %v2880 = vadd.f32 %v2431, %v2879
        %2881 = vmatmul.f32.gmra.mxu0 %v2448
        %v2882 = vpop.f32.mrf.mxu0
        %v2883 = vadd.f32 %v2436, %v2882
        %2884 = vdwg.mxu0
        %2885 = vmatpush.msra.mxu0 0.0
        %2886 = vmatpush.msra.mxu0 0.0
        %2887 = vmatpush.msra.mxu0 0.0
        %2888 = vmatpush.msra.mxu0 0.0
        %2889 = vmatpush.msra.mxu0 0.0
        %2890 = vmatpush.msra.mxu0 0.0
        %2891 = vmatpush.msra.mxu0 0.0
        %2892 = vmatpush.msra.mxu0 0.0
        %2893 = vmatpush.msra.mxu0 0.0
        %2894 = vmatpush.msra.mxu0 0.0
        %2895 = vmatpush.msra.mxu0 0.0
        %2896 = vmatpush.msra.mxu0 0.0
        %2897 = vmatpush.msra.mxu0 %v2409
        %2898 = vmatpush.msra.mxu0 %v2393
        %2899 = vmatpush.msra.mxu0 %v2377
        %2900 = vmatpush.msra.mxu0 %v2361
        %2901 = vmatmul.f32.gmra.mxu0 %v2439
        %v2902 = vpop.f32.mrf.mxu0
        %v2903 = vadd.f32 %v2421, %v2902
        %2904 = vmatmul.f32.gmra.mxu0 %v2442
        %v2905 = vpop.f32.mrf.mxu0
        %v2906 = vadd.f32 %v2426, %v2905
        %2907 = vmatmul.f32.gmra.mxu0 %v2445
        %v2908 = vpop.f32.mrf.mxu0
        %v2909 = vadd.f32 %v2431, %v2908
        %2910 = vmatmul.f32.gmra.mxu0 %v2448
        %v2911 = vpop.f32.mrf.mxu0
        %v2912 = vadd.f32 %v2436, %v2911
        %2913 = vdwg.mxu0
        %v2914 = vmax.f32 %v2468, 0.0
        %v2915 = vmax.f32 %v2497, 0.0
        %v2916 = vmax.f32 %v2526, 0.0
        %v2917 = vmax.f32 %v2555, 0.0
        %v2918 = vmax.f32 %v2584, 0.0
        %v2919 = vmax.f32 %v2613, 0.0
        %v2920 = vmax.f32 %v2642, 0.0
        %v2921 = vmax.f32 %v2671, 0.0
        %v2922 = vmax.f32 %v2700, 0.0
        %v2923 = vmax.f32 %v2729, 0.0
        %v2924 = vmax.f32 %v2758, 0.0
        %v2925 = vmax.f32 %v2787, 0.0
        %v2926 = vmax.f32 %v2816, 0.0
        %v2927 = vmax.f32 %v2845, 0.0
        %v2928 = vmax.f32 %v2874, 0.0
        %v2929 = vmax.f32 %v2903, 0.0
        %v2930 = vmax.f32 %v2471, 0.0
        %v2931 = vmax.f32 %v2500, 0.0
        %v2932 = vmax.f32 %v2529, 0.0
        %v2933 = vmax.f32 %v2558, 0.0
        %v2934 = vmax.f32 %v2587, 0.0
        %v2935 = vmax.f32 %v2616, 0.0
        %v2936 = vmax.f32 %v2645, 0.0
        %v2937 = vmax.f32 %v2674, 0.0
        %v2938 = vmax.f32 %v2703, 0.0
        %v2939 = vmax.f32 %v2732, 0.0
        %v2940 = vmax.f32 %v2761, 0.0
        %v2941 = vmax.f32 %v2790, 0.0
        %v2942 = vmax.f32 %v2819, 0.0
        %v2943 = vmax.f32 %v2848, 0.0
        %v2944 = vmax.f32 %v2877, 0.0
        %v2945 = vmax.f32 %v2906, 0.0
        %v2946 = vmax.f32 %v2474, 0.0
        %v2947 = vmax.f32 %v2503, 0.0
        %v2948 = vmax.f32 %v2532, 0.0
        %v2949 = vmax.f32 %v2561, 0.0
        %v2950 = vmax.f32 %v2590, 0.0
        %v2951 = vmax.f32 %v2619, 0.0
        %v2952 = vmax.f32 %v2648, 0.0
        %v2953 = vmax.f32 %v2677, 0.0
        %v2954 = vmax.f32 %v2706, 0.0
        %v2955 = vmax.f32 %v2735, 0.0
        %v2956 = vmax.f32 %v2764, 0.0
        %v2957 = vmax.f32 %v2793, 0.0
        %v2958 = vmax.f32 %v2822, 0.0
        %v2959 = vmax.f32 %v2851, 0.0
        %v2960 = vmax.f32 %v2880, 0.0
        %v2961 = vmax.f32 %v2909, 0.0
        %v2962 = vmax.f32 %v2477, 0.0
        %v2963 = vmax.f32 %v2506, 0.0
        %v2964 = vmax.f32 %v2535, 0.0
        %v2965 = vmax.f32 %v2564, 0.0
        %v2966 = vmax.f32 %v2593, 0.0
        %v2967 = vmax.f32 %v2622, 0.0
        %v2968 = vmax.f32 %v2651, 0.0
        %v2969 = vmax.f32 %v2680, 0.0
        %v2970 = vmax.f32 %v2709, 0.0
        %v2971 = vmax.f32 %v2738, 0.0
        %v2972 = vmax.f32 %v2767, 0.0
        %v2973 = vmax.f32 %v2796, 0.0
        %v2974 = vmax.f32 %v2825, 0.0
        %v2975 = vmax.f32 %v2854, 0.0
        %v2976 = vmax.f32 %v2883, 0.0
        %v2977 = vmax.f32 %v2912, 0.0
        %v2978 = vld [vmem:[#allocation6 + $0x90] sm:$0x7]
        %v2979 = vld [vmem:[#allocation6 + $0x98] sm:$0x7]
        %2981 = vset.pattern.permute.xlu0 0
        %2982 = vperm.xlu0 %2981, %v2979
        %v2983 = vpop.permute.xlu0 %2982
        %v2986 = vsel %vm1869, %v2978, 0
        %2988 = vmatpush.msra.mxu0 0.0
        %2989 = vmatpush.msra.mxu0 0.0
        %2990 = vmatpush.msra.mxu0 0.0
        %2991 = vmatpush.msra.mxu0 0.0
        %2992 = vmatpush.msra.mxu0 0.0
        %2993 = vmatpush.msra.mxu0 0.0
        %2994 = vmatpush.msra.mxu0 0.0
        %2995 = vmatpush.msra.mxu0 0.0
        %2996 = vmatpush.msra.mxu0 0.0
        %2997 = vmatpush.msra.mxu0 0.0
        %2998 = vmatpush.msra.mxu0 0.0
        %2999 = vmatpush.msra.mxu0 0.0
        %3000 = vmatpush.msra.mxu0 %v2962
        %3001 = vmatpush.msra.mxu0 %v2946
        %3002 = vmatpush.msra.mxu0 %v2930
        %3003 = vmatpush.msra.mxu0 %v2914
        %3004 = vmatmul.f32.gmra.mxu0 %v2986
        %v3005 = vpop.f32.mrf.mxu0
        %v3006 = vadd.f32 %v2983, %v3005
        %3007 = vdwg.mxu0
        %3008 = vmatpush.msra.mxu0 0.0
        %3009 = vmatpush.msra.mxu0 0.0
        %3010 = vmatpush.msra.mxu0 0.0
        %3011 = vmatpush.msra.mxu0 0.0
        %3012 = vmatpush.msra.mxu0 0.0
        %3013 = vmatpush.msra.mxu0 0.0
        %3014 = vmatpush.msra.mxu0 0.0
        %3015 = vmatpush.msra.mxu0 0.0
        %3016 = vmatpush.msra.mxu0 0.0
        %3017 = vmatpush.msra.mxu0 0.0
        %3018 = vmatpush.msra.mxu0 0.0
        %3019 = vmatpush.msra.mxu0 0.0
        %3020 = vmatpush.msra.mxu0 %v2963
        %3021 = vmatpush.msra.mxu0 %v2947
        %3022 = vmatpush.msra.mxu0 %v2931
        %3023 = vmatpush.msra.mxu0 %v2915
        %3024 = vmatmul.f32.gmra.mxu0 %v2986
        %v3025 = vpop.f32.mrf.mxu0
        %v3026 = vadd.f32 %v2983, %v3025
        %3027 = vdwg.mxu0
        %3028 = vmatpush.msra.mxu0 0.0
        %3029 = vmatpush.msra.mxu0 0.0
        %3030 = vmatpush.msra.mxu0 0.0
        %3031 = vmatpush.msra.mxu0 0.0
        %3032 = vmatpush.msra.mxu0 0.0
        %3033 = vmatpush.msra.mxu0 0.0
        %3034 = vmatpush.msra.mxu0 0.0
        %3035 = vmatpush.msra.mxu0 0.0
        %3036 = vmatpush.msra.mxu0 0.0
        %3037 = vmatpush.msra.mxu0 0.0
        %3038 = vmatpush.msra.mxu0 0.0
        %3039 = vmatpush.msra.mxu0 0.0
        %3040 = vmatpush.msra.mxu0 %v2964
        %3041 = vmatpush.msra.mxu0 %v2948
        %3042 = vmatpush.msra.mxu0 %v2932
        %3043 = vmatpush.msra.mxu0 %v2916
        %3044 = vmatmul.f32.gmra.mxu0 %v2986
        %v3045 = vpop.f32.mrf.mxu0
        %v3046 = vadd.f32 %v2983, %v3045
        %3047 = vdwg.mxu0
        %3048 = vmatpush.msra.mxu0 0.0
        %3049 = vmatpush.msra.mxu0 0.0
        %3050 = vmatpush.msra.mxu0 0.0
        %3051 = vmatpush.msra.mxu0 0.0
        %3052 = vmatpush.msra.mxu0 0.0
        %3053 = vmatpush.msra.mxu0 0.0
        %3054 = vmatpush.msra.mxu0 0.0
        %3055 = vmatpush.msra.mxu0 0.0
        %3056 = vmatpush.msra.mxu0 0.0
        %3057 = vmatpush.msra.mxu0 0.0
        %3058 = vmatpush.msra.mxu0 0.0
        %3059 = vmatpush.msra.mxu0 0.0
        %3060 = vmatpush.msra.mxu0 %v2965
        %3061 = vmatpush.msra.mxu0 %v2949
        %3062 = vmatpush.msra.mxu0 %v2933
        %3063 = vmatpush.msra.mxu0 %v2917
        %3064 = vmatmul.f32.gmra.mxu0 %v2986
        %v3065 = vpop.f32.mrf.mxu0
        %v3066 = vadd.f32 %v2983, %v3065
        %3067 = vdwg.mxu0
        %3068 = vmatpush.msra.mxu0 0.0
        %3069 = vmatpush.msra.mxu0 0.0
        %3070 = vmatpush.msra.mxu0 0.0
        %3071 = vmatpush.msra.mxu0 0.0
        %3072 = vmatpush.msra.mxu0 0.0
        %3073 = vmatpush.msra.mxu0 0.0
        %3074 = vmatpush.msra.mxu0 0.0
        %3075 = vmatpush.msra.mxu0 0.0
        %3076 = vmatpush.msra.mxu0 0.0
        %3077 = vmatpush.msra.mxu0 0.0
        %3078 = vmatpush.msra.mxu0 0.0
        %3079 = vmatpush.msra.mxu0 0.0
        %3080 = vmatpush.msra.mxu0 %v2966
        %3081 = vmatpush.msra.mxu0 %v2950
        %3082 = vmatpush.msra.mxu0 %v2934
        %3083 = vmatpush.msra.mxu0 %v2918
        %3084 = vmatmul.f32.gmra.mxu0 %v2986
        %v3085 = vpop.f32.mrf.mxu0
        %v3086 = vadd.f32 %v2983, %v3085
        %3087 = vdwg.mxu0
        %3088 = vmatpush.msra.mxu0 0.0
        %3089 = vmatpush.msra.mxu0 0.0
        %3090 = vmatpush.msra.mxu0 0.0
        %3091 = vmatpush.msra.mxu0 0.0
        %3092 = vmatpush.msra.mxu0 0.0
        %3093 = vmatpush.msra.mxu0 0.0
        %3094 = vmatpush.msra.mxu0 0.0
        %3095 = vmatpush.msra.mxu0 0.0
        %3096 = vmatpush.msra.mxu0 0.0
        %3097 = vmatpush.msra.mxu0 0.0
        %3098 = vmatpush.msra.mxu0 0.0
        %3099 = vmatpush.msra.mxu0 0.0
        %3100 = vmatpush.msra.mxu0 %v2967
        %3101 = vmatpush.msra.mxu0 %v2951
        %3102 = vmatpush.msra.mxu0 %v2935
        %3103 = vmatpush.msra.mxu0 %v2919
        %3104 = vmatmul.f32.gmra.mxu0 %v2986
        %v3105 = vpop.f32.mrf.mxu0
        %v3106 = vadd.f32 %v2983, %v3105
        %3107 = vdwg.mxu0
        %3108 = vmatpush.msra.mxu0 0.0
        %3109 = vmatpush.msra.mxu0 0.0
        %3110 = vmatpush.msra.mxu0 0.0
        %3111 = vmatpush.msra.mxu0 0.0
        %3112 = vmatpush.msra.mxu0 0.0
        %3113 = vmatpush.msra.mxu0 0.0
        %3114 = vmatpush.msra.mxu0 0.0
        %3115 = vmatpush.msra.mxu0 0.0
        %3116 = vmatpush.msra.mxu0 0.0
        %3117 = vmatpush.msra.mxu0 0.0
        %3118 = vmatpush.msra.mxu0 0.0
        %3119 = vmatpush.msra.mxu0 0.0
        %3120 = vmatpush.msra.mxu0 %v2968
        %3121 = vmatpush.msra.mxu0 %v2952
        %3122 = vmatpush.msra.mxu0 %v2936
        %3123 = vmatpush.msra.mxu0 %v2920
        %3124 = vmatmul.f32.gmra.mxu0 %v2986
        %v3125 = vpop.f32.mrf.mxu0
        %v3126 = vadd.f32 %v2983, %v3125
        %3127 = vdwg.mxu0
        %3128 = vmatpush.msra.mxu0 0.0
        %3129 = vmatpush.msra.mxu0 0.0
        %3130 = vmatpush.msra.mxu0 0.0
        %3131 = vmatpush.msra.mxu0 0.0
        %3132 = vmatpush.msra.mxu0 0.0
        %3133 = vmatpush.msra.mxu0 0.0
        %3134 = vmatpush.msra.mxu0 0.0
        %3135 = vmatpush.msra.mxu0 0.0
        %3136 = vmatpush.msra.mxu0 0.0
        %3137 = vmatpush.msra.mxu0 0.0
        %3138 = vmatpush.msra.mxu0 0.0
        %3139 = vmatpush.msra.mxu0 0.0
        %3140 = vmatpush.msra.mxu0 %v2969
        %3141 = vmatpush.msra.mxu0 %v2953
        %3142 = vmatpush.msra.mxu0 %v2937
        %3143 = vmatpush.msra.mxu0 %v2921
        %3144 = vmatmul.f32.gmra.mxu0 %v2986
        %v3145 = vpop.f32.mrf.mxu0
        %v3146 = vadd.f32 %v2983, %v3145
        %3147 = vdwg.mxu0
        %3148 = vmatpush.msra.mxu0 0.0
        %3149 = vmatpush.msra.mxu0 0.0
        %3150 = vmatpush.msra.mxu0 0.0
        %3151 = vmatpush.msra.mxu0 0.0
        %3152 = vmatpush.msra.mxu0 0.0
        %3153 = vmatpush.msra.mxu0 0.0
        %3154 = vmatpush.msra.mxu0 0.0
        %3155 = vmatpush.msra.mxu0 0.0
        %3156 = vmatpush.msra.mxu0 0.0
        %3157 = vmatpush.msra.mxu0 0.0
        %3158 = vmatpush.msra.mxu0 0.0
        %3159 = vmatpush.msra.mxu0 0.0
        %3160 = vmatpush.msra.mxu0 %v2970
        %3161 = vmatpush.msra.mxu0 %v2954
        %3162 = vmatpush.msra.mxu0 %v2938
        %3163 = vmatpush.msra.mxu0 %v2922
        %3164 = vmatmul.f32.gmra.mxu0 %v2986
        %v3165 = vpop.f32.mrf.mxu0
        %v3166 = vadd.f32 %v2983, %v3165
        %3167 = vdwg.mxu0
        %3168 = vmatpush.msra.mxu0 0.0
        %3169 = vmatpush.msra.mxu0 0.0
        %3170 = vmatpush.msra.mxu0 0.0
        %3171 = vmatpush.msra.mxu0 0.0
        %3172 = vmatpush.msra.mxu0 0.0
        %3173 = vmatpush.msra.mxu0 0.0
        %3174 = vmatpush.msra.mxu0 0.0
        %3175 = vmatpush.msra.mxu0 0.0
        %3176 = vmatpush.msra.mxu0 0.0
        %3177 = vmatpush.msra.mxu0 0.0
        %3178 = vmatpush.msra.mxu0 0.0
        %3179 = vmatpush.msra.mxu0 0.0
        %3180 = vmatpush.msra.mxu0 %v2971
        %3181 = vmatpush.msra.mxu0 %v2955
        %3182 = vmatpush.msra.mxu0 %v2939
        %3183 = vmatpush.msra.mxu0 %v2923
        %3184 = vmatmul.f32.gmra.mxu0 %v2986
        %v3185 = vpop.f32.mrf.mxu0
        %v3186 = vadd.f32 %v2983, %v3185
        %3187 = vdwg.mxu0
        %3188 = vmatpush.msra.mxu0 0.0
        %3189 = vmatpush.msra.mxu0 0.0
        %3190 = vmatpush.msra.mxu0 0.0
        %3191 = vmatpush.msra.mxu0 0.0
        %3192 = vmatpush.msra.mxu0 0.0
        %3193 = vmatpush.msra.mxu0 0.0
        %3194 = vmatpush.msra.mxu0 0.0
        %3195 = vmatpush.msra.mxu0 0.0
        %3196 = vmatpush.msra.mxu0 0.0
        %3197 = vmatpush.msra.mxu0 0.0
        %3198 = vmatpush.msra.mxu0 0.0
        %3199 = vmatpush.msra.mxu0 0.0
        %3200 = vmatpush.msra.mxu0 %v2972
        %3201 = vmatpush.msra.mxu0 %v2956
        %3202 = vmatpush.msra.mxu0 %v2940
        %3203 = vmatpush.msra.mxu0 %v2924
        %3204 = vmatmul.f32.gmra.mxu0 %v2986
        %v3205 = vpop.f32.mrf.mxu0
        %v3206 = vadd.f32 %v2983, %v3205
        %3207 = vdwg.mxu0
        %3208 = vmatpush.msra.mxu0 0.0
        %3209 = vmatpush.msra.mxu0 0.0
        %3210 = vmatpush.msra.mxu0 0.0
        %3211 = vmatpush.msra.mxu0 0.0
        %3212 = vmatpush.msra.mxu0 0.0
        %3213 = vmatpush.msra.mxu0 0.0
        %3214 = vmatpush.msra.mxu0 0.0
        %3215 = vmatpush.msra.mxu0 0.0
        %3216 = vmatpush.msra.mxu0 0.0
        %3217 = vmatpush.msra.mxu0 0.0
        %3218 = vmatpush.msra.mxu0 0.0
        %3219 = vmatpush.msra.mxu0 0.0
        %3220 = vmatpush.msra.mxu0 %v2973
        %3221 = vmatpush.msra.mxu0 %v2957
        %3222 = vmatpush.msra.mxu0 %v2941
        %3223 = vmatpush.msra.mxu0 %v2925
        %3224 = vmatmul.f32.gmra.mxu0 %v2986
        %v3225 = vpop.f32.mrf.mxu0
        %v3226 = vadd.f32 %v2983, %v3225
        %3227 = vdwg.mxu0
        %3228 = vmatpush.msra.mxu0 0.0
        %3229 = vmatpush.msra.mxu0 0.0
        %3230 = vmatpush.msra.mxu0 0.0
        %3231 = vmatpush.msra.mxu0 0.0
        %3232 = vmatpush.msra.mxu0 0.0
        %3233 = vmatpush.msra.mxu0 0.0
        %3234 = vmatpush.msra.mxu0 0.0
        %3235 = vmatpush.msra.mxu0 0.0
        %3236 = vmatpush.msra.mxu0 0.0
        %3237 = vmatpush.msra.mxu0 0.0
        %3238 = vmatpush.msra.mxu0 0.0
        %3239 = vmatpush.msra.mxu0 0.0
        %3240 = vmatpush.msra.mxu0 %v2974
        %3241 = vmatpush.msra.mxu0 %v2958
        %3242 = vmatpush.msra.mxu0 %v2942
        %3243 = vmatpush.msra.mxu0 %v2926
        %3244 = vmatmul.f32.gmra.mxu0 %v2986
        %v3245 = vpop.f32.mrf.mxu0
        %v3246 = vadd.f32 %v2983, %v3245
        %3247 = vdwg.mxu0
        %3248 = vmatpush.msra.mxu0 0.0
        %3249 = vmatpush.msra.mxu0 0.0
        %3250 = vmatpush.msra.mxu0 0.0
        %3251 = vmatpush.msra.mxu0 0.0
        %3252 = vmatpush.msra.mxu0 0.0
        %3253 = vmatpush.msra.mxu0 0.0
        %3254 = vmatpush.msra.mxu0 0.0
        %3255 = vmatpush.msra.mxu0 0.0
        %3256 = vmatpush.msra.mxu0 0.0
        %3257 = vmatpush.msra.mxu0 0.0
        %3258 = vmatpush.msra.mxu0 0.0
        %3259 = vmatpush.msra.mxu0 0.0
        %3260 = vmatpush.msra.mxu0 %v2975
        %3261 = vmatpush.msra.mxu0 %v2959
        %3262 = vmatpush.msra.mxu0 %v2943
        %3263 = vmatpush.msra.mxu0 %v2927
        %3264 = vmatmul.f32.gmra.mxu0 %v2986
        %v3265 = vpop.f32.mrf.mxu0
        %v3266 = vadd.f32 %v2983, %v3265
        %3267 = vdwg.mxu0
        %3268 = vmatpush.msra.mxu0 0.0
        %3269 = vmatpush.msra.mxu0 0.0
        %3270 = vmatpush.msra.mxu0 0.0
        %3271 = vmatpush.msra.mxu0 0.0
        %3272 = vmatpush.msra.mxu0 0.0
        %3273 = vmatpush.msra.mxu0 0.0
        %3274 = vmatpush.msra.mxu0 0.0
        %3275 = vmatpush.msra.mxu0 0.0
        %3276 = vmatpush.msra.mxu0 0.0
        %3277 = vmatpush.msra.mxu0 0.0
        %3278 = vmatpush.msra.mxu0 0.0
        %3279 = vmatpush.msra.mxu0 0.0
        %3280 = vmatpush.msra.mxu0 %v2976
        %3281 = vmatpush.msra.mxu0 %v2960
        %3282 = vmatpush.msra.mxu0 %v2944
        %3283 = vmatpush.msra.mxu0 %v2928
        %3284 = vmatmul.f32.gmra.mxu0 %v2986
        %v3285 = vpop.f32.mrf.mxu0
        %v3286 = vadd.f32 %v2983, %v3285
        %3287 = vdwg.mxu0
        %3288 = vmatpush.msra.mxu0 0.0
        %3289 = vmatpush.msra.mxu0 0.0
        %3290 = vmatpush.msra.mxu0 0.0
        %3291 = vmatpush.msra.mxu0 0.0
        %3292 = vmatpush.msra.mxu0 0.0
        %3293 = vmatpush.msra.mxu0 0.0
        %3294 = vmatpush.msra.mxu0 0.0
        %3295 = vmatpush.msra.mxu0 0.0
        %3296 = vmatpush.msra.mxu0 0.0
        %3297 = vmatpush.msra.mxu0 0.0
        %3298 = vmatpush.msra.mxu0 0.0
        %3299 = vmatpush.msra.mxu0 0.0
        %3300 = vmatpush.msra.mxu0 %v2977
        %3301 = vmatpush.msra.mxu0 %v2961
        %3302 = vmatpush.msra.mxu0 %v2945
        %3303 = vmatpush.msra.mxu0 %v2929
        %3304 = vmatmul.f32.gmra.mxu0 %v2986
        %v3305 = vpop.f32.mrf.mxu0
        %v3306 = vadd.f32 %v2983, %v3305
        %3307 = vdwg.mxu0
        %v3324 = vrot.slane %v3026, 4
        %v3325 = vrot.slane %v3066, 4
        %v3326 = vrot.slane %v3106, 4
        %v3327 = vrot.slane %v3146, 4
        %v3328 = vrot.slane %v3186, 4
        %v3329 = vrot.slane %v3226, 4
        %v3330 = vrot.slane %v3266, 4
        %v3331 = vrot.slane %v3306, 4
        %vm3332 = vcmask 1043456
        %v3333 = vsel %vm3332, %v3006, %v3324
        %v3334 = vsel %vm3332, %v3046, %v3325
        %v3335 = vsel %vm3332, %v3086, %v3326
        %v3336 = vsel %vm3332, %v3126, %v3327
        %v3337 = vsel %vm3332, %v3166, %v3328
        %v3338 = vsel %vm3332, %v3206, %v3329
        %v3339 = vsel %vm3332, %v3246, %v3330
        %v3340 = vsel %vm3332, %v3286, %v3331
        %3349 = vst [vmem:[%s178] sm:$0x77] %v3333
        %3350 = vst [vmem:[%s178 + $0x8] sm:$0x77] %v3334
        %3351 = vst [vmem:[%s178 + $0x10] sm:$0x77] %v3335
        %3352 = vst [vmem:[%s178 + $0x18] sm:$0x77] %v3336
        %3353 = vst [vmem:[%s178 + $0x20] sm:$0x77] %v3337
        %3354 = vst [vmem:[%s178 + $0x28] sm:$0x77] %v3338
        %3355 = vst [vmem:[%s178 + $0x30] sm:$0x77] %v3339
        %3356 = vst [vmem:[%s178 + $0x38] sm:$0x77] %v3340
        %s3357 = sand.u32 %s75, 1
        %s3358 = scalar_lea.sflag [#allocation5], %s3357
        %s3359 = sand.u32 %s75, 1
        %s3360 = smul.addr %s3359, 64
        %s3361 = scalar_lea.vmem [#allocation8], %s3360
        // Predicated region
        $region37: #{forward.1} parent=27 // pred_check
          %p3362 = pneg %p85
        $region38: #{forward.1} parent=27 // pred_check_branch
          %3364 = sbr.rel (%p3362) target = $region40
        $region39: #{forward.1} parent=27 // pred_region
          %s3365 = smul.u32 16, %s20
          %3367 = vsyncadd %s3358, 0
          %s3368 = smul.addr %s3365, 4
          %s3369 = scalar_lea.hbm %s2, %s3368
          %s3371 = sshll.u32 %s3361, 4
          %s3372 = int_to_ptr.vmem [resolvable:$true] %s3371
          %s3373 = sshll.u32 %s3369, 4
          %s3374 = int_to_ptr.hbm [resolvable:$true] %s3373
          %3376 = dma.vmem_to_hbm [thread:$0]  %s3372, 1024, %s3374, %s3358
        $region40: #{forward.1} parent=27 // pred_fallthru
          _
      $region28: #{forward.1} parent=5 // pred_fallthru
        _
      %p3377 = scmp.le.s32.totalorder 2, %s15
      // Predicated region
      $region41: #{forward.1} parent=5 // pred_check
        %p3378 = pneg %p3377
      $region42: #{forward.1} parent=5 // pred_check_branch
        %3380 = sbr.rel (%p3378) target = $region44
      $region43: #{forward.1} parent=5 // pred_region
        %s3381 = ssub.s32 %s15, 2
        // Predicated region
        $region45: #{forward.1} parent=43 // pred_check
          %p3382 = pneg %p91
        $region46: #{forward.1} parent=43 // pred_check_branch
          %3384 = sbr.rel (%p3382) target = $region48
        $region47: #{forward.1} parent=43 // pred_region
          %s3385 = sand.u32 %s76, 1
          %s3386 = scalar_lea.sflag [#allocation5], %s3385
          %s3387 = sand.u32 %s76, 1
          %s3388 = smul.addr %s3387, 64
          %s3389 = scalar_lea.vmem [#allocation8], %s3388
          %3391 = dma.done %s3386, 1024
        $region48: #{forward.1} parent=43 // pred_fallthru
          _
      $region44: #{forward.1} parent=5 // pred_fallthru
        _
    $region6: #{forward.1} parent=1 // loop_footer
      %s19 = sadd.s32 1, %s15
    $region7: #{forward.1} parent=1 // loop_footer_branch
      %14 = sbr.rel target = $region3
    $region8: #{forward.1} parent=1 // loop_exit
      _
    %3392 = vsyncpa [#allocation4], 1
    %s3393 = scalar_lea.sflag [#allocation4], 1
    %3394 = vsyncpa %s3393, 1
    %3395 = vsyncpa [#allocation7], 1
    %3396 = vsyncpa [#allocation5], 1
    %s3397 = scalar_lea.sflag [#allocation5], 1
    %3398 = vsyncpa %s3397, 1

</llo_original>
